<compile_context>
chip_gen: v5e
topology: v5e:2x2
jax: 0.10.0
libtpu: 0.0.40
codegen_flags: <defaults>
</compile_context>

<pallas_src>
import functools

import jax
import jax.numpy as jnp
from jax import lax
from jax.experimental import pallas as pl
from jax.experimental.pallas import tpu as pltpu

VMEM_SPEC = pl.BlockSpec(memory_space=pltpu.MemorySpace.VMEM)

# bf16-in / f32-acc is the right default on v6e/v7x when N/C grow; at these toy
# shapes we keep f32 operands for exact fidelity with the reference math.
MATMUL_DTYPE = jnp.float32


# ---------------------------------------------------------------------------
# Fused forward kernel.
# ---------------------------------------------------------------------------
def monet_fused_kernel(x_ref, w_ref, a_ref, scale_ref, shift_ref,
                       wi_f_ref, wh_f_ref, b_f_ref,
                       wi_b_ref, wh_b_ref, b_b_ref,
                       attw_ref, attb_ref,
                       pool_ref, w1_ref, b1_ref, w2_ref, b2_ref,
                       lng_ref, lnb_ref, o_ref, *, nout):
    f32 = jnp.float32
    N = x_ref.shape[0]
    nlayers, kp1 = w_ref.shape[0], w_ref.shape[1]       # kp1 = K gaussians + root
    H = wh_f_ref.shape[1]
    B = pool_ref.shape[0]
    nout_pad = o_ref.shape[1]
    L = nlayers + 1

    # ---------------- GMMConv + eval-BatchNorm (+ReLU) stack ----------------
    h = x_ref[...].astype(f32)                                         # [N, C]
    h_list = [h]
    for l in range(nlayers):
        # K+1 projections; weights are ref-sliced on the stacked leading axis
        # (static & free) so no activation lane-slicing is needed.
        t_blocks = [jnp.dot(h.astype(MATMUL_DTYPE), w_ref[l, k],
                            preferred_element_type=f32)
                    for k in range(kp1)]                               # kp1 x [N, C]
        t_cat = jnp.concatenate(t_blocks, axis=0)                      # [(K+1)*N, C]
        # Single aggregation matmul, contraction depth (K+1)*N; the root/self
        # term rides along via the identity block appended to a_ref[l].
        agg = jnp.dot(a_ref[l], t_cat, preferred_element_type=f32)     # [N, C]
        # conv bias + eval-mode BatchNorm folded into one scale/shift per layer.
        h = agg * scale_ref[l] + shift_ref[l]
        if l != nlayers - 1:
            h = jnp.maximum(h, 0.0)
        # TODO(synk): Dropout(0.1) is identity (eval mode, consistent with the
        # running-stat BatchNorm above).
        h_list.append(h)

    # ------------- JumpingKnowledge: bi-LSTM + attention softmax ------------
    xs_cat = jnp.concatenate(h_list, axis=0)                           # [L*N, C]

    def run_direction(wi_ref, wh_ref, b_ref, reverse):
        # Per-gate input projections for ALL timesteps in one matmul per gate
        # (off the serial recurrence).  Gate order: i, f, g, o.
        xi = [jnp.dot(xs_cat, wi_ref[gate], preferred_element_type=f32)
              + b_ref[gate] for gate in range(4)]                      # 4 x [L*N, H]
        hcur = jnp.zeros((N, H), f32)
        ccur = jnp.zeros((N, H), f32)
        outs = [None] * L
        steps = range(L - 1, -1, -1) if reverse else range(L)
        for t in steps:
            lo, hi = t * N, (t + 1) * N
            zi = xi[0][lo:hi] + jnp.dot(hcur, wh_ref[0], preferred_element_type=f32)
            zf = xi[1][lo:hi] + jnp.dot(hcur, wh_ref[1], preferred_element_type=f32)
            zg = xi[2][lo:hi] + jnp.dot(hcur, wh_ref[2], preferred_element_type=f32)
            zo = xi[3][lo:hi] + jnp.dot(hcur, wh_ref[3], preferred_element_type=f32)
            ccur = jax.nn.sigmoid(zf) * ccur + jax.nn.sigmoid(zi) * jnp.tanh(zg)
            hcur = jax.nn.sigmoid(zo) * jnp.tanh(ccur)
            outs[t] = hcur
        return outs

    fwd = run_direction(wi_f_ref, wh_f_ref, b_f_ref, reverse=False)
    bwd = run_direction(wi_b_ref, wh_b_ref, b_b_ref, reverse=True)

    # attention score per timestep: Linear(2H -> 1) on concat(fwd_t, bwd_t),
    # done as two ref-indexed [H,1] matmuls (no lane slicing of a 2H activation).
    scores = [jnp.dot(fwd[t], attw_ref[0], preferred_element_type=f32)
              + jnp.dot(bwd[t], attw_ref[1], preferred_element_type=f32)
              + attb_ref[...]
              for t in range(L)]                                       # L x [N, 1]
    m = scores[0]
    for t in range(1, L):
        m = jnp.maximum(m, scores[t])
    exps = [jnp.exp(s - m) for s in scores]
    denom = exps[0]
    for t in range(1, L):
        denom = denom + exps[t]
    inv = pl.reciprocal(denom, approx=True)                            # EUP slot
    node_rep = h_list[0] * (exps[0] * inv)
    for t in range(1, L):
        node_rep = node_rep + h_list[t] * (exps[t] * inv)              # [N, C]

    # ------- readout: masked mean-pool + Linear/ReLU/Linear + LayerNorm -----
    # pool_ref is [B, N, 1] with rows already normalized by graph size, so the
    # mean-pool is a VPU multiply + sublane reduction (no 2-row MXU matmul).
    hg = jnp.sum(pool_ref[...] * node_rep[None, :, :], axis=1)         # [B, C]
    x1 = jnp.maximum(
        jnp.dot(hg, w1_ref[...], preferred_element_type=f32) + b1_ref[...], 0.0)
    # TODO(synk): Dropout(0.1) between the projections is identity (eval mode).
    x2 = jnp.dot(x1, w2_ref[...], preferred_element_type=f32) + b2_ref[...]  # [B, nout_pad]

    # LayerNorm over the real nout columns only (padded columns are exact 0s);
    # the store is a lane-dense 128-wide slab, sliced back in the wrapper.
    col = lax.broadcasted_iota(jnp.int32, (B, nout_pad), 1)
    mask = col < nout
    mean = jnp.sum(x2, axis=-1, keepdims=True) * (1.0 / nout)
    d = jnp.where(mask, x2 - mean, 0.0)
    var = jnp.sum(d * d, axis=-1, keepdims=True) * (1.0 / nout)
    o_ref[...] = d * lax.rsqrt(var + 1e-5) * lng_ref[...] + lnb_ref[...]


def monet_fused(x, w_stack, a_aug, bn_scale, bn_shift, jk,
                w1, b1, w2p, b2p, lngp, lnbp, pool, nout):
    B = pool.shape[0]
    nout_pad = w2p.shape[1]
    kernel = functools.partial(monet_fused_kernel, nout=nout)
    return pl.pallas_call(
        kernel,
        out_shape=jax.ShapeDtypeStruct((B, nout_pad), jnp.float32),
        in_specs=[VMEM_SPEC] * 20,
        out_specs=VMEM_SPEC,
        compiler_params=pltpu.CompilerParams(vmem_limit_bytes=32 * 1024 * 1024),
    )(x, w_stack, a_aug, bn_scale, bn_shift,
      jk["wi_f"], jk["wh_f"], jk["b_f"],
      jk["wi_b"], jk["wh_b"], jk["b_b"],
      jk["att_w"], jk["att_b"],
      pool, w1, b1, w2p, b2p, lngp, lnbp)


# ---------------------------------------------------------------------------
# Plain-JAX glue: edge gaussians -> dense augmented adjacency (one scatter for
# all layers), pool weights, BN/bias folding, output-slab padding.
# TODO(synk): the data-dependent edge scatter has no clean Pallas equivalent;
# for large graphs switch to CSR + PrefetchScalarGridSpec gather.
# ---------------------------------------------------------------------------
def build_aug_adjacency(edge_index, edge_attr, mus, sigmas, num_nodes):
    """Returns [L, N, (K+1)*N]: K gaussian-weighted (mean-normalized) adjacency
    blocks followed by an identity block that carries the root/self term."""
    src, dst = edge_index[0], edge_index[1]
    EPS = 1e-15
    diff = edge_attr[None, :, None, :] - mus[:, None, :, :]            # [L, E, K, D]
    gw = jnp.exp(jnp.sum(-0.5 * diff ** 2
                         / (EPS + sigmas[:, None, :, :] ** 2), axis=-1))  # [L, E, K]
    L, _, K = gw.shape
    deg = jnp.zeros((num_nodes,), jnp.float32).at[dst].add(1.0)
    deg = jnp.maximum(deg, 1.0)                                        # mean aggregation
    A = jnp.zeros((num_nodes, num_nodes, L, K), jnp.float32)
    A = A.at[dst, src].add(jnp.transpose(gw, (1, 0, 2)))               # [dst, src, L, K]
    A = A / deg[:, None, None, None]
    A = jnp.transpose(A, (2, 0, 3, 1)).reshape(L, num_nodes, K * num_nodes)
    eye = jnp.broadcast_to(jnp.eye(num_nodes, dtype=jnp.float32),
                           (L, num_nodes, num_nodes))
    return jnp.concatenate([A, eye], axis=-1)                          # [L, N, (K+1)*N]


@functools.partial(jax.jit, static_argnames=("num_graphs",))
def monet_forward(params, x, edge_index, edge_attr, batch, num_graphs):
    n = x.shape[0]
    nout = params["proj2_w"].shape[1]
    # per-layer augmented adjacencies, built with one batched scatter
    a_aug = build_aug_adjacency(edge_index, edge_attr,
                                params["mu"], params["sigma"], n)
    # eval-mode BatchNorm + conv bias folded into one scale/shift per layer
    scale = params["bn_gamma"] * lax.rsqrt(params["bn_var"] + 1e-5)    # [Lyr, 1, C]
    shift = params["bn_beta"] + (params["conv_bias"] - params["bn_mean"]) * scale
    # normalized mean-pool weights, shaped [B, N, 1] for the in-kernel reduction
    onehot = (batch[None, :] == jnp.arange(num_graphs)[:, None]).astype(jnp.float32)
    counts = jnp.maximum(onehot.sum(axis=1, keepdims=True), 1.0)
    pool = (onehot / counts)[:, :, None]
    # lane-dense (multiple-of-128) slab for the final projection / LayerNorm
    nout_pad = max(128, ((nout + 127) // 128) * 128)
    pad = ((0, 0), (0, nout_pad - nout))
    w2p = jnp.pad(params["proj2_w"], pad)
    b2p = jnp.pad(params["proj2_b"], pad)
    lngp = jnp.pad(params["ln2_g"], pad)
    lnbp = jnp.pad(params["ln2_b"], pad)
    out = monet_fused(x, params["w"], a_aug, scale, shift, params["jk"],
                      params["proj1_w"], params["proj1_b"],
                      w2p, b2p, lngp, lnbp, pool, nout)
    return out[:, :nout]


# ---------------------------------------------------------------------------
# Deterministic synthetic parameters.
# ---------------------------------------------------------------------------
def init_params(key, num_node_features, nout, nhid, nlayers, C, K, dim=2):
    assert num_node_features == C, \
        "JumpingKnowledge-LSTM stacks x with the hidden layers -> dims must match"
    H = (nlayers * C) // 2                                             # JK-LSTM hidden size
    ks = iter(jax.random.split(key, 64))

    def w(shape, scale=0.1):
        return scale * jax.random.normal(next(ks), shape, jnp.float32)

    return dict(
        # GMMConv weights stacked: [Lyr, K+1, C, C]  (K gaussian kernels + root)
        w=w((nlayers, K + 1, C, C)),
        mu=w((nlayers, K, dim), 0.5),
        sigma=1.0 + 0.1 * jnp.abs(jax.random.normal(next(ks), (nlayers, K, dim),
                                                    jnp.float32)),
        conv_bias=w((nlayers, 1, C), 0.01),
        bn_gamma=1.0 + w((nlayers, 1, C), 0.05),
        bn_beta=w((nlayers, 1, C), 0.05),
        bn_mean=w((nlayers, 1, C), 0.05),
        bn_var=1.0 + 0.1 * jnp.abs(jax.random.normal(next(ks), (nlayers, 1, C),
                                                     jnp.float32)),
        jk=dict(  # per-gate stacked LSTM weights (gate order i, f, g, o)
            wi_f=w((4, C, H)), wh_f=w((4, H, H)), b_f=w((4, 1, H), 0.01),
            wi_b=w((4, C, H)), wh_b=w((4, H, H)), b_b=w((4, 1, H), 0.01),
            att_w=w((2, H, 1)), att_b=w((1, 1), 0.01),
        ),
        proj1_w=w((C, nhid)), proj1_b=w((1, nhid), 0.01),
        proj2_w=w((nhid, nout)), proj2_b=w((1, nout), 0.01),
        ln2_g=1.0 + w((1, nout), 0.05), ln2_b=w((1, nout), 0.05),
    )


if __name__ == "__main__":
    # num_node_features == graph_hidden_channels is required by the reference
    # module (raw x is stacked with the hidden layers inside JumpingKnowledge).
    num_node_features = 16
    graph_hidden_channels = 16
    nhid = 32
    nout = 8
    nlayers = 3
    kernel_size = 4
    N, E, B = 24, 48, 2

    key = jax.random.PRNGKey(0)
    keys = jax.random.split(key, 8)
    x = jax.random.normal(keys[0], (N, num_node_features), jnp.float32)
    src = jax.random.randint(keys[1], (E,), 0, N)
    dst = jax.random.randint(keys[2], (E,), 0, N)
    edge_index = jnp.stack([src, dst], axis=0)                         # [2, E]
    edge_attr = jax.random.uniform(keys[3], (E, 2), jnp.float32)       # pseudo-coords
    batch = jnp.concatenate([jnp.zeros((N // 2,), jnp.int32),
                             jnp.ones((N - N // 2,), jnp.int32)])      # [N]

    params = init_params(keys[4], num_node_features, nout, nhid, nlayers,
                         graph_hidden_channels, kernel_size)

    out = monet_forward(params, x, edge_index, edge_attr, batch, num_graphs=B)
    out = jax.block_until_ready(out)
    assert out.shape == (B, nout)
    assert bool(jnp.all(jnp.isfinite(out)))
    print("KERNEL_OK")
</pallas_src>

<mosaic_0001>
module attributes {stable_mosaic.version = 11 : i64} {
  func.func @monet_fused_kernel(%arg0: memref<24x16xf32, #tpu.memory_space<vmem>>, %arg1: memref<3x5x16x16xf32, #tpu.memory_space<vmem>>, %arg2: memref<3x24x120xf32, #tpu.memory_space<vmem>>, %arg3: memref<3x1x16xf32, #tpu.memory_space<vmem>>, %arg4: memref<3x1x16xf32, #tpu.memory_space<vmem>>, %arg5: memref<4x16x24xf32, #tpu.memory_space<vmem>>, %arg6: memref<4x24x24xf32, #tpu.memory_space<vmem>>, %arg7: memref<4x1x24xf32, #tpu.memory_space<vmem>>, %arg8: memref<4x16x24xf32, #tpu.memory_space<vmem>>, %arg9: memref<4x24x24xf32, #tpu.memory_space<vmem>>, %arg10: memref<4x1x24xf32, #tpu.memory_space<vmem>>, %arg11: memref<2x24x1xf32, #tpu.memory_space<vmem>>, %arg12: memref<1x1xf32, #tpu.memory_space<vmem>>, %arg13: memref<2x24x1xf32, #tpu.memory_space<vmem>>, %arg14: memref<16x32xf32, #tpu.memory_space<vmem>>, %arg15: memref<1x32xf32, #tpu.memory_space<vmem>>, %arg16: memref<32x128xf32, #tpu.memory_space<vmem>>, %arg17: memref<1x128xf32, #tpu.memory_space<vmem>>, %arg18: memref<1x128xf32, #tpu.memory_space<vmem>>, %arg19: memref<1x128xf32, #tpu.memory_space<vmem>>, %arg20: memref<2x128xf32, #tpu.memory_space<vmem>>) attributes {dimension_semantics = [], scalar_prefetch = 0 : i64, scratch_operands = 0 : i64, tpu.core_type = #tpu.core_type<tc>} {
    %c0 = arith.constant 0 : index
    %c0_0 = arith.constant 0 : index
    %0 = vector.load %arg0[%c0, %c0_0] : memref<24x16xf32, #tpu.memory_space<vmem>>, vector<24x16xf32>
    %c0_1 = arith.constant 0 : index
    %c0_2 = arith.constant 0 : index
    %c0_3 = arith.constant 0 : index
    %c0_4 = arith.constant 0 : index
    %1 = vector.load %arg1[%c0_1, %c0_2, %c0_3, %c0_4] : memref<3x5x16x16xf32, #tpu.memory_space<vmem>>, vector<1x1x16x16xf32>
    %2 = vector.shape_cast %1 : vector<1x1x16x16xf32> to vector<16x16xf32>
    %cst = arith.constant dense<0.000000e+00> : vector<24x16xf32>
    %3 = tpu.matmul %0, %2, %cst {dimension_numbers = #tpu.dot_dimension_numbers<[1], [0], [0], [1], [0, 0, 1, 1], [], []>} : vector<24x16xf32>, vector<16x16xf32>, vector<24x16xf32> -> vector<24x16xf32>
    %c0_5 = arith.constant 0 : index
    %c1 = arith.constant 1 : index
    %c0_6 = arith.constant 0 : index
    %c0_7 = arith.constant 0 : index
    %4 = vector.load %arg1[%c0_5, %c1, %c0_6, %c0_7] : memref<3x5x16x16xf32, #tpu.memory_space<vmem>>, vector<1x1x16x16xf32>
    %5 = vector.shape_cast %4 : vector<1x1x16x16xf32> to vector<16x16xf32>
    %cst_8 = arith.constant dense<0.000000e+00> : vector<24x16xf32>
    %6 = tpu.matmul %0, %5, %cst_8 {dimension_numbers = #tpu.dot_dimension_numbers<[1], [0], [0], [1], [0, 0, 1, 1], [], []>} : vector<24x16xf32>, vector<16x16xf32>, vector<24x16xf32> -> vector<24x16xf32>
    %c0_9 = arith.constant 0 : index
    %c2 = arith.constant 2 : index
    %c0_10 = arith.constant 0 : index
    %c0_11 = arith.constant 0 : index
    %7 = vector.load %arg1[%c0_9, %c2, %c0_10, %c0_11] : memref<3x5x16x16xf32, #tpu.memory_space<vmem>>, vector<1x1x16x16xf32>
    %8 = vector.shape_cast %7 : vector<1x1x16x16xf32> to vector<16x16xf32>
    %cst_12 = arith.constant dense<0.000000e+00> : vector<24x16xf32>
    %9 = tpu.matmul %0, %8, %cst_12 {dimension_numbers = #tpu.dot_dimension_numbers<[1], [0], [0], [1], [0, 0, 1, 1], [], []>} : vector<24x16xf32>, vector<16x16xf32>, vector<24x16xf32> -> vector<24x16xf32>
    %c0_13 = arith.constant 0 : index
    %c3 = arith.constant 3 : index
    %c0_14 = arith.constant 0 : index
    %c0_15 = arith.constant 0 : index
    %10 = vector.load %arg1[%c0_13, %c3, %c0_14, %c0_15] : memref<3x5x16x16xf32, #tpu.memory_space<vmem>>, vector<1x1x16x16xf32>
    %11 = vector.shape_cast %10 : vector<1x1x16x16xf32> to vector<16x16xf32>
    %cst_16 = arith.constant dense<0.000000e+00> : vector<24x16xf32>
    %12 = tpu.matmul %0, %11, %cst_16 {dimension_numbers = #tpu.dot_dimension_numbers<[1], [0], [0], [1], [0, 0, 1, 1], [], []>} : vector<24x16xf32>, vector<16x16xf32>, vector<24x16xf32> -> vector<24x16xf32>
    %c0_17 = arith.constant 0 : index
    %c4 = arith.constant 4 : index
    %c0_18 = arith.constant 0 : index
    %c0_19 = arith.constant 0 : index
    %13 = vector.load %arg1[%c0_17, %c4, %c0_18, %c0_19] : memref<3x5x16x16xf32, #tpu.memory_space<vmem>>, vector<1x1x16x16xf32>
    %14 = vector.shape_cast %13 : vector<1x1x16x16xf32> to vector<16x16xf32>
    %cst_20 = arith.constant dense<0.000000e+00> : vector<24x16xf32>
    %15 = tpu.matmul %0, %14, %cst_20 {dimension_numbers = #tpu.dot_dimension_numbers<[1], [0], [0], [1], [0, 0, 1, 1], [], []>} : vector<24x16xf32>, vector<16x16xf32>, vector<24x16xf32> -> vector<24x16xf32>
    %16 = tpu.concatenate %3, %6, %9, %12, %15 in 0 : vector<24x16xf32>, vector<24x16xf32>, vector<24x16xf32>, vector<24x16xf32>, vector<24x16xf32> -> vector<120x16xf32>
    %c0_21 = arith.constant 0 : index
    %c0_22 = arith.constant 0 : index
    %c0_23 = arith.constant 0 : index
    %17 = vector.load %arg2[%c0_21, %c0_22, %c0_23] : memref<3x24x120xf32, #tpu.memory_space<vmem>>, vector<1x24x120xf32>
    %18 = vector.shape_cast %17 : vector<1x24x120xf32> to vector<24x120xf32>
    %cst_24 = arith.constant dense<0.000000e+00> : vector<24x16xf32>
    %19 = tpu.matmul %18, %16, %cst_24 {dimension_numbers = #tpu.dot_dimension_numbers<[1], [0], [0], [1], [0, 0, 1, 1], [], []>} : vector<24x120xf32>, vector<120x16xf32>, vector<24x16xf32> -> vector<24x16xf32>
    %c0_25 = arith.constant 0 : index
    %c0_26 = arith.constant 0 : index
    %c0_27 = arith.constant 0 : index
    %20 = vector.load %arg3[%c0_25, %c0_26, %c0_27] : memref<3x1x16xf32, #tpu.memory_space<vmem>>, vector<1x1x16xf32>
    %21 = vector.shape_cast %20 : vector<1x1x16xf32> to vector<1x16xf32>
    %22 = vector.broadcast %21 : vector<1x16xf32> to vector<24x16xf32>
    %23 = arith.mulf %19, %22 : vector<24x16xf32>
    %c0_28 = arith.constant 0 : index
    %c0_29 = arith.constant 0 : index
    %c0_30 = arith.constant 0 : index
    %24 = vector.load %arg4[%c0_28, %c0_29, %c0_30] : memref<3x1x16xf32, #tpu.memory_space<vmem>>, vector<1x1x16xf32>
    %25 = vector.shape_cast %24 : vector<1x1x16xf32> to vector<1x16xf32>
    %26 = vector.broadcast %25 : vector<1x16xf32> to vector<24x16xf32>
    %27 = arith.addf %23, %26 : vector<24x16xf32>
    %cst_31 = arith.constant 0.000000e+00 : f32
    %28 = vector.broadcast %cst_31 : f32 to vector<24x16xf32>
    %29 = arith.maximumf %27, %28 : vector<24x16xf32>
    %c1_32 = arith.constant 1 : index
    %c0_33 = arith.constant 0 : index
    %c0_34 = arith.constant 0 : index
    %c0_35 = arith.constant 0 : index
    %30 = vector.load %arg1[%c1_32, %c0_33, %c0_34, %c0_35] : memref<3x5x16x16xf32, #tpu.memory_space<vmem>>, vector<1x1x16x16xf32>
    %31 = vector.shape_cast %30 : vector<1x1x16x16xf32> to vector<16x16xf32>
    %cst_36 = arith.constant dense<0.000000e+00> : vector<24x16xf32>
    %32 = tpu.matmul %29, %31, %cst_36 {dimension_numbers = #tpu.dot_dimension_numbers<[1], [0], [0], [1], [0, 0, 1, 1], [], []>} : vector<24x16xf32>, vector<16x16xf32>, vector<24x16xf32> -> vector<24x16xf32>
    %c1_37 = arith.constant 1 : index
    %c1_38 = arith.constant 1 : index
    %c0_39 = arith.constant 0 : index
    %c0_40 = arith.constant 0 : index
    %33 = vector.load %arg1[%c1_37, %c1_38, %c0_39, %c0_40] : memref<3x5x16x16xf32, #tpu.memory_space<vmem>>, vector<1x1x16x16xf32>
    %34 = vector.shape_cast %33 : vector<1x1x16x16xf32> to vector<16x16xf32>
    %cst_41 = arith.constant dense<0.000000e+00> : vector<24x16xf32>
    %35 = tpu.matmul %29, %34, %cst_41 {dimension_numbers = #tpu.dot_dimension_numbers<[1], [0], [0], [1], [0, 0, 1, 1], [], []>} : vector<24x16xf32>, vector<16x16xf32>, vector<24x16xf32> -> vector<24x16xf32>
    %c1_42 = arith.constant 1 : index
    %c2_43 = arith.constant 2 : index
    %c0_44 = arith.constant 0 : index
    %c0_45 = arith.constant 0 : index
    %36 = vector.load %arg1[%c1_42, %c2_43, %c0_44, %c0_45] : memref<3x5x16x16xf32, #tpu.memory_space<vmem>>, vector<1x1x16x16xf32>
    %37 = vector.shape_cast %36 : vector<1x1x16x16xf32> to vector<16x16xf32>
    %cst_46 = arith.constant dense<0.000000e+00> : vector<24x16xf32>
    %38 = tpu.matmul %29, %37, %cst_46 {dimension_numbers = #tpu.dot_dimension_numbers<[1], [0], [0], [1], [0, 0, 1, 1], [], []>} : vector<24x16xf32>, vector<16x16xf32>, vector<24x16xf32> -> vector<24x16xf32>
    %c1_47 = arith.constant 1 : index
    %c3_48 = arith.constant 3 : index
    %c0_49 = arith.constant 0 : index
    %c0_50 = arith.constant 0 : index
    %39 = vector.load %arg1[%c1_47, %c3_48, %c0_49, %c0_50] : memref<3x5x16x16xf32, #tpu.memory_space<vmem>>, vector<1x1x16x16xf32>
    %40 = vector.shape_cast %39 : vector<1x1x16x16xf32> to vector<16x16xf32>
    %cst_51 = arith.constant dense<0.000000e+00> : vector<24x16xf32>
    %41 = tpu.matmul %29, %40, %cst_51 {dimension_numbers = #tpu.dot_dimension_numbers<[1], [0], [0], [1], [0, 0, 1, 1], [], []>} : vector<24x16xf32>, vector<16x16xf32>, vector<24x16xf32> -> vector<24x16xf32>
    %c1_52 = arith.constant 1 : index
    %c4_53 = arith.constant 4 : index
    %c0_54 = arith.constant 0 : index
    %c0_55 = arith.constant 0 : index
    %42 = vector.load %arg1[%c1_52, %c4_53, %c0_54, %c0_55] : memref<3x5x16x16xf32, #tpu.memory_space<vmem>>, vector<1x1x16x16xf32>
    %43 = vector.shape_cast %42 : vector<1x1x16x16xf32> to vector<16x16xf32>
    %cst_56 = arith.constant dense<0.000000e+00> : vector<24x16xf32>
    %44 = tpu.matmul %29, %43, %cst_56 {dimension_numbers = #tpu.dot_dimension_numbers<[1], [0], [0], [1], [0, 0, 1, 1], [], []>} : vector<24x16xf32>, vector<16x16xf32>, vector<24x16xf32> -> vector<24x16xf32>
    %45 = tpu.concatenate %32, %35, %38, %41, %44 in 0 : vector<24x16xf32>, vector<24x16xf32>, vector<24x16xf32>, vector<24x16xf32>, vector<24x16xf32> -> vector<120x16xf32>
    %c1_57 = arith.constant 1 : index
    %c0_58 = arith.constant 0 : index
    %c0_59 = arith.constant 0 : index
    %46 = vector.load %arg2[%c1_57, %c0_58, %c0_59] : memref<3x24x120xf32, #tpu.memory_space<vmem>>, vector<1x24x120xf32>
    %47 = vector.shape_cast %46 : vector<1x24x120xf32> to vector<24x120xf32>
    %cst_60 = arith.constant dense<0.000000e+00> : vector<24x16xf32>
    %48 = tpu.matmul %47, %45, %cst_60 {dimension_numbers = #tpu.dot_dimension_numbers<[1], [0], [0], [1], [0, 0, 1, 1], [], []>} : vector<24x120xf32>, vector<120x16xf32>, vector<24x16xf32> -> vector<24x16xf32>
    %c1_61 = arith.constant 1 : index
    %c0_62 = arith.constant 0 : index
    %c0_63 = arith.constant 0 : index
    %49 = vector.load %arg3[%c1_61, %c0_62, %c0_63] : memref<3x1x16xf32, #tpu.memory_space<vmem>>, vector<1x1x16xf32>
    %50 = vector.shape_cast %49 : vector<1x1x16xf32> to vector<1x16xf32>
    %51 = vector.broadcast %50 : vector<1x16xf32> to vector<24x16xf32>
    %52 = arith.mulf %48, %51 : vector<24x16xf32>
    %c1_64 = arith.constant 1 : index
    %c0_65 = arith.constant 0 : index
    %c0_66 = arith.constant 0 : index
    %53 = vector.load %arg4[%c1_64, %c0_65, %c0_66] : memref<3x1x16xf32, #tpu.memory_space<vmem>>, vector<1x1x16xf32>
    %54 = vector.shape_cast %53 : vector<1x1x16xf32> to vector<1x16xf32>
    %55 = vector.broadcast %54 : vector<1x16xf32> to vector<24x16xf32>
    %56 = arith.addf %52, %55 : vector<24x16xf32>
    %cst_67 = arith.constant 0.000000e+00 : f32
    %57 = vector.broadcast %cst_67 : f32 to vector<24x16xf32>
    %58 = arith.maximumf %56, %57 : vector<24x16xf32>
    %c2_68 = arith.constant 2 : index
    %c0_69 = arith.constant 0 : index
    %c0_70 = arith.constant 0 : index
    %c0_71 = arith.constant 0 : index
    %59 = vector.load %arg1[%c2_68, %c0_69, %c0_70, %c0_71] : memref<3x5x16x16xf32, #tpu.memory_space<vmem>>, vector<1x1x16x16xf32>
    %60 = vector.shape_cast %59 : vector<1x1x16x16xf32> to vector<16x16xf32>
    %cst_72 = arith.constant dense<0.000000e+00> : vector<24x16xf32>
    %61 = tpu.matmul %58, %60, %cst_72 {dimension_numbers = #tpu.dot_dimension_numbers<[1], [0], [0], [1], [0, 0, 1, 1], [], []>} : vector<24x16xf32>, vector<16x16xf32>, vector<24x16xf32> -> vector<24x16xf32>
    %c2_73 = arith.constant 2 : index
    %c1_74 = arith.constant 1 : index
    %c0_75 = arith.constant 0 : index
    %c0_76 = arith.constant 0 : index
    %62 = vector.load %arg1[%c2_73, %c1_74, %c0_75, %c0_76] : memref<3x5x16x16xf32, #tpu.memory_space<vmem>>, vector<1x1x16x16xf32>
    %63 = vector.shape_cast %62 : vector<1x1x16x16xf32> to vector<16x16xf32>
    %cst_77 = arith.constant dense<0.000000e+00> : vector<24x16xf32>
    %64 = tpu.matmul %58, %63, %cst_77 {dimension_numbers = #tpu.dot_dimension_numbers<[1], [0], [0], [1], [0, 0, 1, 1], [], []>} : vector<24x16xf32>, vector<16x16xf32>, vector<24x16xf32> -> vector<24x16xf32>
    %c2_78 = arith.constant 2 : index
    %c2_79 = arith.constant 2 : index
    %c0_80 = arith.constant 0 : index
    %c0_81 = arith.constant 0 : index
    %65 = vector.load %arg1[%c2_78, %c2_79, %c0_80, %c0_81] : memref<3x5x16x16xf32, #tpu.memory_space<vmem>>, vector<1x1x16x16xf32>
    %66 = vector.shape_cast %65 : vector<1x1x16x16xf32> to vector<16x16xf32>
    %cst_82 = arith.constant dense<0.000000e+00> : vector<24x16xf32>
    %67 = tpu.matmul %58, %66, %cst_82 {dimension_numbers = #tpu.dot_dimension_numbers<[1], [0], [0], [1], [0, 0, 1, 1], [], []>} : vector<24x16xf32>, vector<16x16xf32>, vector<24x16xf32> -> vector<24x16xf32>
    %c2_83 = arith.constant 2 : index
    %c3_84 = arith.constant 3 : index
    %c0_85 = arith.constant 0 : index
    %c0_86 = arith.constant 0 : index
    %68 = vector.load %arg1[%c2_83, %c3_84, %c0_85, %c0_86] : memref<3x5x16x16xf32, #tpu.memory_space<vmem>>, vector<1x1x16x16xf32>
    %69 = vector.shape_cast %68 : vector<1x1x16x16xf32> to vector<16x16xf32>
    %cst_87 = arith.constant dense<0.000000e+00> : vector<24x16xf32>
    %70 = tpu.matmul %58, %69, %cst_87 {dimension_numbers = #tpu.dot_dimension_numbers<[1], [0], [0], [1], [0, 0, 1, 1], [], []>} : vector<24x16xf32>, vector<16x16xf32>, vector<24x16xf32> -> vector<24x16xf32>
    %c2_88 = arith.constant 2 : index
    %c4_89 = arith.constant 4 : index
    %c0_90 = arith.constant 0 : index
    %c0_91 = arith.constant 0 : index
    %71 = vector.load %arg1[%c2_88, %c4_89, %c0_90, %c0_91] : memref<3x5x16x16xf32, #tpu.memory_space<vmem>>, vector<1x1x16x16xf32>
    %72 = vector.shape_cast %71 : vector<1x1x16x16xf32> to vector<16x16xf32>
    %cst_92 = arith.constant dense<0.000000e+00> : vector<24x16xf32>
    %73 = tpu.matmul %58, %72, %cst_92 {dimension_numbers = #tpu.dot_dimension_numbers<[1], [0], [0], [1], [0, 0, 1, 1], [], []>} : vector<24x16xf32>, vector<16x16xf32>, vector<24x16xf32> -> vector<24x16xf32>
    %74 = tpu.concatenate %61, %64, %67, %70, %73 in 0 : vector<24x16xf32>, vector<24x16xf32>, vector<24x16xf32>, vector<24x16xf32>, vector<24x16xf32> -> vector<120x16xf32>
    %c2_93 = arith.constant 2 : index
    %c0_94 = arith.constant 0 : index
    %c0_95 = arith.constant 0 : index
    %75 = vector.load %arg2[%c2_93, %c0_94, %c0_95] : memref<3x24x120xf32, #tpu.memory_space<vmem>>, vector<1x24x120xf32>
    %76 = vector.shape_cast %75 : vector<1x24x120xf32> to vector<24x120xf32>
    %cst_96 = arith.constant dense<0.000000e+00> : vector<24x16xf32>
    %77 = tpu.matmul %76, %74, %cst_96 {dimension_numbers = #tpu.dot_dimension_numbers<[1], [0], [0], [1], [0, 0, 1, 1], [], []>} : vector<24x120xf32>, vector<120x16xf32>, vector<24x16xf32> -> vector<24x16xf32>
    %c2_97 = arith.constant 2 : index
    %c0_98 = arith.constant 0 : index
    %c0_99 = arith.constant 0 : index
    %78 = vector.load %arg3[%c2_97, %c0_98, %c0_99] : memref<3x1x16xf32, #tpu.memory_space<vmem>>, vector<1x1x16xf32>
    %79 = vector.shape_cast %78 : vector<1x1x16xf32> to vector<1x16xf32>
    %80 = vector.broadcast %79 : vector<1x16xf32> to vector<24x16xf32>
    %81 = arith.mulf %77, %80 : vector<24x16xf32>
    %c2_100 = arith.constant 2 : index
    %c0_101 = arith.constant 0 : index
    %c0_102 = arith.constant 0 : index
    %82 = vector.load %arg4[%c2_100, %c0_101, %c0_102] : memref<3x1x16xf32, #tpu.memory_space<vmem>>, vector<1x1x16xf32>
    %83 = vector.shape_cast %82 : vector<1x1x16xf32> to vector<1x16xf32>
    %84 = vector.broadcast %83 : vector<1x16xf32> to vector<24x16xf32>
    %85 = arith.addf %81, %84 : vector<24x16xf32>
    %86 = tpu.concatenate %0, %29, %58, %85 in 0 : vector<24x16xf32>, vector<24x16xf32>, vector<24x16xf32>, vector<24x16xf32> -> vector<96x16xf32>
    %c0_103 = arith.constant 0 : index
    %c0_104 = arith.constant 0 : index
    %c0_105 = arith.constant 0 : index
    %87 = vector.load %arg5[%c0_103, %c0_104, %c0_105] : memref<4x16x24xf32, #tpu.memory_space<vmem>>, vector<1x16x24xf32>
    %88 = vector.shape_cast %87 : vector<1x16x24xf32> to vector<16x24xf32>
    %cst_106 = arith.constant dense<0.000000e+00> : vector<96x24xf32>
    %89 = tpu.matmul %86, %88, %cst_106 {dimension_numbers = #tpu.dot_dimension_numbers<[1], [0], [0], [1], [0, 0, 1, 1], [], []>} : vector<96x16xf32>, vector<16x24xf32>, vector<96x24xf32> -> vector<96x24xf32>
    %c0_107 = arith.constant 0 : index
    %c0_108 = arith.constant 0 : index
    %c0_109 = arith.constant 0 : index
    %90 = vector.load %arg7[%c0_107, %c0_108, %c0_109] : memref<4x1x24xf32, #tpu.memory_space<vmem>>, vector<1x1x24xf32>
    %91 = vector.shape_cast %90 : vector<1x1x24xf32> to vector<1x24xf32>
    %92 = vector.broadcast %91 : vector<1x24xf32> to vector<96x24xf32>
    %93 = arith.addf %89, %92 : vector<96x24xf32>
    %c1_110 = arith.constant 1 : index
    %c0_111 = arith.constant 0 : index
    %c0_112 = arith.constant 0 : index
    %94 = vector.load %arg5[%c1_110, %c0_111, %c0_112] : memref<4x16x24xf32, #tpu.memory_space<vmem>>, vector<1x16x24xf32>
    %95 = vector.shape_cast %94 : vector<1x16x24xf32> to vector<16x24xf32>
    %cst_113 = arith.constant dense<0.000000e+00> : vector<96x24xf32>
    %96 = tpu.matmul %86, %95, %cst_113 {dimension_numbers = #tpu.dot_dimension_numbers<[1], [0], [0], [1], [0, 0, 1, 1], [], []>} : vector<96x16xf32>, vector<16x24xf32>, vector<96x24xf32> -> vector<96x24xf32>
    %c1_114 = arith.constant 1 : index
    %c0_115 = arith.constant 0 : index
    %c0_116 = arith.constant 0 : index
    %97 = vector.load %arg7[%c1_114, %c0_115, %c0_116] : memref<4x1x24xf32, #tpu.memory_space<vmem>>, vector<1x1x24xf32>
    %98 = vector.shape_cast %97 : vector<1x1x24xf32> to vector<1x24xf32>
    %99 = vector.broadcast %98 : vector<1x24xf32> to vector<96x24xf32>
    %100 = arith.addf %96, %99 : vector<96x24xf32>
    %c2_117 = arith.constant 2 : index
    %c0_118 = arith.constant 0 : index
    %c0_119 = arith.constant 0 : index
    %101 = vector.load %arg5[%c2_117, %c0_118, %c0_119] : memref<4x16x24xf32, #tpu.memory_space<vmem>>, vector<1x16x24xf32>
    %102 = vector.shape_cast %101 : vector<1x16x24xf32> to vector<16x24xf32>
    %cst_120 = arith.constant dense<0.000000e+00> : vector<96x24xf32>
    %103 = tpu.matmul %86, %102, %cst_120 {dimension_numbers = #tpu.dot_dimension_numbers<[1], [0], [0], [1], [0, 0, 1, 1], [], []>} : vector<96x16xf32>, vector<16x24xf32>, vector<96x24xf32> -> vector<96x24xf32>
    %c2_121 = arith.constant 2 : index
    %c0_122 = arith.constant 0 : index
    %c0_123 = arith.constant 0 : index
    %104 = vector.load %arg7[%c2_121, %c0_122, %c0_123] : memref<4x1x24xf32, #tpu.memory_space<vmem>>, vector<1x1x24xf32>
    %105 = vector.shape_cast %104 : vector<1x1x24xf32> to vector<1x24xf32>
    %106 = vector.broadcast %105 : vector<1x24xf32> to vector<96x24xf32>
    %107 = arith.addf %103, %106 : vector<96x24xf32>
    %c3_124 = arith.constant 3 : index
    %c0_125 = arith.constant 0 : index
    %c0_126 = arith.constant 0 : index
    %108 = vector.load %arg5[%c3_124, %c0_125, %c0_126] : memref<4x16x24xf32, #tpu.memory_space<vmem>>, vector<1x16x24xf32>
    %109 = vector.shape_cast %108 : vector<1x16x24xf32> to vector<16x24xf32>
    %cst_127 = arith.constant dense<0.000000e+00> : vector<96x24xf32>
    %110 = tpu.matmul %86, %109, %cst_127 {dimension_numbers = #tpu.dot_dimension_numbers<[1], [0], [0], [1], [0, 0, 1, 1], [], []>} : vector<96x16xf32>, vector<16x24xf32>, vector<96x24xf32> -> vector<96x24xf32>
    %c3_128 = arith.constant 3 : index
    %c0_129 = arith.constant 0 : index
    %c0_130 = arith.constant 0 : index
    %111 = vector.load %arg7[%c3_128, %c0_129, %c0_130] : memref<4x1x24xf32, #tpu.memory_space<vmem>>, vector<1x1x24xf32>
    %112 = vector.shape_cast %111 : vector<1x1x24xf32> to vector<1x24xf32>
    %113 = vector.broadcast %112 : vector<1x24xf32> to vector<96x24xf32>
    %114 = arith.addf %110, %113 : vector<96x24xf32>
    %cst_131 = arith.constant 0.000000e+00 : f32
    %115 = vector.broadcast %cst_131 : f32 to vector<24x24xf32>
    %cst_132 = arith.constant 0.000000e+00 : f32
    %116 = vector.broadcast %cst_132 : f32 to vector<24x24xf32>
    %117 = vector.extract_strided_slice %93 {offsets = [0, 0], sizes = [24, 24], strides = [1, 1]} : vector<96x24xf32> to vector<24x24xf32>
    %c0_133 = arith.constant 0 : index
    %c0_134 = arith.constant 0 : index
    %c0_135 = arith.constant 0 : index
    %118 = vector.load %arg6[%c0_133, %c0_134, %c0_135] : memref<4x24x24xf32, #tpu.memory_space<vmem>>, vector<1x24x24xf32>
    %119 = vector.shape_cast %118 : vector<1x24x24xf32> to vector<24x24xf32>
    %cst_136 = arith.constant dense<0.000000e+00> : vector<24x24xf32>
    %120 = tpu.matmul %115, %119, %cst_136 {dimension_numbers = #tpu.dot_dimension_numbers<[1], [0], [0], [1], [0, 0, 1, 1], [], []>} : vector<24x24xf32>, vector<24x24xf32>, vector<24x24xf32> -> vector<24x24xf32>
    %121 = arith.addf %117, %120 : vector<24x24xf32>
    %122 = vector.extract_strided_slice %100 {offsets = [0, 0], sizes = [24, 24], strides = [1, 1]} : vector<96x24xf32> to vector<24x24xf32>
    %c1_137 = arith.constant 1 : index
    %c0_138 = arith.constant 0 : index
    %c0_139 = arith.constant 0 : index
    %123 = vector.load %arg6[%c1_137, %c0_138, %c0_139] : memref<4x24x24xf32, #tpu.memory_space<vmem>>, vector<1x24x24xf32>
    %124 = vector.shape_cast %123 : vector<1x24x24xf32> to vector<24x24xf32>
    %cst_140 = arith.constant dense<0.000000e+00> : vector<24x24xf32>
    %125 = tpu.matmul %115, %124, %cst_140 {dimension_numbers = #tpu.dot_dimension_numbers<[1], [0], [0], [1], [0, 0, 1, 1], [], []>} : vector<24x24xf32>, vector<24x24xf32>, vector<24x24xf32> -> vector<24x24xf32>
    %126 = arith.addf %122, %125 : vector<24x24xf32>
    %127 = vector.extract_strided_slice %107 {offsets = [0, 0], sizes = [24, 24], strides = [1, 1]} : vector<96x24xf32> to vector<24x24xf32>
    %c2_141 = arith.constant 2 : index
    %c0_142 = arith.constant 0 : index
    %c0_143 = arith.constant 0 : index
    %128 = vector.load %arg6[%c2_141, %c0_142, %c0_143] : memref<4x24x24xf32, #tpu.memory_space<vmem>>, vector<1x24x24xf32>
    %129 = vector.shape_cast %128 : vector<1x24x24xf32> to vector<24x24xf32>
    %cst_144 = arith.constant dense<0.000000e+00> : vector<24x24xf32>
    %130 = tpu.matmul %115, %129, %cst_144 {dimension_numbers = #tpu.dot_dimension_numbers<[1], [0], [0], [1], [0, 0, 1, 1], [], []>} : vector<24x24xf32>, vector<24x24xf32>, vector<24x24xf32> -> vector<24x24xf32>
    %131 = arith.addf %127, %130 : vector<24x24xf32>
    %132 = vector.extract_strided_slice %114 {offsets = [0, 0], sizes = [24, 24], strides = [1, 1]} : vector<96x24xf32> to vector<24x24xf32>
    %c3_145 = arith.constant 3 : index
    %c0_146 = arith.constant 0 : index
    %c0_147 = arith.constant 0 : index
    %133 = vector.load %arg6[%c3_145, %c0_146, %c0_147] : memref<4x24x24xf32, #tpu.memory_space<vmem>>, vector<1x24x24xf32>
    %134 = vector.shape_cast %133 : vector<1x24x24xf32> to vector<24x24xf32>
    %cst_148 = arith.constant dense<0.000000e+00> : vector<24x24xf32>
    %135 = tpu.matmul %115, %134, %cst_148 {dimension_numbers = #tpu.dot_dimension_numbers<[1], [0], [0], [1], [0, 0, 1, 1], [], []>} : vector<24x24xf32>, vector<24x24xf32>, vector<24x24xf32> -> vector<24x24xf32>
    %136 = arith.addf %132, %135 : vector<24x24xf32>
    %137 = arith.negf %126 : vector<24x24xf32>
    %138 = math.exp %137 : vector<24x24xf32>
    %cst_149 = arith.constant 1.000000e+00 : f32
    %139 = vector.broadcast %cst_149 : f32 to vector<24x24xf32>
    %140 = arith.addf %139, %138 : vector<24x24xf32>
    %141 = arith.divf %139, %140 : vector<24x24xf32>
    %142 = arith.mulf %141, %116 : vector<24x24xf32>
    %143 = arith.negf %121 : vector<24x24xf32>
    %144 = math.exp %143 : vector<24x24xf32>
    %cst_150 = arith.constant 1.000000e+00 : f32
    %145 = vector.broadcast %cst_150 : f32 to vector<24x24xf32>
    %146 = arith.addf %145, %144 : vector<24x24xf32>
    %147 = arith.divf %145, %146 : vector<24x24xf32>
    %148 = math.tanh %131 : vector<24x24xf32>
    %149 = arith.mulf %147, %148 : vector<24x24xf32>
    %150 = arith.addf %142, %149 : vector<24x24xf32>
    %151 = arith.negf %136 : vector<24x24xf32>
    %152 = math.exp %151 : vector<24x24xf32>
    %cst_151 = arith.constant 1.000000e+00 : f32
    %153 = vector.broadcast %cst_151 : f32 to vector<24x24xf32>
    %154 = arith.addf %153, %152 : vector<24x24xf32>
    %155 = arith.divf %153, %154 : vector<24x24xf32>
    %156 = math.tanh %150 : vector<24x24xf32>
    %157 = arith.mulf %155, %156 : vector<24x24xf32>
    %158 = vector.extract_strided_slice %93 {offsets = [24, 0], sizes = [24, 24], strides = [1, 1]} : vector<96x24xf32> to vector<24x24xf32>
    %c0_152 = arith.constant 0 : index
    %c0_153 = arith.constant 0 : index
    %c0_154 = arith.constant 0 : index
    %159 = vector.load %arg6[%c0_152, %c0_153, %c0_154] : memref<4x24x24xf32, #tpu.memory_space<vmem>>, vector<1x24x24xf32>
    %160 = vector.shape_cast %159 : vector<1x24x24xf32> to vector<24x24xf32>
    %cst_155 = arith.constant dense<0.000000e+00> : vector<24x24xf32>
    %161 = tpu.matmul %157, %160, %cst_155 {dimension_numbers = #tpu.dot_dimension_numbers<[1], [0], [0], [1], [0, 0, 1, 1], [], []>} : vector<24x24xf32>, vector<24x24xf32>, vector<24x24xf32> -> vector<24x24xf32>
    %162 = arith.addf %158, %161 : vector<24x24xf32>
    %163 = vector.extract_strided_slice %100 {offsets = [24, 0], sizes = [24, 24], strides = [1, 1]} : vector<96x24xf32> to vector<24x24xf32>
    %c1_156 = arith.constant 1 : index
    %c0_157 = arith.constant 0 : index
    %c0_158 = arith.constant 0 : index
    %164 = vector.load %arg6[%c1_156, %c0_157, %c0_158] : memref<4x24x24xf32, #tpu.memory_space<vmem>>, vector<1x24x24xf32>
    %165 = vector.shape_cast %164 : vector<1x24x24xf32> to vector<24x24xf32>
    %cst_159 = arith.constant dense<0.000000e+00> : vector<24x24xf32>
    %166 = tpu.matmul %157, %165, %cst_159 {dimension_numbers = #tpu.dot_dimension_numbers<[1], [0], [0], [1], [0, 0, 1, 1], [], []>} : vector<24x24xf32>, vector<24x24xf32>, vector<24x24xf32> -> vector<24x24xf32>
    %167 = arith.addf %163, %166 : vector<24x24xf32>
    %168 = vector.extract_strided_slice %107 {offsets = [24, 0], sizes = [24, 24], strides = [1, 1]} : vector<96x24xf32> to vector<24x24xf32>
    %c2_160 = arith.constant 2 : index
    %c0_161 = arith.constant 0 : index
    %c0_162 = arith.constant 0 : index
    %169 = vector.load %arg6[%c2_160, %c0_161, %c0_162] : memref<4x24x24xf32, #tpu.memory_space<vmem>>, vector<1x24x24xf32>
    %170 = vector.shape_cast %169 : vector<1x24x24xf32> to vector<24x24xf32>
    %cst_163 = arith.constant dense<0.000000e+00> : vector<24x24xf32>
    %171 = tpu.matmul %157, %170, %cst_163 {dimension_numbers = #tpu.dot_dimension_numbers<[1], [0], [0], [1], [0, 0, 1, 1], [], []>} : vector<24x24xf32>, vector<24x24xf32>, vector<24x24xf32> -> vector<24x24xf32>
    %172 = arith.addf %168, %171 : vector<24x24xf32>
    %173 = vector.extract_strided_slice %114 {offsets = [24, 0], sizes = [24, 24], strides = [1, 1]} : vector<96x24xf32> to vector<24x24xf32>
    %c3_164 = arith.constant 3 : index
    %c0_165 = arith.constant 0 : index
    %c0_166 = arith.constant 0 : index
    %174 = vector.load %arg6[%c3_164, %c0_165, %c0_166] : memref<4x24x24xf32, #tpu.memory_space<vmem>>, vector<1x24x24xf32>
    %175 = vector.shape_cast %174 : vector<1x24x24xf32> to vector<24x24xf32>
    %cst_167 = arith.constant dense<0.000000e+00> : vector<24x24xf32>
    %176 = tpu.matmul %157, %175, %cst_167 {dimension_numbers = #tpu.dot_dimension_numbers<[1], [0], [0], [1], [0, 0, 1, 1], [], []>} : vector<24x24xf32>, vector<24x24xf32>, vector<24x24xf32> -> vector<24x24xf32>
    %177 = arith.addf %173, %176 : vector<24x24xf32>
    %178 = arith.negf %167 : vector<24x24xf32>
    %179 = math.exp %178 : vector<24x24xf32>
    %cst_168 = arith.constant 1.000000e+00 : f32
    %180 = vector.broadcast %cst_168 : f32 to vector<24x24xf32>
    %181 = arith.addf %180, %179 : vector<24x24xf32>
    %182 = arith.divf %180, %181 : vector<24x24xf32>
    %183 = arith.mulf %182, %150 : vector<24x24xf32>
    %184 = arith.negf %162 : vector<24x24xf32>
    %185 = math.exp %184 : vector<24x24xf32>
    %cst_169 = arith.constant 1.000000e+00 : f32
    %186 = vector.broadcast %cst_169 : f32 to vector<24x24xf32>
    %187 = arith.addf %186, %185 : vector<24x24xf32>
    %188 = arith.divf %186, %187 : vector<24x24xf32>
    %189 = math.tanh %172 : vector<24x24xf32>
    %190 = arith.mulf %188, %189 : vector<24x24xf32>
    %191 = arith.addf %183, %190 : vector<24x24xf32>
    %192 = arith.negf %177 : vector<24x24xf32>
    %193 = math.exp %192 : vector<24x24xf32>
    %cst_170 = arith.constant 1.000000e+00 : f32
    %194 = vector.broadcast %cst_170 : f32 to vector<24x24xf32>
    %195 = arith.addf %194, %193 : vector<24x24xf32>
    %196 = arith.divf %194, %195 : vector<24x24xf32>
    %197 = math.tanh %191 : vector<24x24xf32>
    %198 = arith.mulf %196, %197 : vector<24x24xf32>
    %199 = vector.extract_strided_slice %93 {offsets = [48, 0], sizes = [24, 24], strides = [1, 1]} : vector<96x24xf32> to vector<24x24xf32>
    %c0_171 = arith.constant 0 : index
    %c0_172 = arith.constant 0 : index
    %c0_173 = arith.constant 0 : index
    %200 = vector.load %arg6[%c0_171, %c0_172, %c0_173] : memref<4x24x24xf32, #tpu.memory_space<vmem>>, vector<1x24x24xf32>
    %201 = vector.shape_cast %200 : vector<1x24x24xf32> to vector<24x24xf32>
    %cst_174 = arith.constant dense<0.000000e+00> : vector<24x24xf32>
    %202 = tpu.matmul %198, %201, %cst_174 {dimension_numbers = #tpu.dot_dimension_numbers<[1], [0], [0], [1], [0, 0, 1, 1], [], []>} : vector<24x24xf32>, vector<24x24xf32>, vector<24x24xf32> -> vector<24x24xf32>
    %203 = arith.addf %199, %202 : vector<24x24xf32>
    %204 = vector.extract_strided_slice %100 {offsets = [48, 0], sizes = [24, 24], strides = [1, 1]} : vector<96x24xf32> to vector<24x24xf32>
    %c1_175 = arith.constant 1 : index
    %c0_176 = arith.constant 0 : index
    %c0_177 = arith.constant 0 : index
    %205 = vector.load %arg6[%c1_175, %c0_176, %c0_177] : memref<4x24x24xf32, #tpu.memory_space<vmem>>, vector<1x24x24xf32>
    %206 = vector.shape_cast %205 : vector<1x24x24xf32> to vector<24x24xf32>
    %cst_178 = arith.constant dense<0.000000e+00> : vector<24x24xf32>
    %207 = tpu.matmul %198, %206, %cst_178 {dimension_numbers = #tpu.dot_dimension_numbers<[1], [0], [0], [1], [0, 0, 1, 1], [], []>} : vector<24x24xf32>, vector<24x24xf32>, vector<24x24xf32> -> vector<24x24xf32>
    %208 = arith.addf %204, %207 : vector<24x24xf32>
    %209 = vector.extract_strided_slice %107 {offsets = [48, 0], sizes = [24, 24], strides = [1, 1]} : vector<96x24xf32> to vector<24x24xf32>
    %c2_179 = arith.constant 2 : index
    %c0_180 = arith.constant 0 : index
    %c0_181 = arith.constant 0 : index
    %210 = vector.load %arg6[%c2_179, %c0_180, %c0_181] : memref<4x24x24xf32, #tpu.memory_space<vmem>>, vector<1x24x24xf32>
    %211 = vector.shape_cast %210 : vector<1x24x24xf32> to vector<24x24xf32>
    %cst_182 = arith.constant dense<0.000000e+00> : vector<24x24xf32>
    %212 = tpu.matmul %198, %211, %cst_182 {dimension_numbers = #tpu.dot_dimension_numbers<[1], [0], [0], [1], [0, 0, 1, 1], [], []>} : vector<24x24xf32>, vector<24x24xf32>, vector<24x24xf32> -> vector<24x24xf32>
    %213 = arith.addf %209, %212 : vector<24x24xf32>
    %214 = vector.extract_strided_slice %114 {offsets = [48, 0], sizes = [24, 24], strides = [1, 1]} : vector<96x24xf32> to vector<24x24xf32>
    %c3_183 = arith.constant 3 : index
    %c0_184 = arith.constant 0 : index
    %c0_185 = arith.constant 0 : index
    %215 = vector.load %arg6[%c3_183, %c0_184, %c0_185] : memref<4x24x24xf32, #tpu.memory_space<vmem>>, vector<1x24x24xf32>
    %216 = vector.shape_cast %215 : vector<1x24x24xf32> to vector<24x24xf32>
    %cst_186 = arith.constant dense<0.000000e+00> : vector<24x24xf32>
    %217 = tpu.matmul %198, %216, %cst_186 {dimension_numbers = #tpu.dot_dimension_numbers<[1], [0], [0], [1], [0, 0, 1, 1], [], []>} : vector<24x24xf32>, vector<24x24xf32>, vector<24x24xf32> -> vector<24x24xf32>
    %218 = arith.addf %214, %217 : vector<24x24xf32>
    %219 = arith.negf %208 : vector<24x24xf32>
    %220 = math.exp %219 : vector<24x24xf32>
    %cst_187 = arith.constant 1.000000e+00 : f32
    %221 = vector.broadcast %cst_187 : f32 to vector<24x24xf32>
    %222 = arith.addf %221, %220 : vector<24x24xf32>
    %223 = arith.divf %221, %222 : vector<24x24xf32>
    %224 = arith.mulf %223, %191 : vector<24x24xf32>
    %225 = arith.negf %203 : vector<24x24xf32>
    %226 = math.exp %225 : vector<24x24xf32>
    %cst_188 = arith.constant 1.000000e+00 : f32
    %227 = vector.broadcast %cst_188 : f32 to vector<24x24xf32>
    %228 = arith.addf %227, %226 : vector<24x24xf32>
    %229 = arith.divf %227, %228 : vector<24x24xf32>
    %230 = math.tanh %213 : vector<24x24xf32>
    %231 = arith.mulf %229, %230 : vector<24x24xf32>
    %232 = arith.addf %224, %231 : vector<24x24xf32>
    %233 = arith.negf %218 : vector<24x24xf32>
    %234 = math.exp %233 : vector<24x24xf32>
    %cst_189 = arith.constant 1.000000e+00 : f32
    %235 = vector.broadcast %cst_189 : f32 to vector<24x24xf32>
    %236 = arith.addf %235, %234 : vector<24x24xf32>
    %237 = arith.divf %235, %236 : vector<24x24xf32>
    %238 = math.tanh %232 : vector<24x24xf32>
    %239 = arith.mulf %237, %238 : vector<24x24xf32>
    %240 = vector.extract_strided_slice %93 {offsets = [72, 0], sizes = [24, 24], strides = [1, 1]} : vector<96x24xf32> to vector<24x24xf32>
    %c0_190 = arith.constant 0 : index
    %c0_191 = arith.constant 0 : index
    %c0_192 = arith.constant 0 : index
    %241 = vector.load %arg6[%c0_190, %c0_191, %c0_192] : memref<4x24x24xf32, #tpu.memory_space<vmem>>, vector<1x24x24xf32>
    %242 = vector.shape_cast %241 : vector<1x24x24xf32> to vector<24x24xf32>
    %cst_193 = arith.constant dense<0.000000e+00> : vector<24x24xf32>
    %243 = tpu.matmul %239, %242, %cst_193 {dimension_numbers = #tpu.dot_dimension_numbers<[1], [0], [0], [1], [0, 0, 1, 1], [], []>} : vector<24x24xf32>, vector<24x24xf32>, vector<24x24xf32> -> vector<24x24xf32>
    %244 = arith.addf %240, %243 : vector<24x24xf32>
    %245 = vector.extract_strided_slice %100 {offsets = [72, 0], sizes = [24, 24], strides = [1, 1]} : vector<96x24xf32> to vector<24x24xf32>
    %c1_194 = arith.constant 1 : index
    %c0_195 = arith.constant 0 : index
    %c0_196 = arith.constant 0 : index
    %246 = vector.load %arg6[%c1_194, %c0_195, %c0_196] : memref<4x24x24xf32, #tpu.memory_space<vmem>>, vector<1x24x24xf32>
    %247 = vector.shape_cast %246 : vector<1x24x24xf32> to vector<24x24xf32>
    %cst_197 = arith.constant dense<0.000000e+00> : vector<24x24xf32>
    %248 = tpu.matmul %239, %247, %cst_197 {dimension_numbers = #tpu.dot_dimension_numbers<[1], [0], [0], [1], [0, 0, 1, 1], [], []>} : vector<24x24xf32>, vector<24x24xf32>, vector<24x24xf32> -> vector<24x24xf32>
    %249 = arith.addf %245, %248 : vector<24x24xf32>
    %250 = vector.extract_strided_slice %107 {offsets = [72, 0], sizes = [24, 24], strides = [1, 1]} : vector<96x24xf32> to vector<24x24xf32>
    %c2_198 = arith.constant 2 : index
    %c0_199 = arith.constant 0 : index
    %c0_200 = arith.constant 0 : index
    %251 = vector.load %arg6[%c2_198, %c0_199, %c0_200] : memref<4x24x24xf32, #tpu.memory_space<vmem>>, vector<1x24x24xf32>
    %252 = vector.shape_cast %251 : vector<1x24x24xf32> to vector<24x24xf32>
    %cst_201 = arith.constant dense<0.000000e+00> : vector<24x24xf32>
    %253 = tpu.matmul %239, %252, %cst_201 {dimension_numbers = #tpu.dot_dimension_numbers<[1], [0], [0], [1], [0, 0, 1, 1], [], []>} : vector<24x24xf32>, vector<24x24xf32>, vector<24x24xf32> -> vector<24x24xf32>
    %254 = arith.addf %250, %253 : vector<24x24xf32>
    %255 = vector.extract_strided_slice %114 {offsets = [72, 0], sizes = [24, 24], strides = [1, 1]} : vector<96x24xf32> to vector<24x24xf32>
    %c3_202 = arith.constant 3 : index
    %c0_203 = arith.constant 0 : index
    %c0_204 = arith.constant 0 : index
    %256 = vector.load %arg6[%c3_202, %c0_203, %c0_204] : memref<4x24x24xf32, #tpu.memory_space<vmem>>, vector<1x24x24xf32>
    %257 = vector.shape_cast %256 : vector<1x24x24xf32> to vector<24x24xf32>
    %cst_205 = arith.constant dense<0.000000e+00> : vector<24x24xf32>
    %258 = tpu.matmul %239, %257, %cst_205 {dimension_numbers = #tpu.dot_dimension_numbers<[1], [0], [0], [1], [0, 0, 1, 1], [], []>} : vector<24x24xf32>, vector<24x24xf32>, vector<24x24xf32> -> vector<24x24xf32>
    %259 = arith.addf %255, %258 : vector<24x24xf32>
    %260 = arith.negf %249 : vector<24x24xf32>
    %261 = math.exp %260 : vector<24x24xf32>
    %cst_206 = arith.constant 1.000000e+00 : f32
    %262 = vector.broadcast %cst_206 : f32 to vector<24x24xf32>
    %263 = arith.addf %262, %261 : vector<24x24xf32>
    %264 = arith.divf %262, %263 : vector<24x24xf32>
    %265 = arith.mulf %264, %232 : vector<24x24xf32>
    %266 = arith.negf %244 : vector<24x24xf32>
    %267 = math.exp %266 : vector<24x24xf32>
    %cst_207 = arith.constant 1.000000e+00 : f32
    %268 = vector.broadcast %cst_207 : f32 to vector<24x24xf32>
    %269 = arith.addf %268, %267 : vector<24x24xf32>
    %270 = arith.divf %268, %269 : vector<24x24xf32>
    %271 = math.tanh %254 : vector<24x24xf32>
    %272 = arith.mulf %270, %271 : vector<24x24xf32>
    %273 = arith.addf %265, %272 : vector<24x24xf32>
    %274 = arith.negf %259 : vector<24x24xf32>
    %275 = math.exp %274 : vector<24x24xf32>
    %cst_208 = arith.constant 1.000000e+00 : f32
    %276 = vector.broadcast %cst_208 : f32 to vector<24x24xf32>
    %277 = arith.addf %276, %275 : vector<24x24xf32>
    %278 = arith.divf %276, %277 : vector<24x24xf32>
    %279 = math.tanh %273 : vector<24x24xf32>
    %280 = arith.mulf %278, %279 : vector<24x24xf32>
    %c0_209 = arith.constant 0 : index
    %c0_210 = arith.constant 0 : index
    %c0_211 = arith.constant 0 : index
    %281 = vector.load %arg8[%c0_209, %c0_210, %c0_211] : memref<4x16x24xf32, #tpu.memory_space<vmem>>, vector<1x16x24xf32>
    %282 = vector.shape_cast %281 : vector<1x16x24xf32> to vector<16x24xf32>
    %cst_212 = arith.constant dense<0.000000e+00> : vector<96x24xf32>
    %283 = tpu.matmul %86, %282, %cst_212 {dimension_numbers = #tpu.dot_dimension_numbers<[1], [0], [0], [1], [0, 0, 1, 1], [], []>} : vector<96x16xf32>, vector<16x24xf32>, vector<96x24xf32> -> vector<96x24xf32>
    %c0_213 = arith.constant 0 : index
    %c0_214 = arith.constant 0 : index
    %c0_215 = arith.constant 0 : index
    %284 = vector.load %arg10[%c0_213, %c0_214, %c0_215] : memref<4x1x24xf32, #tpu.memory_space<vmem>>, vector<1x1x24xf32>
    %285 = vector.shape_cast %284 : vector<1x1x24xf32> to vector<1x24xf32>
    %286 = vector.broadcast %285 : vector<1x24xf32> to vector<96x24xf32>
    %287 = arith.addf %283, %286 : vector<96x24xf32>
    %c1_216 = arith.constant 1 : index
    %c0_217 = arith.constant 0 : index
    %c0_218 = arith.constant 0 : index
    %288 = vector.load %arg8[%c1_216, %c0_217, %c0_218] : memref<4x16x24xf32, #tpu.memory_space<vmem>>, vector<1x16x24xf32>
    %289 = vector.shape_cast %288 : vector<1x16x24xf32> to vector<16x24xf32>
    %cst_219 = arith.constant dense<0.000000e+00> : vector<96x24xf32>
    %290 = tpu.matmul %86, %289, %cst_219 {dimension_numbers = #tpu.dot_dimension_numbers<[1], [0], [0], [1], [0, 0, 1, 1], [], []>} : vector<96x16xf32>, vector<16x24xf32>, vector<96x24xf32> -> vector<96x24xf32>
    %c1_220 = arith.constant 1 : index
    %c0_221 = arith.constant 0 : index
    %c0_222 = arith.constant 0 : index
    %291 = vector.load %arg10[%c1_220, %c0_221, %c0_222] : memref<4x1x24xf32, #tpu.memory_space<vmem>>, vector<1x1x24xf32>
    %292 = vector.shape_cast %291 : vector<1x1x24xf32> to vector<1x24xf32>
    %293 = vector.broadcast %292 : vector<1x24xf32> to vector<96x24xf32>
    %294 = arith.addf %290, %293 : vector<96x24xf32>
    %c2_223 = arith.constant 2 : index
    %c0_224 = arith.constant 0 : index
    %c0_225 = arith.constant 0 : index
    %295 = vector.load %arg8[%c2_223, %c0_224, %c0_225] : memref<4x16x24xf32, #tpu.memory_space<vmem>>, vector<1x16x24xf32>
    %296 = vector.shape_cast %295 : vector<1x16x24xf32> to vector<16x24xf32>
    %cst_226 = arith.constant dense<0.000000e+00> : vector<96x24xf32>
    %297 = tpu.matmul %86, %296, %cst_226 {dimension_numbers = #tpu.dot_dimension_numbers<[1], [0], [0], [1], [0, 0, 1, 1], [], []>} : vector<96x16xf32>, vector<16x24xf32>, vector<96x24xf32> -> vector<96x24xf32>
    %c2_227 = arith.constant 2 : index
    %c0_228 = arith.constant 0 : index
    %c0_229 = arith.constant 0 : index
    %298 = vector.load %arg10[%c2_227, %c0_228, %c0_229] : memref<4x1x24xf32, #tpu.memory_space<vmem>>, vector<1x1x24xf32>
    %299 = vector.shape_cast %298 : vector<1x1x24xf32> to vector<1x24xf32>
    %300 = vector.broadcast %299 : vector<1x24xf32> to vector<96x24xf32>
    %301 = arith.addf %297, %300 : vector<96x24xf32>
    %c3_230 = arith.constant 3 : index
    %c0_231 = arith.constant 0 : index
    %c0_232 = arith.constant 0 : index
    %302 = vector.load %arg8[%c3_230, %c0_231, %c0_232] : memref<4x16x24xf32, #tpu.memory_space<vmem>>, vector<1x16x24xf32>
    %303 = vector.shape_cast %302 : vector<1x16x24xf32> to vector<16x24xf32>
    %cst_233 = arith.constant dense<0.000000e+00> : vector<96x24xf32>
    %304 = tpu.matmul %86, %303, %cst_233 {dimension_numbers = #tpu.dot_dimension_numbers<[1], [0], [0], [1], [0, 0, 1, 1], [], []>} : vector<96x16xf32>, vector<16x24xf32>, vector<96x24xf32> -> vector<96x24xf32>
    %c3_234 = arith.constant 3 : index
    %c0_235 = arith.constant 0 : index
    %c0_236 = arith.constant 0 : index
    %305 = vector.load %arg10[%c3_234, %c0_235, %c0_236] : memref<4x1x24xf32, #tpu.memory_space<vmem>>, vector<1x1x24xf32>
    %306 = vector.shape_cast %305 : vector<1x1x24xf32> to vector<1x24xf32>
    %307 = vector.broadcast %306 : vector<1x24xf32> to vector<96x24xf32>
    %308 = arith.addf %304, %307 : vector<96x24xf32>
    %cst_237 = arith.constant 0.000000e+00 : f32
    %309 = vector.broadcast %cst_237 : f32 to vector<24x24xf32>
    %cst_238 = arith.constant 0.000000e+00 : f32
    %310 = vector.broadcast %cst_238 : f32 to vector<24x24xf32>
    %311 = vector.extract_strided_slice %287 {offsets = [72, 0], sizes = [24, 24], strides = [1, 1]} : vector<96x24xf32> to vector<24x24xf32>
    %c0_239 = arith.constant 0 : index
    %c0_240 = arith.constant 0 : index
    %c0_241 = arith.constant 0 : index
    %312 = vector.load %arg9[%c0_239, %c0_240, %c0_241] : memref<4x24x24xf32, #tpu.memory_space<vmem>>, vector<1x24x24xf32>
    %313 = vector.shape_cast %312 : vector<1x24x24xf32> to vector<24x24xf32>
    %cst_242 = arith.constant dense<0.000000e+00> : vector<24x24xf32>
    %314 = tpu.matmul %309, %313, %cst_242 {dimension_numbers = #tpu.dot_dimension_numbers<[1], [0], [0], [1], [0, 0, 1, 1], [], []>} : vector<24x24xf32>, vector<24x24xf32>, vector<24x24xf32> -> vector<24x24xf32>
    %315 = arith.addf %311, %314 : vector<24x24xf32>
    %316 = vector.extract_strided_slice %294 {offsets = [72, 0], sizes = [24, 24], strides = [1, 1]} : vector<96x24xf32> to vector<24x24xf32>
    %c1_243 = arith.constant 1 : index
    %c0_244 = arith.constant 0 : index
    %c0_245 = arith.constant 0 : index
    %317 = vector.load %arg9[%c1_243, %c0_244, %c0_245] : memref<4x24x24xf32, #tpu.memory_space<vmem>>, vector<1x24x24xf32>
    %318 = vector.shape_cast %317 : vector<1x24x24xf32> to vector<24x24xf32>
    %cst_246 = arith.constant dense<0.000000e+00> : vector<24x24xf32>
    %319 = tpu.matmul %309, %318, %cst_246 {dimension_numbers = #tpu.dot_dimension_numbers<[1], [0], [0], [1], [0, 0, 1, 1], [], []>} : vector<24x24xf32>, vector<24x24xf32>, vector<24x24xf32> -> vector<24x24xf32>
    %320 = arith.addf %316, %319 : vector<24x24xf32>
    %321 = vector.extract_strided_slice %301 {offsets = [72, 0], sizes = [24, 24], strides = [1, 1]} : vector<96x24xf32> to vector<24x24xf32>
    %c2_247 = arith.constant 2 : index
    %c0_248 = arith.constant 0 : index
    %c0_249 = arith.constant 0 : index
    %322 = vector.load %arg9[%c2_247, %c0_248, %c0_249] : memref<4x24x24xf32, #tpu.memory_space<vmem>>, vector<1x24x24xf32>
    %323 = vector.shape_cast %322 : vector<1x24x24xf32> to vector<24x24xf32>
    %cst_250 = arith.constant dense<0.000000e+00> : vector<24x24xf32>
    %324 = tpu.matmul %309, %323, %cst_250 {dimension_numbers = #tpu.dot_dimension_numbers<[1], [0], [0], [1], [0, 0, 1, 1], [], []>} : vector<24x24xf32>, vector<24x24xf32>, vector<24x24xf32> -> vector<24x24xf32>
    %325 = arith.addf %321, %324 : vector<24x24xf32>
    %326 = vector.extract_strided_slice %308 {offsets = [72, 0], sizes = [24, 24], strides = [1, 1]} : vector<96x24xf32> to vector<24x24xf32>
    %c3_251 = arith.constant 3 : index
    %c0_252 = arith.constant 0 : index
    %c0_253 = arith.constant 0 : index
    %327 = vector.load %arg9[%c3_251, %c0_252, %c0_253] : memref<4x24x24xf32, #tpu.memory_space<vmem>>, vector<1x24x24xf32>
    %328 = vector.shape_cast %327 : vector<1x24x24xf32> to vector<24x24xf32>
    %cst_254 = arith.constant dense<0.000000e+00> : vector<24x24xf32>
    %329 = tpu.matmul %309, %328, %cst_254 {dimension_numbers = #tpu.dot_dimension_numbers<[1], [0], [0], [1], [0, 0, 1, 1], [], []>} : vector<24x24xf32>, vector<24x24xf32>, vector<24x24xf32> -> vector<24x24xf32>
    %330 = arith.addf %326, %329 : vector<24x24xf32>
    %331 = arith.negf %320 : vector<24x24xf32>
    %332 = math.exp %331 : vector<24x24xf32>
    %cst_255 = arith.constant 1.000000e+00 : f32
    %333 = vector.broadcast %cst_255 : f32 to vector<24x24xf32>
    %334 = arith.addf %333, %332 : vector<24x24xf32>
    %335 = arith.divf %333, %334 : vector<24x24xf32>
    %336 = arith.mulf %335, %310 : vector<24x24xf32>
    %337 = arith.negf %315 : vector<24x24xf32>
    %338 = math.exp %337 : vector<24x24xf32>
    %cst_256 = arith.constant 1.000000e+00 : f32
    %339 = vector.broadcast %cst_256 : f32 to vector<24x24xf32>
    %340 = arith.addf %339, %338 : vector<24x24xf32>
    %341 = arith.divf %339, %340 : vector<24x24xf32>
    %342 = math.tanh %325 : vector<24x24xf32>
    %343 = arith.mulf %341, %342 : vector<24x24xf32>
    %344 = arith.addf %336, %343 : vector<24x24xf32>
    %345 = arith.negf %330 : vector<24x24xf32>
    %346 = math.exp %345 : vector<24x24xf32>
    %cst_257 = arith.constant 1.000000e+00 : f32
    %347 = vector.broadcast %cst_257 : f32 to vector<24x24xf32>
    %348 = arith.addf %347, %346 : vector<24x24xf32>
    %349 = arith.divf %347, %348 : vector<24x24xf32>
    %350 = math.tanh %344 : vector<24x24xf32>
    %351 = arith.mulf %349, %350 : vector<24x24xf32>
    %352 = vector.extract_strided_slice %287 {offsets = [48, 0], sizes = [24, 24], strides = [1, 1]} : vector<96x24xf32> to vector<24x24xf32>
    %c0_258 = arith.constant 0 : index
    %c0_259 = arith.constant 0 : index
    %c0_260 = arith.constant 0 : index
    %353 = vector.load %arg9[%c0_258, %c0_259, %c0_260] : memref<4x24x24xf32, #tpu.memory_space<vmem>>, vector<1x24x24xf32>
    %354 = vector.shape_cast %353 : vector<1x24x24xf32> to vector<24x24xf32>
    %cst_261 = arith.constant dense<0.000000e+00> : vector<24x24xf32>
    %355 = tpu.matmul %351, %354, %cst_261 {dimension_numbers = #tpu.dot_dimension_numbers<[1], [0], [0], [1], [0, 0, 1, 1], [], []>} : vector<24x24xf32>, vector<24x24xf32>, vector<24x24xf32> -> vector<24x24xf32>
    %356 = arith.addf %352, %355 : vector<24x24xf32>
    %357 = vector.extract_strided_slice %294 {offsets = [48, 0], sizes = [24, 24], strides = [1, 1]} : vector<96x24xf32> to vector<24x24xf32>
    %c1_262 = arith.constant 1 : index
    %c0_263 = arith.constant 0 : index
    %c0_264 = arith.constant 0 : index
    %358 = vector.load %arg9[%c1_262, %c0_263, %c0_264] : memref<4x24x24xf32, #tpu.memory_space<vmem>>, vector<1x24x24xf32>
    %359 = vector.shape_cast %358 : vector<1x24x24xf32> to vector<24x24xf32>
    %cst_265 = arith.constant dense<0.000000e+00> : vector<24x24xf32>
    %360 = tpu.matmul %351, %359, %cst_265 {dimension_numbers = #tpu.dot_dimension_numbers<[1], [0], [0], [1], [0, 0, 1, 1], [], []>} : vector<24x24xf32>, vector<24x24xf32>, vector<24x24xf32> -> vector<24x24xf32>
    %361 = arith.addf %357, %360 : vector<24x24xf32>
    %362 = vector.extract_strided_slice %301 {offsets = [48, 0], sizes = [24, 24], strides = [1, 1]} : vector<96x24xf32> to vector<24x24xf32>
    %c2_266 = arith.constant 2 : index
    %c0_267 = arith.constant 0 : index
    %c0_268 = arith.constant 0 : index
    %363 = vector.load %arg9[%c2_266, %c0_267, %c0_268] : memref<4x24x24xf32, #tpu.memory_space<vmem>>, vector<1x24x24xf32>
    %364 = vector.shape_cast %363 : vector<1x24x24xf32> to vector<24x24xf32>
    %cst_269 = arith.constant dense<0.000000e+00> : vector<24x24xf32>
    %365 = tpu.matmul %351, %364, %cst_269 {dimension_numbers = #tpu.dot_dimension_numbers<[1], [0], [0], [1], [0, 0, 1, 1], [], []>} : vector<24x24xf32>, vector<24x24xf32>, vector<24x24xf32> -> vector<24x24xf32>
    %366 = arith.addf %362, %365 : vector<24x24xf32>
    %367 = vector.extract_strided_slice %308 {offsets = [48, 0], sizes = [24, 24], strides = [1, 1]} : vector<96x24xf32> to vector<24x24xf32>
    %c3_270 = arith.constant 3 : index
    %c0_271 = arith.constant 0 : index
    %c0_272 = arith.constant 0 : index
    %368 = vector.load %arg9[%c3_270, %c0_271, %c0_272] : memref<4x24x24xf32, #tpu.memory_space<vmem>>, vector<1x24x24xf32>
    %369 = vector.shape_cast %368 : vector<1x24x24xf32> to vector<24x24xf32>
    %cst_273 = arith.constant dense<0.000000e+00> : vector<24x24xf32>
    %370 = tpu.matmul %351, %369, %cst_273 {dimension_numbers = #tpu.dot_dimension_numbers<[1], [0], [0], [1], [0, 0, 1, 1], [], []>} : vector<24x24xf32>, vector<24x24xf32>, vector<24x24xf32> -> vector<24x24xf32>
    %371 = arith.addf %367, %370 : vector<24x24xf32>
    %372 = arith.negf %361 : vector<24x24xf32>
    %373 = math.exp %372 : vector<24x24xf32>
    %cst_274 = arith.constant 1.000000e+00 : f32
    %374 = vector.broadcast %cst_274 : f32 to vector<24x24xf32>
    %375 = arith.addf %374, %373 : vector<24x24xf32>
    %376 = arith.divf %374, %375 : vector<24x24xf32>
    %377 = arith.mulf %376, %344 : vector<24x24xf32>
    %378 = arith.negf %356 : vector<24x24xf32>
    %379 = math.exp %378 : vector<24x24xf32>
    %cst_275 = arith.constant 1.000000e+00 : f32
    %380 = vector.broadcast %cst_275 : f32 to vector<24x24xf32>
    %381 = arith.addf %380, %379 : vector<24x24xf32>
    %382 = arith.divf %380, %381 : vector<24x24xf32>
    %383 = math.tanh %366 : vector<24x24xf32>
    %384 = arith.mulf %382, %383 : vector<24x24xf32>
    %385 = arith.addf %377, %384 : vector<24x24xf32>
    %386 = arith.negf %371 : vector<24x24xf32>
    %387 = math.exp %386 : vector<24x24xf32>
    %cst_276 = arith.constant 1.000000e+00 : f32
    %388 = vector.broadcast %cst_276 : f32 to vector<24x24xf32>
    %389 = arith.addf %388, %387 : vector<24x24xf32>
    %390 = arith.divf %388, %389 : vector<24x24xf32>
    %391 = math.tanh %385 : vector<24x24xf32>
    %392 = arith.mulf %390, %391 : vector<24x24xf32>
    %393 = vector.extract_strided_slice %287 {offsets = [24, 0], sizes = [24, 24], strides = [1, 1]} : vector<96x24xf32> to vector<24x24xf32>
    %c0_277 = arith.constant 0 : index
    %c0_278 = arith.constant 0 : index
    %c0_279 = arith.constant 0 : index
    %394 = vector.load %arg9[%c0_277, %c0_278, %c0_279] : memref<4x24x24xf32, #tpu.memory_space<vmem>>, vector<1x24x24xf32>
    %395 = vector.shape_cast %394 : vector<1x24x24xf32> to vector<24x24xf32>
    %cst_280 = arith.constant dense<0.000000e+00> : vector<24x24xf32>
    %396 = tpu.matmul %392, %395, %cst_280 {dimension_numbers = #tpu.dot_dimension_numbers<[1], [0], [0], [1], [0, 0, 1, 1], [], []>} : vector<24x24xf32>, vector<24x24xf32>, vector<24x24xf32> -> vector<24x24xf32>
    %397 = arith.addf %393, %396 : vector<24x24xf32>
    %398 = vector.extract_strided_slice %294 {offsets = [24, 0], sizes = [24, 24], strides = [1, 1]} : vector<96x24xf32> to vector<24x24xf32>
    %c1_281 = arith.constant 1 : index
    %c0_282 = arith.constant 0 : index
    %c0_283 = arith.constant 0 : index
    %399 = vector.load %arg9[%c1_281, %c0_282, %c0_283] : memref<4x24x24xf32, #tpu.memory_space<vmem>>, vector<1x24x24xf32>
    %400 = vector.shape_cast %399 : vector<1x24x24xf32> to vector<24x24xf32>
    %cst_284 = arith.constant dense<0.000000e+00> : vector<24x24xf32>
    %401 = tpu.matmul %392, %400, %cst_284 {dimension_numbers = #tpu.dot_dimension_numbers<[1], [0], [0], [1], [0, 0, 1, 1], [], []>} : vector<24x24xf32>, vector<24x24xf32>, vector<24x24xf32> -> vector<24x24xf32>
    %402 = arith.addf %398, %401 : vector<24x24xf32>
    %403 = vector.extract_strided_slice %301 {offsets = [24, 0], sizes = [24, 24], strides = [1, 1]} : vector<96x24xf32> to vector<24x24xf32>
    %c2_285 = arith.constant 2 : index
    %c0_286 = arith.constant 0 : index
    %c0_287 = arith.constant 0 : index
    %404 = vector.load %arg9[%c2_285, %c0_286, %c0_287] : memref<4x24x24xf32, #tpu.memory_space<vmem>>, vector<1x24x24xf32>
    %405 = vector.shape_cast %404 : vector<1x24x24xf32> to vector<24x24xf32>
    %cst_288 = arith.constant dense<0.000000e+00> : vector<24x24xf32>
    %406 = tpu.matmul %392, %405, %cst_288 {dimension_numbers = #tpu.dot_dimension_numbers<[1], [0], [0], [1], [0, 0, 1, 1], [], []>} : vector<24x24xf32>, vector<24x24xf32>, vector<24x24xf32> -> vector<24x24xf32>
    %407 = arith.addf %403, %406 : vector<24x24xf32>
    %408 = vector.extract_strided_slice %308 {offsets = [24, 0], sizes = [24, 24], strides = [1, 1]} : vector<96x24xf32> to vector<24x24xf32>
    %c3_289 = arith.constant 3 : index
    %c0_290 = arith.constant 0 : index
    %c0_291 = arith.constant 0 : index
    %409 = vector.load %arg9[%c3_289, %c0_290, %c0_291] : memref<4x24x24xf32, #tpu.memory_space<vmem>>, vector<1x24x24xf32>
    %410 = vector.shape_cast %409 : vector<1x24x24xf32> to vector<24x24xf32>
    %cst_292 = arith.constant dense<0.000000e+00> : vector<24x24xf32>
    %411 = tpu.matmul %392, %410, %cst_292 {dimension_numbers = #tpu.dot_dimension_numbers<[1], [0], [0], [1], [0, 0, 1, 1], [], []>} : vector<24x24xf32>, vector<24x24xf32>, vector<24x24xf32> -> vector<24x24xf32>
    %412 = arith.addf %408, %411 : vector<24x24xf32>
    %413 = arith.negf %402 : vector<24x24xf32>
    %414 = math.exp %413 : vector<24x24xf32>
    %cst_293 = arith.constant 1.000000e+00 : f32
    %415 = vector.broadcast %cst_293 : f32 to vector<24x24xf32>
    %416 = arith.addf %415, %414 : vector<24x24xf32>
    %417 = arith.divf %415, %416 : vector<24x24xf32>
    %418 = arith.mulf %417, %385 : vector<24x24xf32>
    %419 = arith.negf %397 : vector<24x24xf32>
    %420 = math.exp %419 : vector<24x24xf32>
    %cst_294 = arith.constant 1.000000e+00 : f32
    %421 = vector.broadcast %cst_294 : f32 to vector<24x24xf32>
    %422 = arith.addf %421, %420 : vector<24x24xf32>
    %423 = arith.divf %421, %422 : vector<24x24xf32>
    %424 = math.tanh %407 : vector<24x24xf32>
    %425 = arith.mulf %423, %424 : vector<24x24xf32>
    %426 = arith.addf %418, %425 : vector<24x24xf32>
    %427 = arith.negf %412 : vector<24x24xf32>
    %428 = math.exp %427 : vector<24x24xf32>
    %cst_295 = arith.constant 1.000000e+00 : f32
    %429 = vector.broadcast %cst_295 : f32 to vector<24x24xf32>
    %430 = arith.addf %429, %428 : vector<24x24xf32>
    %431 = arith.divf %429, %430 : vector<24x24xf32>
    %432 = math.tanh %426 : vector<24x24xf32>
    %433 = arith.mulf %431, %432 : vector<24x24xf32>
    %434 = vector.extract_strided_slice %287 {offsets = [0, 0], sizes = [24, 24], strides = [1, 1]} : vector<96x24xf32> to vector<24x24xf32>
    %c0_296 = arith.constant 0 : index
    %c0_297 = arith.constant 0 : index
    %c0_298 = arith.constant 0 : index
    %435 = vector.load %arg9[%c0_296, %c0_297, %c0_298] : memref<4x24x24xf32, #tpu.memory_space<vmem>>, vector<1x24x24xf32>
    %436 = vector.shape_cast %435 : vector<1x24x24xf32> to vector<24x24xf32>
    %cst_299 = arith.constant dense<0.000000e+00> : vector<24x24xf32>
    %437 = tpu.matmul %433, %436, %cst_299 {dimension_numbers = #tpu.dot_dimension_numbers<[1], [0], [0], [1], [0, 0, 1, 1], [], []>} : vector<24x24xf32>, vector<24x24xf32>, vector<24x24xf32> -> vector<24x24xf32>
    %438 = arith.addf %434, %437 : vector<24x24xf32>
    %439 = vector.extract_strided_slice %294 {offsets = [0, 0], sizes = [24, 24], strides = [1, 1]} : vector<96x24xf32> to vector<24x24xf32>
    %c1_300 = arith.constant 1 : index
    %c0_301 = arith.constant 0 : index
    %c0_302 = arith.constant 0 : index
    %440 = vector.load %arg9[%c1_300, %c0_301, %c0_302] : memref<4x24x24xf32, #tpu.memory_space<vmem>>, vector<1x24x24xf32>
    %441 = vector.shape_cast %440 : vector<1x24x24xf32> to vector<24x24xf32>
    %cst_303 = arith.constant dense<0.000000e+00> : vector<24x24xf32>
    %442 = tpu.matmul %433, %441, %cst_303 {dimension_numbers = #tpu.dot_dimension_numbers<[1], [0], [0], [1], [0, 0, 1, 1], [], []>} : vector<24x24xf32>, vector<24x24xf32>, vector<24x24xf32> -> vector<24x24xf32>
    %443 = arith.addf %439, %442 : vector<24x24xf32>
    %444 = vector.extract_strided_slice %301 {offsets = [0, 0], sizes = [24, 24], strides = [1, 1]} : vector<96x24xf32> to vector<24x24xf32>
    %c2_304 = arith.constant 2 : index
    %c0_305 = arith.constant 0 : index
    %c0_306 = arith.constant 0 : index
    %445 = vector.load %arg9[%c2_304, %c0_305, %c0_306] : memref<4x24x24xf32, #tpu.memory_space<vmem>>, vector<1x24x24xf32>
    %446 = vector.shape_cast %445 : vector<1x24x24xf32> to vector<24x24xf32>
    %cst_307 = arith.constant dense<0.000000e+00> : vector<24x24xf32>
    %447 = tpu.matmul %433, %446, %cst_307 {dimension_numbers = #tpu.dot_dimension_numbers<[1], [0], [0], [1], [0, 0, 1, 1], [], []>} : vector<24x24xf32>, vector<24x24xf32>, vector<24x24xf32> -> vector<24x24xf32>
    %448 = arith.addf %444, %447 : vector<24x24xf32>
    %449 = vector.extract_strided_slice %308 {offsets = [0, 0], sizes = [24, 24], strides = [1, 1]} : vector<96x24xf32> to vector<24x24xf32>
    %c3_308 = arith.constant 3 : index
    %c0_309 = arith.constant 0 : index
    %c0_310 = arith.constant 0 : index
    %450 = vector.load %arg9[%c3_308, %c0_309, %c0_310] : memref<4x24x24xf32, #tpu.memory_space<vmem>>, vector<1x24x24xf32>
    %451 = vector.shape_cast %450 : vector<1x24x24xf32> to vector<24x24xf32>
    %cst_311 = arith.constant dense<0.000000e+00> : vector<24x24xf32>
    %452 = tpu.matmul %433, %451, %cst_311 {dimension_numbers = #tpu.dot_dimension_numbers<[1], [0], [0], [1], [0, 0, 1, 1], [], []>} : vector<24x24xf32>, vector<24x24xf32>, vector<24x24xf32> -> vector<24x24xf32>
    %453 = arith.addf %449, %452 : vector<24x24xf32>
    %454 = arith.negf %443 : vector<24x24xf32>
    %455 = math.exp %454 : vector<24x24xf32>
    %cst_312 = arith.constant 1.000000e+00 : f32
    %456 = vector.broadcast %cst_312 : f32 to vector<24x24xf32>
    %457 = arith.addf %456, %455 : vector<24x24xf32>
    %458 = arith.divf %456, %457 : vector<24x24xf32>
    %459 = arith.mulf %458, %426 : vector<24x24xf32>
    %460 = arith.negf %438 : vector<24x24xf32>
    %461 = math.exp %460 : vector<24x24xf32>
    %cst_313 = arith.constant 1.000000e+00 : f32
    %462 = vector.broadcast %cst_313 : f32 to vector<24x24xf32>
    %463 = arith.addf %462, %461 : vector<24x24xf32>
    %464 = arith.divf %462, %463 : vector<24x24xf32>
    %465 = math.tanh %448 : vector<24x24xf32>
    %466 = arith.mulf %464, %465 : vector<24x24xf32>
    %467 = arith.addf %459, %466 : vector<24x24xf32>
    %468 = arith.negf %453 : vector<24x24xf32>
    %469 = math.exp %468 : vector<24x24xf32>
    %cst_314 = arith.constant 1.000000e+00 : f32
    %470 = vector.broadcast %cst_314 : f32 to vector<24x24xf32>
    %471 = arith.addf %470, %469 : vector<24x24xf32>
    %472 = arith.divf %470, %471 : vector<24x24xf32>
    %473 = math.tanh %467 : vector<24x24xf32>
    %474 = arith.mulf %472, %473 : vector<24x24xf32>
    %c0_315 = arith.constant 0 : index
    %c0_316 = arith.constant 0 : index
    %c0_317 = arith.constant 0 : index
    %475 = vector.load %arg11[%c0_315, %c0_316, %c0_317] : memref<2x24x1xf32, #tpu.memory_space<vmem>>, vector<1x24x1xf32>
    %476 = vector.shape_cast %475 : vector<1x24x1xf32> to vector<24x1xf32>
    %cst_318 = arith.constant dense<0.000000e+00> : vector<24x1xf32>
    %477 = tpu.matmul %157, %476, %cst_318 {dimension_numbers = #tpu.dot_dimension_numbers<[1], [0], [0], [1], [0, 0, 1, 1], [], []>} : vector<24x24xf32>, vector<24x1xf32>, vector<24x1xf32> -> vector<24x1xf32>
    %c1_319 = arith.constant 1 : index
    %c0_320 = arith.constant 0 : index
    %c0_321 = arith.constant 0 : index
    %478 = vector.load %arg11[%c1_319, %c0_320, %c0_321] : memref<2x24x1xf32, #tpu.memory_space<vmem>>, vector<1x24x1xf32>
    %479 = vector.shape_cast %478 : vector<1x24x1xf32> to vector<24x1xf32>
    %cst_322 = arith.constant dense<0.000000e+00> : vector<24x1xf32>
    %480 = tpu.matmul %474, %479, %cst_322 {dimension_numbers = #tpu.dot_dimension_numbers<[1], [0], [0], [1], [0, 0, 1, 1], [], []>} : vector<24x24xf32>, vector<24x1xf32>, vector<24x1xf32> -> vector<24x1xf32>
    %481 = arith.addf %477, %480 : vector<24x1xf32>
    %c0_323 = arith.constant 0 : index
    %c0_324 = arith.constant 0 : index
    %482 = vector.load %arg12[%c0_323, %c0_324] : memref<1x1xf32, #tpu.memory_space<vmem>>, vector<1x1xf32>
    %483 = vector.broadcast %482 : vector<1x1xf32> to vector<24x1xf32>
    %484 = arith.addf %481, %483 : vector<24x1xf32>
    %c0_325 = arith.constant 0 : index
    %c0_326 = arith.constant 0 : index
    %c0_327 = arith.constant 0 : index
    %485 = vector.load %arg11[%c0_325, %c0_326, %c0_327] : memref<2x24x1xf32, #tpu.memory_space<vmem>>, vector<1x24x1xf32>
    %486 = vector.shape_cast %485 : vector<1x24x1xf32> to vector<24x1xf32>
    %cst_328 = arith.constant dense<0.000000e+00> : vector<24x1xf32>
    %487 = tpu.matmul %198, %486, %cst_328 {dimension_numbers = #tpu.dot_dimension_numbers<[1], [0], [0], [1], [0, 0, 1, 1], [], []>} : vector<24x24xf32>, vector<24x1xf32>, vector<24x1xf32> -> vector<24x1xf32>
    %c1_329 = arith.constant 1 : index
    %c0_330 = arith.constant 0 : index
    %c0_331 = arith.constant 0 : index
    %488 = vector.load %arg11[%c1_329, %c0_330, %c0_331] : memref<2x24x1xf32, #tpu.memory_space<vmem>>, vector<1x24x1xf32>
    %489 = vector.shape_cast %488 : vector<1x24x1xf32> to vector<24x1xf32>
    %cst_332 = arith.constant dense<0.000000e+00> : vector<24x1xf32>
    %490 = tpu.matmul %433, %489, %cst_332 {dimension_numbers = #tpu.dot_dimension_numbers<[1], [0], [0], [1], [0, 0, 1, 1], [], []>} : vector<24x24xf32>, vector<24x1xf32>, vector<24x1xf32> -> vector<24x1xf32>
    %491 = arith.addf %487, %490 : vector<24x1xf32>
    %c0_333 = arith.constant 0 : index
    %c0_334 = arith.constant 0 : index
    %492 = vector.load %arg12[%c0_333, %c0_334] : memref<1x1xf32, #tpu.memory_space<vmem>>, vector<1x1xf32>
    %493 = vector.broadcast %492 : vector<1x1xf32> to vector<24x1xf32>
    %494 = arith.addf %491, %493 : vector<24x1xf32>
    %c0_335 = arith.constant 0 : index
    %c0_336 = arith.constant 0 : index
    %c0_337 = arith.constant 0 : index
    %495 = vector.load %arg11[%c0_335, %c0_336, %c0_337] : memref<2x24x1xf32, #tpu.memory_space<vmem>>, vector<1x24x1xf32>
    %496 = vector.shape_cast %495 : vector<1x24x1xf32> to vector<24x1xf32>
    %cst_338 = arith.constant dense<0.000000e+00> : vector<24x1xf32>
    %497 = tpu.matmul %239, %496, %cst_338 {dimension_numbers = #tpu.dot_dimension_numbers<[1], [0], [0], [1], [0, 0, 1, 1], [], []>} : vector<24x24xf32>, vector<24x1xf32>, vector<24x1xf32> -> vector<24x1xf32>
    %c1_339 = arith.constant 1 : index
    %c0_340 = arith.constant 0 : index
    %c0_341 = arith.constant 0 : index
    %498 = vector.load %arg11[%c1_339, %c0_340, %c0_341] : memref<2x24x1xf32, #tpu.memory_space<vmem>>, vector<1x24x1xf32>
    %499 = vector.shape_cast %498 : vector<1x24x1xf32> to vector<24x1xf32>
    %cst_342 = arith.constant dense<0.000000e+00> : vector<24x1xf32>
    %500 = tpu.matmul %392, %499, %cst_342 {dimension_numbers = #tpu.dot_dimension_numbers<[1], [0], [0], [1], [0, 0, 1, 1], [], []>} : vector<24x24xf32>, vector<24x1xf32>, vector<24x1xf32> -> vector<24x1xf32>
    %501 = arith.addf %497, %500 : vector<24x1xf32>
    %c0_343 = arith.constant 0 : index
    %c0_344 = arith.constant 0 : index
    %502 = vector.load %arg12[%c0_343, %c0_344] : memref<1x1xf32, #tpu.memory_space<vmem>>, vector<1x1xf32>
    %503 = vector.broadcast %502 : vector<1x1xf32> to vector<24x1xf32>
    %504 = arith.addf %501, %503 : vector<24x1xf32>
    %c0_345 = arith.constant 0 : index
    %c0_346 = arith.constant 0 : index
    %c0_347 = arith.constant 0 : index
    %505 = vector.load %arg11[%c0_345, %c0_346, %c0_347] : memref<2x24x1xf32, #tpu.memory_space<vmem>>, vector<1x24x1xf32>
    %506 = vector.shape_cast %505 : vector<1x24x1xf32> to vector<24x1xf32>
    %cst_348 = arith.constant dense<0.000000e+00> : vector<24x1xf32>
    %507 = tpu.matmul %280, %506, %cst_348 {dimension_numbers = #tpu.dot_dimension_numbers<[1], [0], [0], [1], [0, 0, 1, 1], [], []>} : vector<24x24xf32>, vector<24x1xf32>, vector<24x1xf32> -> vector<24x1xf32>
    %c1_349 = arith.constant 1 : index
    %c0_350 = arith.constant 0 : index
    %c0_351 = arith.constant 0 : index
    %508 = vector.load %arg11[%c1_349, %c0_350, %c0_351] : memref<2x24x1xf32, #tpu.memory_space<vmem>>, vector<1x24x1xf32>
    %509 = vector.shape_cast %508 : vector<1x24x1xf32> to vector<24x1xf32>
    %cst_352 = arith.constant dense<0.000000e+00> : vector<24x1xf32>
    %510 = tpu.matmul %351, %509, %cst_352 {dimension_numbers = #tpu.dot_dimension_numbers<[1], [0], [0], [1], [0, 0, 1, 1], [], []>} : vector<24x24xf32>, vector<24x1xf32>, vector<24x1xf32> -> vector<24x1xf32>
    %511 = arith.addf %507, %510 : vector<24x1xf32>
    %c0_353 = arith.constant 0 : index
    %c0_354 = arith.constant 0 : index
    %512 = vector.load %arg12[%c0_353, %c0_354] : memref<1x1xf32, #tpu.memory_space<vmem>>, vector<1x1xf32>
    %513 = vector.broadcast %512 : vector<1x1xf32> to vector<24x1xf32>
    %514 = arith.addf %511, %513 : vector<24x1xf32>
    %515 = arith.maximumf %484, %494 : vector<24x1xf32>
    %516 = arith.maximumf %515, %504 : vector<24x1xf32>
    %517 = arith.maximumf %516, %514 : vector<24x1xf32>
    %518 = arith.subf %484, %517 : vector<24x1xf32>
    %519 = math.exp %518 : vector<24x1xf32>
    %520 = arith.subf %494, %517 : vector<24x1xf32>
    %521 = math.exp %520 : vector<24x1xf32>
    %522 = arith.subf %504, %517 : vector<24x1xf32>
    %523 = math.exp %522 : vector<24x1xf32>
    %524 = arith.subf %514, %517 : vector<24x1xf32>
    %525 = math.exp %524 : vector<24x1xf32>
    %526 = arith.addf %519, %521 : vector<24x1xf32>
    %527 = arith.addf %526, %523 : vector<24x1xf32>
    %528 = arith.addf %527, %525 : vector<24x1xf32>
    %529 = tpu.reciprocal %528 {approx = true} : vector<24x1xf32> -> vector<24x1xf32>
    %530 = arith.mulf %519, %529 : vector<24x1xf32>
    %531 = vector.broadcast %530 : vector<24x1xf32> to vector<24x16xf32>
    %532 = arith.mulf %0, %531 : vector<24x16xf32>
    %533 = arith.mulf %521, %529 : vector<24x1xf32>
    %534 = vector.broadcast %533 : vector<24x1xf32> to vector<24x16xf32>
    %535 = arith.mulf %29, %534 : vector<24x16xf32>
    %536 = arith.addf %532, %535 : vector<24x16xf32>
    %537 = arith.mulf %523, %529 : vector<24x1xf32>
    %538 = vector.broadcast %537 : vector<24x1xf32> to vector<24x16xf32>
    %539 = arith.mulf %58, %538 : vector<24x16xf32>
    %540 = arith.addf %536, %539 : vector<24x16xf32>
    %541 = arith.mulf %525, %529 : vector<24x1xf32>
    %542 = vector.broadcast %541 : vector<24x1xf32> to vector<24x16xf32>
    %543 = arith.mulf %85, %542 : vector<24x16xf32>
    %544 = arith.addf %540, %543 : vector<24x16xf32>
    %c0_355 = arith.constant 0 : index
    %c0_356 = arith.constant 0 : index
    %c0_357 = arith.constant 0 : index
    %545 = vector.load %arg13[%c0_355, %c0_356, %c0_357] : memref<2x24x1xf32, #tpu.memory_space<vmem>>, vector<2x24x1xf32>
    %546 = vector.shape_cast %544 : vector<24x16xf32> to vector<1x24x16xf32>
    %547 = vector.broadcast %545 : vector<2x24x1xf32> to vector<2x24x16xf32>
    %548 = vector.broadcast %546 : vector<1x24x16xf32> to vector<2x24x16xf32>
    %549 = arith.mulf %547, %548 : vector<2x24x16xf32>
    %cst_358 = arith.constant dense<0.000000e+00> : vector<2x16xf32>
    %550 = vector.multi_reduction <add>, %549, %cst_358 [1] : vector<2x24x16xf32> to vector<2x16xf32>
    %c0_359 = arith.constant 0 : index
    %c0_360 = arith.constant 0 : index
    %551 = vector.load %arg14[%c0_359, %c0_360] : memref<16x32xf32, #tpu.memory_space<vmem>>, vector<16x32xf32>
    %cst_361 = arith.constant dense<0.000000e+00> : vector<2x32xf32>
    %552 = tpu.matmul %550, %551, %cst_361 {dimension_numbers = #tpu.dot_dimension_numbers<[1], [0], [0], [1], [0, 0, 1, 1], [], []>} : vector<2x16xf32>, vector<16x32xf32>, vector<2x32xf32> -> vector<2x32xf32>
    %c0_362 = arith.constant 0 : index
    %c0_363 = arith.constant 0 : index
    %553 = vector.load %arg15[%c0_362, %c0_363] : memref<1x32xf32, #tpu.memory_space<vmem>>, vector<1x32xf32>
    %554 = vector.broadcast %553 : vector<1x32xf32> to vector<2x32xf32>
    %555 = arith.addf %552, %554 : vector<2x32xf32>
    %cst_364 = arith.constant 0.000000e+00 : f32
    %556 = vector.broadcast %cst_364 : f32 to vector<2x32xf32>
    %557 = arith.maximumf %555, %556 : vector<2x32xf32>
    %c0_365 = arith.constant 0 : index
    %c0_366 = arith.constant 0 : index
    %558 = vector.load %arg16[%c0_365, %c0_366] : memref<32x128xf32, #tpu.memory_space<vmem>>, vector<32x128xf32>
    %cst_367 = arith.constant dense<0.000000e+00> : vector<2x128xf32>
    %559 = tpu.matmul %557, %558, %cst_367 {dimension_numbers = #tpu.dot_dimension_numbers<[1], [0], [0], [1], [0, 0, 1, 1], [], []>} : vector<2x32xf32>, vector<32x128xf32>, vector<2x128xf32> -> vector<2x128xf32>
    %c0_368 = arith.constant 0 : index
    %c0_369 = arith.constant 0 : index
    %560 = vector.load %arg17[%c0_368, %c0_369] : memref<1x128xf32, #tpu.memory_space<vmem>>, vector<1x128xf32>
    %561 = vector.broadcast %560 : vector<1x128xf32> to vector<2x128xf32>
    %562 = arith.addf %559, %561 : vector<2x128xf32>
    %563 = tpu.iota {dimensions = array<i32: 1>} : vector<2x128xi32>
    %c8_i32 = arith.constant 8 : i32
    %564 = vector.broadcast %c8_i32 : i32 to vector<2x128xi32>
    %565 = arith.cmpi slt, %563, %564 : vector<2x128xi32>
    %cst_370 = arith.constant dense<0.000000e+00> : vector<2xf32>
    %566 = vector.multi_reduction <add>, %562, %cst_370 [1] : vector<2x128xf32> to vector<2xf32>
    %567 = vector.shape_cast %566 : vector<2xf32> to vector<2x1xf32>
    %cst_371 = arith.constant 1.250000e-01 : f32
    %568 = vector.broadcast %cst_371 : f32 to vector<2x1xf32>
    %569 = arith.mulf %567, %568 : vector<2x1xf32>
    %570 = vector.broadcast %569 : vector<2x1xf32> to vector<2x128xf32>
    %571 = arith.subf %562, %570 : vector<2x128xf32>
    %cst_372 = arith.constant 0.000000e+00 : f32
    %572 = vector.broadcast %cst_372 : f32 to vector<2x128xf32>
    %573 = arith.select %565, %571, %572 : vector<2x128xi1>, vector<2x128xf32>
    %574 = arith.mulf %573, %573 : vector<2x128xf32>
    %cst_373 = arith.constant dense<0.000000e+00> : vector<2xf32>
    %575 = vector.multi_reduction <add>, %574, %cst_373 [1] : vector<2x128xf32> to vector<2xf32>
    %576 = vector.shape_cast %575 : vector<2xf32> to vector<2x1xf32>
    %cst_374 = arith.constant 1.250000e-01 : f32
    %577 = vector.broadcast %cst_374 : f32 to vector<2x1xf32>
    %578 = arith.mulf %576, %577 : vector<2x1xf32>
    %cst_375 = arith.constant 9.99999974E-6 : f32
    %579 = vector.broadcast %cst_375 : f32 to vector<2x1xf32>
    %580 = arith.addf %578, %579 : vector<2x1xf32>
    %581 = math.rsqrt %580 : vector<2x1xf32>
    %582 = vector.broadcast %581 : vector<2x1xf32> to vector<2x128xf32>
    %583 = arith.mulf %573, %582 : vector<2x128xf32>
    %c0_376 = arith.constant 0 : index
    %c0_377 = arith.constant 0 : index
    %584 = vector.load %arg18[%c0_376, %c0_377] : memref<1x128xf32, #tpu.memory_space<vmem>>, vector<1x128xf32>
    %585 = vector.broadcast %584 : vector<1x128xf32> to vector<2x128xf32>
    %586 = arith.mulf %583, %585 : vector<2x128xf32>
    %c0_378 = arith.constant 0 : index
    %c0_379 = arith.constant 0 : index
    %587 = vector.load %arg19[%c0_378, %c0_379] : memref<1x128xf32, #tpu.memory_space<vmem>>, vector<1x128xf32>
    %588 = vector.broadcast %587 : vector<1x128xf32> to vector<2x128xf32>
    %589 = arith.addf %586, %588 : vector<2x128xf32>
    %c0_380 = arith.constant 0 : index
    %c0_381 = arith.constant 0 : index
    %590 = vector.load %arg20[%c0_380, %c0_381] : memref<2x128xf32, #tpu.memory_space<vmem>>, vector<2x128xf32>
    tpu.vector_store %arg20[%c0_380, %c0_381], %589 {strides = array<i32>} : memref<2x128xf32, #tpu.memory_space<vmem>>, vector<2x128xf32>,
    return
  }
}

</mosaic_0001>

<llo_original>
// kernel: monet_forward.1
$region0: #{monet_forward.1}
  #allocation0 [shape = 'u32[]', space=smem, size = 0x4, offset = 0x4, fixed_abs, tag = 'smem constant byte address 0x4 - core index']
  #allocation1 [shape = 'u32[72,128]{1,0:T(1,128)}', space=vmem, size = 0x9000, scoped, tag = 'internal scratch']
  #allocation2 [shape = 'f32[1,1]{1,0:T(1,128)S(1)}', space=vmem, size = 0x200, scoped, tag = 'scoped memory for monet_forward.1']
  %s0 = inlined_call_operand.vmem [shape: f32[24,16], index: 0, kind: input, shape index: {}]
  %s1 = inlined_call_operand.vmem [shape: f32[3,5,16,16], index: 1, kind: input, shape index: {}]
  %s2 = inlined_call_operand.vmem [shape: f32[3,24,120], index: 2, kind: input, shape index: {}]
  %s3 = inlined_call_operand.vmem [shape: f32[3,1,16], index: 3, kind: input, shape index: {}]
  %s4 = inlined_call_operand.vmem [shape: f32[3,1,16], index: 4, kind: input, shape index: {}]
  %s5 = inlined_call_operand.vmem [shape: f32[4,16,24], index: 5, kind: input, shape index: {}]
  %s6 = inlined_call_operand.vmem [shape: f32[4,24,24], index: 6, kind: input, shape index: {}]
  %s7 = inlined_call_operand.vmem [shape: f32[4,1,24], index: 7, kind: input, shape index: {}]
  %s8 = inlined_call_operand.vmem [shape: f32[4,16,24], index: 8, kind: input, shape index: {}]
  %s9 = inlined_call_operand.vmem [shape: f32[4,24,24], index: 9, kind: input, shape index: {}]
  %s10 = inlined_call_operand.vmem [shape: f32[4,1,24], index: 10, kind: input, shape index: {}]
  %s11 = inlined_call_operand.vmem [shape: f32[2,24,1], index: 11, kind: input, shape index: {}]
  %s12 = inlined_call_operand.<no memory space> [shape: f32[1,1], index: 12, kind: input, shape index: {}]
  %s13 = inlined_call_operand.vmem [shape: f32[2,24,1], index: 13, kind: input, shape index: {}]
  %s14 = inlined_call_operand.vmem [shape: f32[16,32], index: 14, kind: input, shape index: {}]
  %s15 = inlined_call_operand.vmem [shape: f32[1,32], index: 15, kind: input, shape index: {}]
  %s16 = inlined_call_operand.vmem [shape: f32[32,128], index: 16, kind: input, shape index: {}]
  %s17 = inlined_call_operand.vmem [shape: f32[1,128], index: 17, kind: input, shape index: {}]
  %s18 = inlined_call_operand.vmem [shape: f32[1,128], index: 18, kind: input, shape index: {}]
  %s19 = inlined_call_operand.vmem [shape: f32[1,128], index: 19, kind: input, shape index: {}]
  %s20 = inlined_call_operand.hbm [shape: f32[2,128], index: 20, kind: output, shape index: {}]
  %s21 = sld [smem:[#allocation0]]
  $region90: #{monet_forward.1} parent=0
    _
  %s23 = ssub.s32 1, %s21
  %s24 = scalar_select 0, %s23, %s21
  %v25 = vstv %s12
  %26 = vst [vmem:[#allocation2] sm:$0x1] %v25
  $region1: #{monet_forward.1} parent=0
    #allocation3 [shape = 'u8[1024]{0}', space=vmem, size = 0x400, scoped, tag = 'output window, operand 0, single buffered']
    #allocation4 [shape = 's32[1]{0}', space=sflag, size = 0x4, scoped, tag = 'scoped memory for monet_forward.1']
    %27 = vsyncpa [#allocation4], 0
    // Predicated region
    $region2: #{monet_forward.1} parent=1 // pred_check
      _
    $region3: #{monet_forward.1} parent=1 // pred_check_branch
      %29 = sbr.rel (0) target = $region5
    $region4: #{monet_forward.1} parent=1 // pred_region
      _
    $region5: #{monet_forward.1} parent=1 // pred_fallthru
      _
    // Predicated region
    $region6: #{monet_forward.1} parent=1 // pred_check
      _
    $region7: #{monet_forward.1} parent=1 // pred_check_branch
      %31 = sbr.rel (0) target = $region9
    $region8: #{monet_forward.1} parent=1 // pred_region
      _
    $region9: #{monet_forward.1} parent=1 // pred_fallthru
      _
    // Predicated region
    $region10: #{monet_forward.1} parent=1 // pred_check
      _
    $region11: #{monet_forward.1} parent=1 // pred_check_branch
      %33 = sbr.rel (0) target = $region13
    $region12: #{monet_forward.1} parent=1 // pred_region
      _
    $region13: #{monet_forward.1} parent=1 // pred_fallthru
      _
    // Predicated region
    $region14: #{monet_forward.1} parent=1 // pred_check
      _
    $region15: #{monet_forward.1} parent=1 // pred_check_branch
      %35 = sbr.rel (0) target = $region17
    $region16: #{monet_forward.1} parent=1 // pred_region
      _
    $region17: #{monet_forward.1} parent=1 // pred_fallthru
      _
    // Predicated region
    $region18: #{monet_forward.1} parent=1 // pred_check
      _
    $region19: #{monet_forward.1} parent=1 // pred_check_branch
      %37 = sbr.rel (0) target = $region21
    $region20: #{monet_forward.1} parent=1 // pred_region
      _
    $region21: #{monet_forward.1} parent=1 // pred_fallthru
      _
    // Predicated region
    $region22: #{monet_forward.1} parent=1 // pred_check
      _
    $region23: #{monet_forward.1} parent=1 // pred_check_branch
      %39 = sbr.rel (0) target = $region25
    $region24: #{monet_forward.1} parent=1 // pred_region
      _
    $region25: #{monet_forward.1} parent=1 // pred_fallthru
      _
    // Predicated region
    $region26: #{monet_forward.1} parent=1 // pred_check
      _
    $region27: #{monet_forward.1} parent=1 // pred_check_branch
      %41 = sbr.rel (0) target = $region29
    $region28: #{monet_forward.1} parent=1 // pred_region
      _
    $region29: #{monet_forward.1} parent=1 // pred_fallthru
      _
    // Predicated region
    $region30: #{monet_forward.1} parent=1 // pred_check
      _
    $region31: #{monet_forward.1} parent=1 // pred_check_branch
      %43 = sbr.rel (0) target = $region33
    $region32: #{monet_forward.1} parent=1 // pred_region
      _
    $region33: #{monet_forward.1} parent=1 // pred_fallthru
      _
    // Predicated region
    $region34: #{monet_forward.1} parent=1 // pred_check
      _
    $region35: #{monet_forward.1} parent=1 // pred_check_branch
      %45 = sbr.rel (0) target = $region37
    $region36: #{monet_forward.1} parent=1 // pred_region
      _
    $region37: #{monet_forward.1} parent=1 // pred_fallthru
      _
    // Predicated region
    $region38: #{monet_forward.1} parent=1 // pred_check
      _
    $region39: #{monet_forward.1} parent=1 // pred_check_branch
      %47 = sbr.rel (0) target = $region41
    $region40: #{monet_forward.1} parent=1 // pred_region
      _
    $region41: #{monet_forward.1} parent=1 // pred_fallthru
      _
    // Predicated region
    $region42: #{monet_forward.1} parent=1 // pred_check
      _
    $region43: #{monet_forward.1} parent=1 // pred_check_branch
      %49 = sbr.rel (0) target = $region45
    $region44: #{monet_forward.1} parent=1 // pred_region
      _
    $region45: #{monet_forward.1} parent=1 // pred_fallthru
      _
    // Predicated region
    $region46: #{monet_forward.1} parent=1 // pred_check
      _
    $region47: #{monet_forward.1} parent=1 // pred_check_branch
      %51 = sbr.rel (0) target = $region49
    $region48: #{monet_forward.1} parent=1 // pred_region
      _
    $region49: #{monet_forward.1} parent=1 // pred_fallthru
      _
    // Predicated region
    $region50: #{monet_forward.1} parent=1 // pred_check
      _
    $region51: #{monet_forward.1} parent=1 // pred_check_branch
      %53 = sbr.rel (0) target = $region53
    $region52: #{monet_forward.1} parent=1 // pred_region
      _
    $region53: #{monet_forward.1} parent=1 // pred_fallthru
      _
    // Predicated region
    $region54: #{monet_forward.1} parent=1 // pred_check
      _
    $region55: #{monet_forward.1} parent=1 // pred_check_branch
      %55 = sbr.rel (0) target = $region57
    $region56: #{monet_forward.1} parent=1 // pred_region
      _
    $region57: #{monet_forward.1} parent=1 // pred_fallthru
      _
    // Predicated region
    $region58: #{monet_forward.1} parent=1 // pred_check
      _
    $region59: #{monet_forward.1} parent=1 // pred_check_branch
      %57 = sbr.rel (0) target = $region61
    $region60: #{monet_forward.1} parent=1 // pred_region
      _
    $region61: #{monet_forward.1} parent=1 // pred_fallthru
      _
    // Predicated region
    $region62: #{monet_forward.1} parent=1 // pred_check
      _
    $region63: #{monet_forward.1} parent=1 // pred_check_branch
      %59 = sbr.rel (0) target = $region65
    $region64: #{monet_forward.1} parent=1 // pred_region
      _
    $region65: #{monet_forward.1} parent=1 // pred_fallthru
      _
    // Predicated region
    $region66: #{monet_forward.1} parent=1 // pred_check
      _
    $region67: #{monet_forward.1} parent=1 // pred_check_branch
      %61 = sbr.rel (0) target = $region69
    $region68: #{monet_forward.1} parent=1 // pred_region
      _
    $region69: #{monet_forward.1} parent=1 // pred_fallthru
      _
    // Predicated region
    $region70: #{monet_forward.1} parent=1 // pred_check
      _
    $region71: #{monet_forward.1} parent=1 // pred_check_branch
      %63 = sbr.rel (0) target = $region73
    $region72: #{monet_forward.1} parent=1 // pred_region
      _
    $region73: #{monet_forward.1} parent=1 // pred_fallthru
      _
    // Predicated region
    $region74: #{monet_forward.1} parent=1 // pred_check
      _
    $region75: #{monet_forward.1} parent=1 // pred_check_branch
      %65 = sbr.rel (0) target = $region77
    $region76: #{monet_forward.1} parent=1 // pred_region
      _
    $region77: #{monet_forward.1} parent=1 // pred_fallthru
      _
    // Predicated region
    $region78: #{monet_forward.1} parent=1 // pred_check
      _
    $region79: #{monet_forward.1} parent=1 // pred_check_branch
      %67 = sbr.rel (0) target = $region81
    $region80: #{monet_forward.1} parent=1 // pred_region
      _
    $region81: #{monet_forward.1} parent=1 // pred_fallthru
      _
    %v68 = vld [vmem:[%s0] sm:$0xff]
    %v69 = vld [vmem:[%s0 + $0x8] sm:$0xff]
    %v70 = vld [vmem:[%s0 + $0x10] sm:$0xff]
    %v71 = vld [vmem:[%s1] sm:$0xff]
    %v72 = vld [vmem:[%s1 + $0x8] sm:$0xff]
    %vm73 = vcmask 130048
    %v75 = vsel %vm73, %v68, 0
    %v78 = vsel %vm73, %v69, 0
    %v81 = vsel %vm73, %v70, 0
    %83 = vmatpush.msra.mxu0 0.0
    %84 = vmatpush.msra.mxu0 0.0
    %85 = vmatpush.msra.mxu0 0.0
    %86 = vmatpush.msra.mxu0 0.0
    %87 = vmatpush.msra.mxu0 0.0
    %88 = vmatpush.msra.mxu0 0.0
    %89 = vmatpush.msra.mxu0 0.0
    %90 = vmatpush.msra.mxu0 0.0
    %91 = vmatpush.msra.mxu0 0.0
    %92 = vmatpush.msra.mxu0 0.0
    %93 = vmatpush.msra.mxu0 0.0
    %94 = vmatpush.msra.mxu0 0.0
    %95 = vmatpush.msra.mxu0 0.0
    %96 = vmatpush.msra.mxu0 0.0
    %97 = vmatpush.msra.mxu0 %v72
    %98 = vmatpush.msra.mxu0 %v71
    %99 = vmatmul.f32.gmra.mxu0 %v75
    %v100 = vpop.f32.mrf.mxu0
    %v101 = vadd.f32 0.0, %v100
    %102 = vmatmul.f32.gmra.mxu0 %v78
    %v103 = vpop.f32.mrf.mxu0
    %v104 = vadd.f32 0.0, %v103
    %105 = vmatmul.f32.gmra.mxu0 %v81
    %v106 = vpop.f32.mrf.mxu0
    %v107 = vadd.f32 0.0, %v106
    %108 = vdwg.mxu0
    %s109 = scalar_lea.vmem %s1, 16
    %v110 = vld [vmem:[%s109] sm:$0xff]
    %v111 = vld [vmem:[%s109 + $0x8] sm:$0xff]
    %112 = vmatpush.msra.mxu0 0.0
    %113 = vmatpush.msra.mxu0 0.0
    %114 = vmatpush.msra.mxu0 0.0
    %115 = vmatpush.msra.mxu0 0.0
    %116 = vmatpush.msra.mxu0 0.0
    %117 = vmatpush.msra.mxu0 0.0
    %118 = vmatpush.msra.mxu0 0.0
    %119 = vmatpush.msra.mxu0 0.0
    %120 = vmatpush.msra.mxu0 0.0
    %121 = vmatpush.msra.mxu0 0.0
    %122 = vmatpush.msra.mxu0 0.0
    %123 = vmatpush.msra.mxu0 0.0
    %124 = vmatpush.msra.mxu0 0.0
    %125 = vmatpush.msra.mxu0 0.0
    %126 = vmatpush.msra.mxu0 %v111
    %127 = vmatpush.msra.mxu0 %v110
    %128 = vmatmul.f32.gmra.mxu0 %v75
    %v129 = vpop.f32.mrf.mxu0
    %v130 = vadd.f32 0.0, %v129
    %131 = vmatmul.f32.gmra.mxu0 %v78
    %v132 = vpop.f32.mrf.mxu0
    %v133 = vadd.f32 0.0, %v132
    %134 = vmatmul.f32.gmra.mxu0 %v81
    %v135 = vpop.f32.mrf.mxu0
    %v136 = vadd.f32 0.0, %v135
    %137 = vdwg.mxu0
    %s138 = scalar_lea.vmem %s1, 32
    %v139 = vld [vmem:[%s138] sm:$0xff]
    %v140 = vld [vmem:[%s138 + $0x8] sm:$0xff]
    %141 = vmatpush.msra.mxu0 0.0
    %142 = vmatpush.msra.mxu0 0.0
    %143 = vmatpush.msra.mxu0 0.0
    %144 = vmatpush.msra.mxu0 0.0
    %145 = vmatpush.msra.mxu0 0.0
    %146 = vmatpush.msra.mxu0 0.0
    %147 = vmatpush.msra.mxu0 0.0
    %148 = vmatpush.msra.mxu0 0.0
    %149 = vmatpush.msra.mxu0 0.0
    %150 = vmatpush.msra.mxu0 0.0
    %151 = vmatpush.msra.mxu0 0.0
    %152 = vmatpush.msra.mxu0 0.0
    %153 = vmatpush.msra.mxu0 0.0
    %154 = vmatpush.msra.mxu0 0.0
    %155 = vmatpush.msra.mxu0 %v140
    %156 = vmatpush.msra.mxu0 %v139
    %157 = vmatmul.f32.gmra.mxu0 %v75
    %v158 = vpop.f32.mrf.mxu0
    %v159 = vadd.f32 0.0, %v158
    %160 = vmatmul.f32.gmra.mxu0 %v78
    %v161 = vpop.f32.mrf.mxu0
    %v162 = vadd.f32 0.0, %v161
    %163 = vmatmul.f32.gmra.mxu0 %v81
    %v164 = vpop.f32.mrf.mxu0
    %v165 = vadd.f32 0.0, %v164
    %166 = vdwg.mxu0
    %s167 = scalar_lea.vmem %s1, 48
    %v168 = vld [vmem:[%s167] sm:$0xff]
    %v169 = vld [vmem:[%s167 + $0x8] sm:$0xff]
    %170 = vmatpush.msra.mxu0 0.0
    %171 = vmatpush.msra.mxu0 0.0
    %172 = vmatpush.msra.mxu0 0.0
    %173 = vmatpush.msra.mxu0 0.0
    %174 = vmatpush.msra.mxu0 0.0
    %175 = vmatpush.msra.mxu0 0.0
    %176 = vmatpush.msra.mxu0 0.0
    %177 = vmatpush.msra.mxu0 0.0
    %178 = vmatpush.msra.mxu0 0.0
    %179 = vmatpush.msra.mxu0 0.0
    %180 = vmatpush.msra.mxu0 0.0
    %181 = vmatpush.msra.mxu0 0.0
    %182 = vmatpush.msra.mxu0 0.0
    %183 = vmatpush.msra.mxu0 0.0
    %184 = vmatpush.msra.mxu0 %v169
    %185 = vmatpush.msra.mxu0 %v168
    %186 = vmatmul.f32.gmra.mxu0 %v75
    %v187 = vpop.f32.mrf.mxu0
    %v188 = vadd.f32 0.0, %v187
    %189 = vmatmul.f32.gmra.mxu0 %v78
    %v190 = vpop.f32.mrf.mxu0
    %v191 = vadd.f32 0.0, %v190
    %192 = vmatmul.f32.gmra.mxu0 %v81
    %v193 = vpop.f32.mrf.mxu0
    %v194 = vadd.f32 0.0, %v193
    %195 = vdwg.mxu0
    %s196 = scalar_lea.vmem %s1, 64
    %v197 = vld [vmem:[%s196] sm:$0xff]
    %v198 = vld [vmem:[%s196 + $0x8] sm:$0xff]
    %199 = vmatpush.msra.mxu0 0.0
    %200 = vmatpush.msra.mxu0 0.0
    %201 = vmatpush.msra.mxu0 0.0
    %202 = vmatpush.msra.mxu0 0.0
    %203 = vmatpush.msra.mxu0 0.0
    %204 = vmatpush.msra.mxu0 0.0
    %205 = vmatpush.msra.mxu0 0.0
    %206 = vmatpush.msra.mxu0 0.0
    %207 = vmatpush.msra.mxu0 0.0
    %208 = vmatpush.msra.mxu0 0.0
    %209 = vmatpush.msra.mxu0 0.0
    %210 = vmatpush.msra.mxu0 0.0
    %211 = vmatpush.msra.mxu0 0.0
    %212 = vmatpush.msra.mxu0 0.0
    %213 = vmatpush.msra.mxu0 %v198
    %214 = vmatpush.msra.mxu0 %v197
    %215 = vmatmul.f32.gmra.mxu0 %v75
    %v216 = vpop.f32.mrf.mxu0
    %v217 = vadd.f32 0.0, %v216
    %218 = vmatmul.f32.gmra.mxu0 %v78
    %v219 = vpop.f32.mrf.mxu0
    %v220 = vadd.f32 0.0, %v219
    %221 = vmatmul.f32.gmra.mxu0 %v81
    %v222 = vpop.f32.mrf.mxu0
    %v223 = vadd.f32 0.0, %v222
    %224 = vdwg.mxu0
    %v225 = vld [vmem:[%s2] sm:$0xff]
    %v226 = vld [vmem:[%s2 + $0x8] sm:$0xff]
    %v227 = vld [vmem:[%s2 + $0x10] sm:$0xff]
    %vm228 = vcmask 982016
    %v230 = vsel %vm228, %v225, 0
    %v233 = vsel %vm228, %v226, 0
    %v236 = vsel %vm228, %v227, 0
    %238 = vmatpush.msra.mxu0 0.0
    %239 = vmatpush.msra.mxu0 %v223
    %240 = vmatpush.msra.mxu0 %v220
    %241 = vmatpush.msra.mxu0 %v217
    %242 = vmatpush.msra.mxu0 %v194
    %243 = vmatpush.msra.mxu0 %v191
    %244 = vmatpush.msra.mxu0 %v188
    %245 = vmatpush.msra.mxu0 %v165
    %246 = vmatpush.msra.mxu0 %v162
    %247 = vmatpush.msra.mxu0 %v159
    %248 = vmatpush.msra.mxu0 %v136
    %249 = vmatpush.msra.mxu0 %v133
    %250 = vmatpush.msra.mxu0 %v130
    %251 = vmatpush.msra.mxu0 %v107
    %252 = vmatpush.msra.mxu0 %v104
    %253 = vmatpush.msra.mxu0 %v101
    %254 = vmatmul.f32.gmra.mxu0 %v230
    %v255 = vpop.f32.mrf.mxu0
    %v256 = vadd.f32 0.0, %v255
    %257 = vmatmul.f32.gmra.mxu0 %v233
    %v258 = vpop.f32.mrf.mxu0
    %v259 = vadd.f32 0.0, %v258
    %260 = vmatmul.f32.gmra.mxu0 %v236
    %v261 = vpop.f32.mrf.mxu0
    %v262 = vadd.f32 0.0, %v261
    %263 = vdwg.mxu0
    %v264 = vld [vmem:[%s3] sm:$0x1]
    %v266 = vperm.slane %v264, 0
    %v268 = vmul.f32 %v256, %v266
    %v269 = vmul.f32 %v259, %v266
    %v270 = vmul.f32 %v262, %v266
    %v271 = vld [vmem:[%s4] sm:$0x1]
    %v273 = vperm.slane %v271, 0
    %v275 = vadd.f32 %v268, %v273
    %v276 = vadd.f32 %v269, %v273
    %v277 = vadd.f32 %v270, %v273
    %v278 = vmax.f32 %v275, 0.0
    %v279 = vmax.f32 %v276, 0.0
    %v280 = vmax.f32 %v277, 0.0
    %s281 = scalar_lea.vmem %s1, 80
    %v282 = vld [vmem:[%s281] sm:$0xff]
    %v283 = vld [vmem:[%s281 + $0x8] sm:$0xff]
    %v285 = vsel %vm73, %v278, 0
    %v288 = vsel %vm73, %v279, 0
    %v291 = vsel %vm73, %v280, 0
    %293 = vmatpush.msra.mxu0 0.0
    %294 = vmatpush.msra.mxu0 0.0
    %295 = vmatpush.msra.mxu0 0.0
    %296 = vmatpush.msra.mxu0 0.0
    %297 = vmatpush.msra.mxu0 0.0
    %298 = vmatpush.msra.mxu0 0.0
    %299 = vmatpush.msra.mxu0 0.0
    %300 = vmatpush.msra.mxu0 0.0
    %301 = vmatpush.msra.mxu0 0.0
    %302 = vmatpush.msra.mxu0 0.0
    %303 = vmatpush.msra.mxu0 0.0
    %304 = vmatpush.msra.mxu0 0.0
    %305 = vmatpush.msra.mxu0 0.0
    %306 = vmatpush.msra.mxu0 0.0
    %307 = vmatpush.msra.mxu0 %v283
    %308 = vmatpush.msra.mxu0 %v282
    %309 = vmatmul.f32.gmra.mxu0 %v285
    %v310 = vpop.f32.mrf.mxu0
    %v311 = vadd.f32 0.0, %v310
    %312 = vmatmul.f32.gmra.mxu0 %v288
    %v313 = vpop.f32.mrf.mxu0
    %v314 = vadd.f32 0.0, %v313
    %315 = vmatmul.f32.gmra.mxu0 %v291
    %v316 = vpop.f32.mrf.mxu0
    %v317 = vadd.f32 0.0, %v316
    %318 = vdwg.mxu0
    %s319 = scalar_lea.vmem %s1, 96
    %v320 = vld [vmem:[%s319] sm:$0xff]
    %v321 = vld [vmem:[%s319 + $0x8] sm:$0xff]
    %322 = vmatpush.msra.mxu0 0.0
    %323 = vmatpush.msra.mxu0 0.0
    %324 = vmatpush.msra.mxu0 0.0
    %325 = vmatpush.msra.mxu0 0.0
    %326 = vmatpush.msra.mxu0 0.0
    %327 = vmatpush.msra.mxu0 0.0
    %328 = vmatpush.msra.mxu0 0.0
    %329 = vmatpush.msra.mxu0 0.0
    %330 = vmatpush.msra.mxu0 0.0
    %331 = vmatpush.msra.mxu0 0.0
    %332 = vmatpush.msra.mxu0 0.0
    %333 = vmatpush.msra.mxu0 0.0
    %334 = vmatpush.msra.mxu0 0.0
    %335 = vmatpush.msra.mxu0 0.0
    %336 = vmatpush.msra.mxu0 %v321
    %337 = vmatpush.msra.mxu0 %v320
    %338 = vmatmul.f32.gmra.mxu0 %v285
    %v339 = vpop.f32.mrf.mxu0
    %v340 = vadd.f32 0.0, %v339
    %341 = vmatmul.f32.gmra.mxu0 %v288
    %v342 = vpop.f32.mrf.mxu0
    %v343 = vadd.f32 0.0, %v342
    %344 = vmatmul.f32.gmra.mxu0 %v291
    %v345 = vpop.f32.mrf.mxu0
    %v346 = vadd.f32 0.0, %v345
    %347 = vdwg.mxu0
    %s348 = scalar_lea.vmem %s1, 112
    %v349 = vld [vmem:[%s348] sm:$0xff]
    %v350 = vld [vmem:[%s348 + $0x8] sm:$0xff]
    %351 = vmatpush.msra.mxu0 0.0
    %352 = vmatpush.msra.mxu0 0.0
    %353 = vmatpush.msra.mxu0 0.0
    %354 = vmatpush.msra.mxu0 0.0
    %355 = vmatpush.msra.mxu0 0.0
    %356 = vmatpush.msra.mxu0 0.0
    %357 = vmatpush.msra.mxu0 0.0
    %358 = vmatpush.msra.mxu0 0.0
    %359 = vmatpush.msra.mxu0 0.0
    %360 = vmatpush.msra.mxu0 0.0
    %361 = vmatpush.msra.mxu0 0.0
    %362 = vmatpush.msra.mxu0 0.0
    %363 = vmatpush.msra.mxu0 0.0
    %364 = vmatpush.msra.mxu0 0.0
    %365 = vmatpush.msra.mxu0 %v350
    %366 = vmatpush.msra.mxu0 %v349
    %367 = vmatmul.f32.gmra.mxu0 %v285
    %v368 = vpop.f32.mrf.mxu0
    %v369 = vadd.f32 0.0, %v368
    %370 = vmatmul.f32.gmra.mxu0 %v288
    %v371 = vpop.f32.mrf.mxu0
    %v372 = vadd.f32 0.0, %v371
    %373 = vmatmul.f32.gmra.mxu0 %v291
    %v374 = vpop.f32.mrf.mxu0
    %v375 = vadd.f32 0.0, %v374
    %376 = vdwg.mxu0
    %s377 = scalar_lea.vmem %s1, 128
    %v378 = vld [vmem:[%s377] sm:$0xff]
    %v379 = vld [vmem:[%s377 + $0x8] sm:$0xff]
    %380 = vmatpush.msra.mxu0 0.0
    %381 = vmatpush.msra.mxu0 0.0
    %382 = vmatpush.msra.mxu0 0.0
    %383 = vmatpush.msra.mxu0 0.0
    %384 = vmatpush.msra.mxu0 0.0
    %385 = vmatpush.msra.mxu0 0.0
    %386 = vmatpush.msra.mxu0 0.0
    %387 = vmatpush.msra.mxu0 0.0
    %388 = vmatpush.msra.mxu0 0.0
    %389 = vmatpush.msra.mxu0 0.0
    %390 = vmatpush.msra.mxu0 0.0
    %391 = vmatpush.msra.mxu0 0.0
    %392 = vmatpush.msra.mxu0 0.0
    %393 = vmatpush.msra.mxu0 0.0
    %394 = vmatpush.msra.mxu0 %v379
    %395 = vmatpush.msra.mxu0 %v378
    %396 = vmatmul.f32.gmra.mxu0 %v285
    %v397 = vpop.f32.mrf.mxu0
    %v398 = vadd.f32 0.0, %v397
    %399 = vmatmul.f32.gmra.mxu0 %v288
    %v400 = vpop.f32.mrf.mxu0
    %v401 = vadd.f32 0.0, %v400
    %402 = vmatmul.f32.gmra.mxu0 %v291
    %v403 = vpop.f32.mrf.mxu0
    %v404 = vadd.f32 0.0, %v403
    %405 = vdwg.mxu0
    %s406 = scalar_lea.vmem %s1, 144
    %v407 = vld [vmem:[%s406] sm:$0xff]
    %v408 = vld [vmem:[%s406 + $0x8] sm:$0xff]
    %409 = vmatpush.msra.mxu0 0.0
    %410 = vmatpush.msra.mxu0 0.0
    %411 = vmatpush.msra.mxu0 0.0
    %412 = vmatpush.msra.mxu0 0.0
    %413 = vmatpush.msra.mxu0 0.0
    %414 = vmatpush.msra.mxu0 0.0
    %415 = vmatpush.msra.mxu0 0.0
    %416 = vmatpush.msra.mxu0 0.0
    %417 = vmatpush.msra.mxu0 0.0
    %418 = vmatpush.msra.mxu0 0.0
    %419 = vmatpush.msra.mxu0 0.0
    %420 = vmatpush.msra.mxu0 0.0
    %421 = vmatpush.msra.mxu0 0.0
    %422 = vmatpush.msra.mxu0 0.0
    %423 = vmatpush.msra.mxu0 %v408
    %424 = vmatpush.msra.mxu0 %v407
    %425 = vmatmul.f32.gmra.mxu0 %v285
    %v426 = vpop.f32.mrf.mxu0
    %v427 = vadd.f32 0.0, %v426
    %428 = vmatmul.f32.gmra.mxu0 %v288
    %v429 = vpop.f32.mrf.mxu0
    %v430 = vadd.f32 0.0, %v429
    %431 = vmatmul.f32.gmra.mxu0 %v291
    %v432 = vpop.f32.mrf.mxu0
    %v433 = vadd.f32 0.0, %v432
    %434 = vdwg.mxu0
    %s435 = scalar_lea.vmem %s2, 24
    %v436 = vld [vmem:[%s435] sm:$0xff]
    %v437 = vld [vmem:[%s435 + $0x8] sm:$0xff]
    %v438 = vld [vmem:[%s435 + $0x10] sm:$0xff]
    %v440 = vsel %vm228, %v436, 0
    %v443 = vsel %vm228, %v437, 0
    %v446 = vsel %vm228, %v438, 0
    %448 = vmatpush.msra.mxu0 0.0
    %449 = vmatpush.msra.mxu0 %v433
    %450 = vmatpush.msra.mxu0 %v430
    %451 = vmatpush.msra.mxu0 %v427
    %452 = vmatpush.msra.mxu0 %v404
    %453 = vmatpush.msra.mxu0 %v401
    %454 = vmatpush.msra.mxu0 %v398
    %455 = vmatpush.msra.mxu0 %v375
    %456 = vmatpush.msra.mxu0 %v372
    %457 = vmatpush.msra.mxu0 %v369
    %458 = vmatpush.msra.mxu0 %v346
    %459 = vmatpush.msra.mxu0 %v343
    %460 = vmatpush.msra.mxu0 %v340
    %461 = vmatpush.msra.mxu0 %v317
    %462 = vmatpush.msra.mxu0 %v314
    %463 = vmatpush.msra.mxu0 %v311
    %464 = vmatmul.f32.gmra.mxu0 %v440
    %v465 = vpop.f32.mrf.mxu0
    %v466 = vadd.f32 0.0, %v465
    %467 = vmatmul.f32.gmra.mxu0 %v443
    %v468 = vpop.f32.mrf.mxu0
    %v469 = vadd.f32 0.0, %v468
    %470 = vmatmul.f32.gmra.mxu0 %v446
    %v471 = vpop.f32.mrf.mxu0
    %v472 = vadd.f32 0.0, %v471
    %473 = vdwg.mxu0
    %s474 = scalar_lea.vmem %s3, 1
    %v475 = vld [vmem:[%s474] sm:$0x1]
    %v477 = vperm.slane %v475, 0
    %v479 = vmul.f32 %v466, %v477
    %v480 = vmul.f32 %v469, %v477
    %v481 = vmul.f32 %v472, %v477
    %s482 = scalar_lea.vmem %s4, 1
    %v483 = vld [vmem:[%s482] sm:$0x1]
    %v485 = vperm.slane %v483, 0
    %v487 = vadd.f32 %v479, %v485
    %v488 = vadd.f32 %v480, %v485
    %v489 = vadd.f32 %v481, %v485
    %v490 = vmax.f32 %v487, 0.0
    %v491 = vmax.f32 %v488, 0.0
    %v492 = vmax.f32 %v489, 0.0
    %s493 = scalar_lea.vmem %s1, 160
    %v494 = vld [vmem:[%s493] sm:$0xff]
    %v495 = vld [vmem:[%s493 + $0x8] sm:$0xff]
    %v497 = vsel %vm73, %v490, 0
    %v500 = vsel %vm73, %v491, 0
    %v503 = vsel %vm73, %v492, 0
    %505 = vmatpush.msra.mxu0 0.0
    %506 = vmatpush.msra.mxu0 0.0
    %507 = vmatpush.msra.mxu0 0.0
    %508 = vmatpush.msra.mxu0 0.0
    %509 = vmatpush.msra.mxu0 0.0
    %510 = vmatpush.msra.mxu0 0.0
    %511 = vmatpush.msra.mxu0 0.0
    %512 = vmatpush.msra.mxu0 0.0
    %513 = vmatpush.msra.mxu0 0.0
    %514 = vmatpush.msra.mxu0 0.0
    %515 = vmatpush.msra.mxu0 0.0
    %516 = vmatpush.msra.mxu0 0.0
    %517 = vmatpush.msra.mxu0 0.0
    %518 = vmatpush.msra.mxu0 0.0
    %519 = vmatpush.msra.mxu0 %v495
    %520 = vmatpush.msra.mxu0 %v494
    %521 = vmatmul.f32.gmra.mxu0 %v497
    %v522 = vpop.f32.mrf.mxu0
    %v523 = vadd.f32 0.0, %v522
    %524 = vmatmul.f32.gmra.mxu0 %v500
    %v525 = vpop.f32.mrf.mxu0
    %v526 = vadd.f32 0.0, %v525
    %527 = vmatmul.f32.gmra.mxu0 %v503
    %v528 = vpop.f32.mrf.mxu0
    %v529 = vadd.f32 0.0, %v528
    %530 = vdwg.mxu0
    %s531 = scalar_lea.vmem %s1, 176
    %v532 = vld [vmem:[%s531] sm:$0xff]
    %v533 = vld [vmem:[%s531 + $0x8] sm:$0xff]
    %534 = vmatpush.msra.mxu0 0.0
    %535 = vmatpush.msra.mxu0 0.0
    %536 = vmatpush.msra.mxu0 0.0
    %537 = vmatpush.msra.mxu0 0.0
    %538 = vmatpush.msra.mxu0 0.0
    %539 = vmatpush.msra.mxu0 0.0
    %540 = vmatpush.msra.mxu0 0.0
    %541 = vmatpush.msra.mxu0 0.0
    %542 = vmatpush.msra.mxu0 0.0
    %543 = vmatpush.msra.mxu0 0.0
    %544 = vmatpush.msra.mxu0 0.0
    %545 = vmatpush.msra.mxu0 0.0
    %546 = vmatpush.msra.mxu0 0.0
    %547 = vmatpush.msra.mxu0 0.0
    %548 = vmatpush.msra.mxu0 %v533
    %549 = vmatpush.msra.mxu0 %v532
    %550 = vmatmul.f32.gmra.mxu0 %v497
    %v551 = vpop.f32.mrf.mxu0
    %v552 = vadd.f32 0.0, %v551
    %553 = vmatmul.f32.gmra.mxu0 %v500
    %v554 = vpop.f32.mrf.mxu0
    %v555 = vadd.f32 0.0, %v554
    %556 = vmatmul.f32.gmra.mxu0 %v503
    %v557 = vpop.f32.mrf.mxu0
    %v558 = vadd.f32 0.0, %v557
    %559 = vdwg.mxu0
    %s560 = scalar_lea.vmem %s1, 192
    %v561 = vld [vmem:[%s560] sm:$0xff]
    %v562 = vld [vmem:[%s560 + $0x8] sm:$0xff]
    %563 = vmatpush.msra.mxu0 0.0
    %564 = vmatpush.msra.mxu0 0.0
    %565 = vmatpush.msra.mxu0 0.0
    %566 = vmatpush.msra.mxu0 0.0
    %567 = vmatpush.msra.mxu0 0.0
    %568 = vmatpush.msra.mxu0 0.0
    %569 = vmatpush.msra.mxu0 0.0
    %570 = vmatpush.msra.mxu0 0.0
    %571 = vmatpush.msra.mxu0 0.0
    %572 = vmatpush.msra.mxu0 0.0
    %573 = vmatpush.msra.mxu0 0.0
    %574 = vmatpush.msra.mxu0 0.0
    %575 = vmatpush.msra.mxu0 0.0
    %576 = vmatpush.msra.mxu0 0.0
    %577 = vmatpush.msra.mxu0 %v562
    %578 = vmatpush.msra.mxu0 %v561
    %579 = vmatmul.f32.gmra.mxu0 %v497
    %v580 = vpop.f32.mrf.mxu0
    %v581 = vadd.f32 0.0, %v580
    %582 = vmatmul.f32.gmra.mxu0 %v500
    %v583 = vpop.f32.mrf.mxu0
    %v584 = vadd.f32 0.0, %v583
    %585 = vmatmul.f32.gmra.mxu0 %v503
    %v586 = vpop.f32.mrf.mxu0
    %v587 = vadd.f32 0.0, %v586
    %588 = vdwg.mxu0
    %s589 = scalar_lea.vmem %s1, 208
    %v590 = vld [vmem:[%s589] sm:$0xff]
    %v591 = vld [vmem:[%s589 + $0x8] sm:$0xff]
    %592 = vmatpush.msra.mxu0 0.0
    %593 = vmatpush.msra.mxu0 0.0
    %594 = vmatpush.msra.mxu0 0.0
    %595 = vmatpush.msra.mxu0 0.0
    %596 = vmatpush.msra.mxu0 0.0
    %597 = vmatpush.msra.mxu0 0.0
    %598 = vmatpush.msra.mxu0 0.0
    %599 = vmatpush.msra.mxu0 0.0
    %600 = vmatpush.msra.mxu0 0.0
    %601 = vmatpush.msra.mxu0 0.0
    %602 = vmatpush.msra.mxu0 0.0
    %603 = vmatpush.msra.mxu0 0.0
    %604 = vmatpush.msra.mxu0 0.0
    %605 = vmatpush.msra.mxu0 0.0
    %606 = vmatpush.msra.mxu0 %v591
    %607 = vmatpush.msra.mxu0 %v590
    %608 = vmatmul.f32.gmra.mxu0 %v497
    %v609 = vpop.f32.mrf.mxu0
    %v610 = vadd.f32 0.0, %v609
    %611 = vmatmul.f32.gmra.mxu0 %v500
    %v612 = vpop.f32.mrf.mxu0
    %v613 = vadd.f32 0.0, %v612
    %614 = vmatmul.f32.gmra.mxu0 %v503
    %v615 = vpop.f32.mrf.mxu0
    %v616 = vadd.f32 0.0, %v615
    %617 = vdwg.mxu0
    %s618 = scalar_lea.vmem %s1, 224
    %v619 = vld [vmem:[%s618] sm:$0xff]
    %v620 = vld [vmem:[%s618 + $0x8] sm:$0xff]
    %621 = vmatpush.msra.mxu0 0.0
    %622 = vmatpush.msra.mxu0 0.0
    %623 = vmatpush.msra.mxu0 0.0
    %624 = vmatpush.msra.mxu0 0.0
    %625 = vmatpush.msra.mxu0 0.0
    %626 = vmatpush.msra.mxu0 0.0
    %627 = vmatpush.msra.mxu0 0.0
    %628 = vmatpush.msra.mxu0 0.0
    %629 = vmatpush.msra.mxu0 0.0
    %630 = vmatpush.msra.mxu0 0.0
    %631 = vmatpush.msra.mxu0 0.0
    %632 = vmatpush.msra.mxu0 0.0
    %633 = vmatpush.msra.mxu0 0.0
    %634 = vmatpush.msra.mxu0 0.0
    %635 = vmatpush.msra.mxu0 %v620
    %636 = vmatpush.msra.mxu0 %v619
    %637 = vmatmul.f32.gmra.mxu0 %v497
    %v638 = vpop.f32.mrf.mxu0
    %v639 = vadd.f32 0.0, %v638
    %640 = vmatmul.f32.gmra.mxu0 %v500
    %v641 = vpop.f32.mrf.mxu0
    %v642 = vadd.f32 0.0, %v641
    %643 = vmatmul.f32.gmra.mxu0 %v503
    %v644 = vpop.f32.mrf.mxu0
    %v645 = vadd.f32 0.0, %v644
    %646 = vdwg.mxu0
    %s647 = scalar_lea.vmem %s2, 48
    %v648 = vld [vmem:[%s647] sm:$0xff]
    %v649 = vld [vmem:[%s647 + $0x8] sm:$0xff]
    %v650 = vld [vmem:[%s647 + $0x10] sm:$0xff]
    %v652 = vsel %vm228, %v648, 0
    %v655 = vsel %vm228, %v649, 0
    %v658 = vsel %vm228, %v650, 0
    %660 = vmatpush.msra.mxu0 0.0
    %661 = vmatpush.msra.mxu0 %v645
    %662 = vmatpush.msra.mxu0 %v642
    %663 = vmatpush.msra.mxu0 %v639
    %664 = vmatpush.msra.mxu0 %v616
    %665 = vmatpush.msra.mxu0 %v613
    %666 = vmatpush.msra.mxu0 %v610
    %667 = vmatpush.msra.mxu0 %v587
    %668 = vmatpush.msra.mxu0 %v584
    %669 = vmatpush.msra.mxu0 %v581
    %670 = vmatpush.msra.mxu0 %v558
    %671 = vmatpush.msra.mxu0 %v555
    %672 = vmatpush.msra.mxu0 %v552
    %673 = vmatpush.msra.mxu0 %v529
    %674 = vmatpush.msra.mxu0 %v526
    %675 = vmatpush.msra.mxu0 %v523
    %676 = vmatmul.f32.gmra.mxu0 %v652
    %v677 = vpop.f32.mrf.mxu0
    %v678 = vadd.f32 0.0, %v677
    %679 = vmatmul.f32.gmra.mxu0 %v655
    %v680 = vpop.f32.mrf.mxu0
    %v681 = vadd.f32 0.0, %v680
    %682 = vmatmul.f32.gmra.mxu0 %v658
    %v683 = vpop.f32.mrf.mxu0
    %v684 = vadd.f32 0.0, %v683
    %685 = vdwg.mxu0
    %s686 = scalar_lea.vmem %s3, 2
    %v687 = vld [vmem:[%s686] sm:$0x1]
    %v689 = vperm.slane %v687, 0
    %v691 = vmul.f32 %v678, %v689
    %v692 = vmul.f32 %v681, %v689
    %v693 = vmul.f32 %v684, %v689
    %s694 = scalar_lea.vmem %s4, 2
    %v695 = vld [vmem:[%s694] sm:$0x1]
    %v697 = vperm.slane %v695, 0
    %v699 = vadd.f32 %v691, %v697
    %v700 = vadd.f32 %v692, %v697
    %v701 = vadd.f32 %v693, %v697
    %v702 = vld [vmem:[%s5] sm:$0xff]
    %v703 = vld [vmem:[%s5 + $0x8] sm:$0xff]
    %v704 = vld [vmem:[%s7] sm:$0x1]
    %v706 = vperm.slane %v704, 0
    %v709 = vsel %vm73, %v699, 0
    %v712 = vsel %vm73, %v700, 0
    %v715 = vsel %vm73, %v701, 0
    %717 = vmatpush.msra.mxu0 0.0
    %718 = vmatpush.msra.mxu0 0.0
    %719 = vmatpush.msra.mxu0 0.0
    %720 = vmatpush.msra.mxu0 0.0
    %721 = vmatpush.msra.mxu0 0.0
    %722 = vmatpush.msra.mxu0 0.0
    %723 = vmatpush.msra.mxu0 0.0
    %724 = vmatpush.msra.mxu0 0.0
    %725 = vmatpush.msra.mxu0 0.0
    %726 = vmatpush.msra.mxu0 0.0
    %727 = vmatpush.msra.mxu0 0.0
    %728 = vmatpush.msra.mxu0 0.0
    %729 = vmatpush.msra.mxu0 0.0
    %730 = vmatpush.msra.mxu0 0.0
    %731 = vmatpush.msra.mxu0 %v703
    %732 = vmatpush.msra.mxu0 %v702
    %733 = vmatmul.f32.gmra.mxu0 %v75
    %v734 = vpop.f32.mrf.mxu0
    %v735 = vadd.f32 %v706, %v734
    %736 = vmatmul.f32.gmra.mxu0 %v78
    %v737 = vpop.f32.mrf.mxu0
    %v738 = vadd.f32 %v706, %v737
    %739 = vmatmul.f32.gmra.mxu0 %v81
    %v740 = vpop.f32.mrf.mxu0
    %v741 = vadd.f32 %v706, %v740
    %742 = vmatmul.f32.gmra.mxu0 %v285
    %v743 = vpop.f32.mrf.mxu0
    %v744 = vadd.f32 %v706, %v743
    %745 = vmatmul.f32.gmra.mxu0 %v288
    %v746 = vpop.f32.mrf.mxu0
    %v747 = vadd.f32 %v706, %v746
    %748 = vmatmul.f32.gmra.mxu0 %v291
    %v749 = vpop.f32.mrf.mxu0
    %v750 = vadd.f32 %v706, %v749
    %751 = vmatmul.f32.gmra.mxu0 %v497
    %v752 = vpop.f32.mrf.mxu0
    %v753 = vadd.f32 %v706, %v752
    %754 = vmatmul.f32.gmra.mxu0 %v500
    %v755 = vpop.f32.mrf.mxu0
    %v756 = vadd.f32 %v706, %v755
    %757 = vmatmul.f32.gmra.mxu0 %v503
    %v758 = vpop.f32.mrf.mxu0
    %v759 = vadd.f32 %v706, %v758
    %760 = vmatmul.f32.gmra.mxu0 %v709
    %v761 = vpop.f32.mrf.mxu0
    %v762 = vadd.f32 %v706, %v761
    %763 = vmatmul.f32.gmra.mxu0 %v712
    %v764 = vpop.f32.mrf.mxu0
    %v765 = vadd.f32 %v706, %v764
    %766 = vmatmul.f32.gmra.mxu0 %v715
    %v767 = vpop.f32.mrf.mxu0
    %v768 = vadd.f32 %v706, %v767
    %769 = vdwg.mxu0
    %s770 = scalar_lea.vmem %s5, 16
    %v771 = vld [vmem:[%s770] sm:$0xff]
    %v772 = vld [vmem:[%s770 + $0x8] sm:$0xff]
    %s773 = scalar_lea.vmem %s7, 1
    %v774 = vld [vmem:[%s773] sm:$0x1]
    %v776 = vperm.slane %v774, 0
    %778 = vmatpush.msra.mxu0 0.0
    %779 = vmatpush.msra.mxu0 0.0
    %780 = vmatpush.msra.mxu0 0.0
    %781 = vmatpush.msra.mxu0 0.0
    %782 = vmatpush.msra.mxu0 0.0
    %783 = vmatpush.msra.mxu0 0.0
    %784 = vmatpush.msra.mxu0 0.0
    %785 = vmatpush.msra.mxu0 0.0
    %786 = vmatpush.msra.mxu0 0.0
    %787 = vmatpush.msra.mxu0 0.0
    %788 = vmatpush.msra.mxu0 0.0
    %789 = vmatpush.msra.mxu0 0.0
    %790 = vmatpush.msra.mxu0 0.0
    %791 = vmatpush.msra.mxu0 0.0
    %792 = vmatpush.msra.mxu0 %v772
    %793 = vmatpush.msra.mxu0 %v771
    %794 = vmatmul.f32.gmra.mxu0 %v75
    %v795 = vpop.f32.mrf.mxu0
    %v796 = vadd.f32 %v776, %v795
    %797 = vmatmul.f32.gmra.mxu0 %v78
    %v798 = vpop.f32.mrf.mxu0
    %v799 = vadd.f32 %v776, %v798
    %800 = vmatmul.f32.gmra.mxu0 %v81
    %v801 = vpop.f32.mrf.mxu0
    %v802 = vadd.f32 %v776, %v801
    %803 = vmatmul.f32.gmra.mxu0 %v285
    %v804 = vpop.f32.mrf.mxu0
    %v805 = vadd.f32 %v776, %v804
    %806 = vmatmul.f32.gmra.mxu0 %v288
    %v807 = vpop.f32.mrf.mxu0
    %v808 = vadd.f32 %v776, %v807
    %809 = vmatmul.f32.gmra.mxu0 %v291
    %v810 = vpop.f32.mrf.mxu0
    %v811 = vadd.f32 %v776, %v810
    %812 = vmatmul.f32.gmra.mxu0 %v497
    %v813 = vpop.f32.mrf.mxu0
    %v814 = vadd.f32 %v776, %v813
    %815 = vmatmul.f32.gmra.mxu0 %v500
    %v816 = vpop.f32.mrf.mxu0
    %v817 = vadd.f32 %v776, %v816
    %818 = vmatmul.f32.gmra.mxu0 %v503
    %v819 = vpop.f32.mrf.mxu0
    %v820 = vadd.f32 %v776, %v819
    %821 = vmatmul.f32.gmra.mxu0 %v709
    %v822 = vpop.f32.mrf.mxu0
    %v823 = vadd.f32 %v776, %v822
    %824 = vmatmul.f32.gmra.mxu0 %v712
    %v825 = vpop.f32.mrf.mxu0
    %v826 = vadd.f32 %v776, %v825
    %827 = vmatmul.f32.gmra.mxu0 %v715
    %v828 = vpop.f32.mrf.mxu0
    %v829 = vadd.f32 %v776, %v828
    %830 = vdwg.mxu0
    %s831 = scalar_lea.vmem %s5, 32
    %v832 = vld [vmem:[%s831] sm:$0xff]
    %v833 = vld [vmem:[%s831 + $0x8] sm:$0xff]
    %s834 = scalar_lea.vmem %s7, 2
    %v835 = vld [vmem:[%s834] sm:$0x1]
    %v837 = vperm.slane %v835, 0
    %839 = vmatpush.msra.mxu0 0.0
    %840 = vmatpush.msra.mxu0 0.0
    %841 = vmatpush.msra.mxu0 0.0
    %842 = vmatpush.msra.mxu0 0.0
    %843 = vmatpush.msra.mxu0 0.0
    %844 = vmatpush.msra.mxu0 0.0
    %845 = vmatpush.msra.mxu0 0.0
    %846 = vmatpush.msra.mxu0 0.0
    %847 = vmatpush.msra.mxu0 0.0
    %848 = vmatpush.msra.mxu0 0.0
    %849 = vmatpush.msra.mxu0 0.0
    %850 = vmatpush.msra.mxu0 0.0
    %851 = vmatpush.msra.mxu0 0.0
    %852 = vmatpush.msra.mxu0 0.0
    %853 = vmatpush.msra.mxu0 %v833
    %854 = vmatpush.msra.mxu0 %v832
    %855 = vmatmul.f32.gmra.mxu0 %v75
    %v856 = vpop.f32.mrf.mxu0
    %v857 = vadd.f32 %v837, %v856
    %858 = vmatmul.f32.gmra.mxu0 %v78
    %v859 = vpop.f32.mrf.mxu0
    %v860 = vadd.f32 %v837, %v859
    %861 = vmatmul.f32.gmra.mxu0 %v81
    %v862 = vpop.f32.mrf.mxu0
    %v863 = vadd.f32 %v837, %v862
    %864 = vmatmul.f32.gmra.mxu0 %v285
    %v865 = vpop.f32.mrf.mxu0
    %v866 = vadd.f32 %v837, %v865
    %867 = vmatmul.f32.gmra.mxu0 %v288
    %v868 = vpop.f32.mrf.mxu0
    %v869 = vadd.f32 %v837, %v868
    %870 = vmatmul.f32.gmra.mxu0 %v291
    %v871 = vpop.f32.mrf.mxu0
    %v872 = vadd.f32 %v837, %v871
    %873 = vmatmul.f32.gmra.mxu0 %v497
    %v874 = vpop.f32.mrf.mxu0
    %v875 = vadd.f32 %v837, %v874
    %876 = vmatmul.f32.gmra.mxu0 %v500
    %v877 = vpop.f32.mrf.mxu0
    %v878 = vadd.f32 %v837, %v877
    %879 = vmatmul.f32.gmra.mxu0 %v503
    %v880 = vpop.f32.mrf.mxu0
    %v881 = vadd.f32 %v837, %v880
    %882 = vmatmul.f32.gmra.mxu0 %v709
    %v883 = vpop.f32.mrf.mxu0
    %v884 = vadd.f32 %v837, %v883
    %885 = vmatmul.f32.gmra.mxu0 %v712
    %v886 = vpop.f32.mrf.mxu0
    %v887 = vadd.f32 %v837, %v886
    %888 = vmatmul.f32.gmra.mxu0 %v715
    %v889 = vpop.f32.mrf.mxu0
    %v890 = vadd.f32 %v837, %v889
    %891 = vdwg.mxu0
    %s892 = scalar_lea.vmem %s5, 48
    %v893 = vld [vmem:[%s892] sm:$0xff]
    %v894 = vld [vmem:[%s892 + $0x8] sm:$0xff]
    %s895 = scalar_lea.vmem %s7, 3
    %v896 = vld [vmem:[%s895] sm:$0x1]
    %v898 = vperm.slane %v896, 0
    %900 = vmatpush.msra.mxu0 0.0
    %901 = vmatpush.msra.mxu0 0.0
    %902 = vmatpush.msra.mxu0 0.0
    %903 = vmatpush.msra.mxu0 0.0
    %904 = vmatpush.msra.mxu0 0.0
    %905 = vmatpush.msra.mxu0 0.0
    %906 = vmatpush.msra.mxu0 0.0
    %907 = vmatpush.msra.mxu0 0.0
    %908 = vmatpush.msra.mxu0 0.0
    %909 = vmatpush.msra.mxu0 0.0
    %910 = vmatpush.msra.mxu0 0.0
    %911 = vmatpush.msra.mxu0 0.0
    %912 = vmatpush.msra.mxu0 0.0
    %913 = vmatpush.msra.mxu0 0.0
    %914 = vmatpush.msra.mxu0 %v894
    %915 = vmatpush.msra.mxu0 %v893
    %916 = vmatmul.f32.gmra.mxu0 %v75
    %v917 = vpop.f32.mrf.mxu0
    %v918 = vadd.f32 %v898, %v917
    %919 = vmatmul.f32.gmra.mxu0 %v78
    %v920 = vpop.f32.mrf.mxu0
    %v921 = vadd.f32 %v898, %v920
    %922 = vmatmul.f32.gmra.mxu0 %v81
    %v923 = vpop.f32.mrf.mxu0
    %v924 = vadd.f32 %v898, %v923
    %925 = vmatmul.f32.gmra.mxu0 %v285
    %v926 = vpop.f32.mrf.mxu0
    %v927 = vadd.f32 %v898, %v926
    %928 = vmatmul.f32.gmra.mxu0 %v288
    %v929 = vpop.f32.mrf.mxu0
    %v930 = vadd.f32 %v898, %v929
    %931 = vmatmul.f32.gmra.mxu0 %v291
    %v932 = vpop.f32.mrf.mxu0
    %v933 = vadd.f32 %v898, %v932
    %934 = vmatmul.f32.gmra.mxu0 %v497
    %v935 = vpop.f32.mrf.mxu0
    %v936 = vadd.f32 %v898, %v935
    %937 = vmatmul.f32.gmra.mxu0 %v500
    %v938 = vpop.f32.mrf.mxu0
    %v939 = vadd.f32 %v898, %v938
    %940 = vmatmul.f32.gmra.mxu0 %v503
    %v941 = vpop.f32.mrf.mxu0
    %v942 = vadd.f32 %v898, %v941
    %943 = vmatmul.f32.gmra.mxu0 %v709
    %v944 = vpop.f32.mrf.mxu0
    %v945 = vadd.f32 %v898, %v944
    %946 = vmatmul.f32.gmra.mxu0 %v712
    %v947 = vpop.f32.mrf.mxu0
    %v948 = vadd.f32 %v898, %v947
    %949 = vmatmul.f32.gmra.mxu0 %v715
    %v950 = vpop.f32.mrf.mxu0
    %v951 = vadd.f32 %v898, %v950
    %952 = vdwg.mxu0
    %v953 = vld [vmem:[%s6] sm:$0xff]
    %v954 = vld [vmem:[%s6 + $0x8] sm:$0xff]
    %v955 = vld [vmem:[%s6 + $0x10] sm:$0xff]
    %vm956 = vcmask 195584
    %v958 = vsel %vm956, 0.0, 0
    %960 = vmatpush.msra.mxu0 0.0
    %961 = vmatpush.msra.mxu0 0.0
    %962 = vmatpush.msra.mxu0 0.0
    %963 = vmatpush.msra.mxu0 0.0
    %964 = vmatpush.msra.mxu0 0.0
    %965 = vmatpush.msra.mxu0 0.0
    %966 = vmatpush.msra.mxu0 0.0
    %967 = vmatpush.msra.mxu0 0.0
    %968 = vmatpush.msra.mxu0 0.0
    %969 = vmatpush.msra.mxu0 0.0
    %970 = vmatpush.msra.mxu0 0.0
    %971 = vmatpush.msra.mxu0 0.0
    %972 = vmatpush.msra.mxu0 0.0
    %973 = vmatpush.msra.mxu0 %v955
    %974 = vmatpush.msra.mxu0 %v954
    %975 = vmatpush.msra.mxu0 %v953
    %976 = vmatmul.f32.gmra.mxu0 %v958
    %v977 = vpop.f32.mrf.mxu0
    %v978 = vadd.f32 0.0, %v977
    %979 = vmatmul.f32.gmra.mxu0 %v958
    %v980 = vpop.f32.mrf.mxu0
    %v981 = vadd.f32 0.0, %v980
    %982 = vmatmul.f32.gmra.mxu0 %v958
    %v983 = vpop.f32.mrf.mxu0
    %v984 = vadd.f32 0.0, %v983
    %985 = vdwg.mxu0
    %v986 = vadd.f32 %v735, %v978
    %v987 = vadd.f32 %v738, %v981
    %v988 = vadd.f32 %v741, %v984
    %s989 = scalar_lea.vmem %s6, 24
    %v990 = vld [vmem:[%s989] sm:$0xff]
    %v991 = vld [vmem:[%s989 + $0x8] sm:$0xff]
    %v992 = vld [vmem:[%s989 + $0x10] sm:$0xff]
    %993 = vmatpush.msra.mxu0 0.0
    %994 = vmatpush.msra.mxu0 0.0
    %995 = vmatpush.msra.mxu0 0.0
    %996 = vmatpush.msra.mxu0 0.0
    %997 = vmatpush.msra.mxu0 0.0
    %998 = vmatpush.msra.mxu0 0.0
    %999 = vmatpush.msra.mxu0 0.0
    %1000 = vmatpush.msra.mxu0 0.0
    %1001 = vmatpush.msra.mxu0 0.0
    %1002 = vmatpush.msra.mxu0 0.0
    %1003 = vmatpush.msra.mxu0 0.0
    %1004 = vmatpush.msra.mxu0 0.0
    %1005 = vmatpush.msra.mxu0 0.0
    %1006 = vmatpush.msra.mxu0 %v992
    %1007 = vmatpush.msra.mxu0 %v991
    %1008 = vmatpush.msra.mxu0 %v990
    %1009 = vmatmul.f32.gmra.mxu0 %v958
    %v1010 = vpop.f32.mrf.mxu0
    %v1011 = vadd.f32 0.0, %v1010
    %1012 = vmatmul.f32.gmra.mxu0 %v958
    %v1013 = vpop.f32.mrf.mxu0
    %v1014 = vadd.f32 0.0, %v1013
    %1015 = vmatmul.f32.gmra.mxu0 %v958
    %v1016 = vpop.f32.mrf.mxu0
    %v1017 = vadd.f32 0.0, %v1016
    %1018 = vdwg.mxu0
    %v1019 = vadd.f32 %v796, %v1011
    %v1020 = vadd.f32 %v799, %v1014
    %v1021 = vadd.f32 %v802, %v1017
    %s1022 = scalar_lea.vmem %s6, 48
    %v1023 = vld [vmem:[%s1022] sm:$0xff]
    %v1024 = vld [vmem:[%s1022 + $0x8] sm:$0xff]
    %v1025 = vld [vmem:[%s1022 + $0x10] sm:$0xff]
    %1026 = vmatpush.msra.mxu0 0.0
    %1027 = vmatpush.msra.mxu0 0.0
    %1028 = vmatpush.msra.mxu0 0.0
    %1029 = vmatpush.msra.mxu0 0.0
    %1030 = vmatpush.msra.mxu0 0.0
    %1031 = vmatpush.msra.mxu0 0.0
    %1032 = vmatpush.msra.mxu0 0.0
    %1033 = vmatpush.msra.mxu0 0.0
    %1034 = vmatpush.msra.mxu0 0.0
    %1035 = vmatpush.msra.mxu0 0.0
    %1036 = vmatpush.msra.mxu0 0.0
    %1037 = vmatpush.msra.mxu0 0.0
    %1038 = vmatpush.msra.mxu0 0.0
    %1039 = vmatpush.msra.mxu0 %v1025
    %1040 = vmatpush.msra.mxu0 %v1024
    %1041 = vmatpush.msra.mxu0 %v1023
    %1042 = vmatmul.f32.gmra.mxu0 %v958
    %v1043 = vpop.f32.mrf.mxu0
    %v1044 = vadd.f32 0.0, %v1043
    %1045 = vmatmul.f32.gmra.mxu0 %v958
    %v1046 = vpop.f32.mrf.mxu0
    %v1047 = vadd.f32 0.0, %v1046
    %1048 = vmatmul.f32.gmra.mxu0 %v958
    %v1049 = vpop.f32.mrf.mxu0
    %v1050 = vadd.f32 0.0, %v1049
    %1051 = vdwg.mxu0
    %v1052 = vadd.f32 %v857, %v1044
    %v1053 = vadd.f32 %v860, %v1047
    %v1054 = vadd.f32 %v863, %v1050
    %s1055 = scalar_lea.vmem %s6, 72
    %v1056 = vld [vmem:[%s1055] sm:$0xff]
    %v1057 = vld [vmem:[%s1055 + $0x8] sm:$0xff]
    %v1058 = vld [vmem:[%s1055 + $0x10] sm:$0xff]
    %1059 = vmatpush.msra.mxu0 0.0
    %1060 = vmatpush.msra.mxu0 0.0
    %1061 = vmatpush.msra.mxu0 0.0
    %1062 = vmatpush.msra.mxu0 0.0
    %1063 = vmatpush.msra.mxu0 0.0
    %1064 = vmatpush.msra.mxu0 0.0
    %1065 = vmatpush.msra.mxu0 0.0
    %1066 = vmatpush.msra.mxu0 0.0
    %1067 = vmatpush.msra.mxu0 0.0
    %1068 = vmatpush.msra.mxu0 0.0
    %1069 = vmatpush.msra.mxu0 0.0
    %1070 = vmatpush.msra.mxu0 0.0
    %1071 = vmatpush.msra.mxu0 0.0
    %1072 = vmatpush.msra.mxu0 %v1058
    %1073 = vmatpush.msra.mxu0 %v1057
    %1074 = vmatpush.msra.mxu0 %v1056
    %1075 = vmatmul.f32.gmra.mxu0 %v958
    %v1076 = vpop.f32.mrf.mxu0
    %v1077 = vadd.f32 0.0, %v1076
    %1078 = vmatmul.f32.gmra.mxu0 %v958
    %v1079 = vpop.f32.mrf.mxu0
    %v1080 = vadd.f32 0.0, %v1079
    %1081 = vmatmul.f32.gmra.mxu0 %v958
    %v1082 = vpop.f32.mrf.mxu0
    %v1083 = vadd.f32 0.0, %v1082
    %1084 = vdwg.mxu0
    %v1085 = vadd.f32 %v918, %v1077
    %v1086 = vadd.f32 %v921, %v1080
    %v1087 = vadd.f32 %v924, %v1083
    %v1088 = vxor.u32 %v1019, 2147483648
    %v1089 = vxor.u32 %v1020, 2147483648
    %v1090 = vxor.u32 %v1021, 2147483648
    %v1091 = vmul.f32 %v1088, 1.442695
    %v1092 = vpow.pop %v1091
    %v1093 = vmul.f32 %v1089, 1.442695
    %v1094 = vpow.pop %v1093
    %v1095 = vmul.f32 %v1090, 1.442695
    %v1096 = vpow.pop %v1095
    %v1097 = vadd.f32 %v1092, 1.0
    %v1098 = vadd.f32 %v1094, 1.0
    %v1099 = vadd.f32 %v1096, 1.0
    %v1100 = vrcp.pop %v1097
    %v1101 = vmul.f32 %v1097, %v1100
    %v1102 = vsub.f32 1.0, %v1101
    %v1103 = vmul.f32 %v1100, %v1102
    %v1104 = vadd.f32 %v1100, %v1103
    %vm1105 = vweird.f32 %v1097
    %vm1106 = vweird.f32 %v1100
    %vm1107 = vmor %vm1105, %vm1106
    %v1108 = vsel %vm1107, %v1100, %v1104
    %v1109 = vand.u32 2147483647, %v1097
    %vm1110 = vcmp.eq.f32.partialorder %v1109, 8.507059e+37
    %v1111 = vand.u32 %v1097, 2147483648
    %v1112 = vor.u32 1.1754944e-38, %v1111
    %v1113 = vsel %vm1110, %v1112, %v1108
    %v1114 = vmul.f32 1.0, %v1113
    %v1115 = vrcp.pop %v1098
    %v1116 = vmul.f32 %v1098, %v1115
    %v1117 = vsub.f32 1.0, %v1116
    %v1118 = vmul.f32 %v1115, %v1117
    %v1119 = vadd.f32 %v1115, %v1118
    %vm1120 = vweird.f32 %v1098
    %vm1121 = vweird.f32 %v1115
    %vm1122 = vmor %vm1120, %vm1121
    %v1123 = vsel %vm1122, %v1115, %v1119
    %v1124 = vand.u32 2147483647, %v1098
    %vm1125 = vcmp.eq.f32.partialorder %v1124, 8.507059e+37
    %v1126 = vand.u32 %v1098, 2147483648
    %v1127 = vor.u32 1.1754944e-38, %v1126
    %v1128 = vsel %vm1125, %v1127, %v1123
    %v1129 = vmul.f32 1.0, %v1128
    %v1130 = vrcp.pop %v1099
    %v1131 = vmul.f32 %v1099, %v1130
    %v1132 = vsub.f32 1.0, %v1131
    %v1133 = vmul.f32 %v1130, %v1132
    %v1134 = vadd.f32 %v1130, %v1133
    %vm1135 = vweird.f32 %v1099
    %vm1136 = vweird.f32 %v1130
    %vm1137 = vmor %vm1135, %vm1136
    %v1138 = vsel %vm1137, %v1130, %v1134
    %v1139 = vand.u32 2147483647, %v1099
    %vm1140 = vcmp.eq.f32.partialorder %v1139, 8.507059e+37
    %v1141 = vand.u32 %v1099, 2147483648
    %v1142 = vor.u32 1.1754944e-38, %v1141
    %v1143 = vsel %vm1140, %v1142, %v1138
    %v1144 = vmul.f32 1.0, %v1143
    %v1145 = vmul.f32 %v1114, 0.0
    %v1146 = vmul.f32 %v1129, 0.0
    %v1147 = vmul.f32 %v1144, 0.0
    %v1148 = vxor.u32 %v986, 2147483648
    %v1149 = vxor.u32 %v987, 2147483648
    %v1150 = vxor.u32 %v988, 2147483648
    %v1151 = vmul.f32 %v1148, 1.442695
    %v1152 = vpow.pop %v1151
    %v1153 = vmul.f32 %v1149, 1.442695
    %v1154 = vpow.pop %v1153
    %v1155 = vmul.f32 %v1150, 1.442695
    %v1156 = vpow.pop %v1155
    %v1157 = vadd.f32 %v1152, 1.0
    %v1158 = vadd.f32 %v1154, 1.0
    %v1159 = vadd.f32 %v1156, 1.0
    %v1160 = vrcp.pop %v1157
    %v1161 = vmul.f32 %v1157, %v1160
    %v1162 = vsub.f32 1.0, %v1161
    %v1163 = vmul.f32 %v1160, %v1162
    %v1164 = vadd.f32 %v1160, %v1163
    %vm1165 = vweird.f32 %v1157
    %vm1166 = vweird.f32 %v1160
    %vm1167 = vmor %vm1165, %vm1166
    %v1168 = vsel %vm1167, %v1160, %v1164
    %v1169 = vand.u32 2147483647, %v1157
    %vm1170 = vcmp.eq.f32.partialorder %v1169, 8.507059e+37
    %v1171 = vand.u32 %v1157, 2147483648
    %v1172 = vor.u32 1.1754944e-38, %v1171
    %v1173 = vsel %vm1170, %v1172, %v1168
    %v1174 = vmul.f32 1.0, %v1173
    %v1175 = vrcp.pop %v1158
    %v1176 = vmul.f32 %v1158, %v1175
    %v1177 = vsub.f32 1.0, %v1176
    %v1178 = vmul.f32 %v1175, %v1177
    %v1179 = vadd.f32 %v1175, %v1178
    %vm1180 = vweird.f32 %v1158
    %vm1181 = vweird.f32 %v1175
    %vm1182 = vmor %vm1180, %vm1181
    %v1183 = vsel %vm1182, %v1175, %v1179
    %v1184 = vand.u32 2147483647, %v1158
    %vm1185 = vcmp.eq.f32.partialorder %v1184, 8.507059e+37
    %v1186 = vand.u32 %v1158, 2147483648
    %v1187 = vor.u32 1.1754944e-38, %v1186
    %v1188 = vsel %vm1185, %v1187, %v1183
    %v1189 = vmul.f32 1.0, %v1188
    %v1190 = vrcp.pop %v1159
    %v1191 = vmul.f32 %v1159, %v1190
    %v1192 = vsub.f32 1.0, %v1191
    %v1193 = vmul.f32 %v1190, %v1192
    %v1194 = vadd.f32 %v1190, %v1193
    %vm1195 = vweird.f32 %v1159
    %vm1196 = vweird.f32 %v1190
    %vm1197 = vmor %vm1195, %vm1196
    %v1198 = vsel %vm1197, %v1190, %v1194
    %v1199 = vand.u32 2147483647, %v1159
    %vm1200 = vcmp.eq.f32.partialorder %v1199, 8.507059e+37
    %v1201 = vand.u32 %v1159, 2147483648
    %v1202 = vor.u32 1.1754944e-38, %v1201
    %v1203 = vsel %vm1200, %v1202, %v1198
    %v1204 = vmul.f32 1.0, %v1203
    %v1205 = vtanh.pop %v1052
    %v1206 = vtanh.pop %v1053
    %v1207 = vtanh.pop %v1054
    %v1208 = vmul.f32 %v1174, %v1205
    %v1209 = vmul.f32 %v1189, %v1206
    %v1210 = vmul.f32 %v1204, %v1207
    %v1211 = vadd.f32 %v1145, %v1208
    %v1212 = vadd.f32 %v1146, %v1209
    %v1213 = vadd.f32 %v1147, %v1210
    %v1214 = vxor.u32 %v1085, 2147483648
    %v1215 = vxor.u32 %v1086, 2147483648
    %v1216 = vxor.u32 %v1087, 2147483648
    %v1217 = vmul.f32 %v1214, 1.442695
    %v1218 = vpow.pop %v1217
    %v1219 = vmul.f32 %v1215, 1.442695
    %v1220 = vpow.pop %v1219
    %v1221 = vmul.f32 %v1216, 1.442695
    %v1222 = vpow.pop %v1221
    %v1223 = vadd.f32 %v1218, 1.0
    %v1224 = vadd.f32 %v1220, 1.0
    %v1225 = vadd.f32 %v1222, 1.0
    %v1226 = vrcp.pop %v1223
    %v1227 = vmul.f32 %v1223, %v1226
    %v1228 = vsub.f32 1.0, %v1227
    %v1229 = vmul.f32 %v1226, %v1228
    %v1230 = vadd.f32 %v1226, %v1229
    %vm1231 = vweird.f32 %v1223
    %vm1232 = vweird.f32 %v1226
    %vm1233 = vmor %vm1231, %vm1232
    %v1234 = vsel %vm1233, %v1226, %v1230
    %v1235 = vand.u32 2147483647, %v1223
    %vm1236 = vcmp.eq.f32.partialorder %v1235, 8.507059e+37
    %v1237 = vand.u32 %v1223, 2147483648
    %v1238 = vor.u32 1.1754944e-38, %v1237
    %v1239 = vsel %vm1236, %v1238, %v1234
    %v1240 = vmul.f32 1.0, %v1239
    %v1241 = vrcp.pop %v1224
    %v1242 = vmul.f32 %v1224, %v1241
    %v1243 = vsub.f32 1.0, %v1242
    %v1244 = vmul.f32 %v1241, %v1243
    %v1245 = vadd.f32 %v1241, %v1244
    %vm1246 = vweird.f32 %v1224
    %vm1247 = vweird.f32 %v1241
    %vm1248 = vmor %vm1246, %vm1247
    %v1249 = vsel %vm1248, %v1241, %v1245
    %v1250 = vand.u32 2147483647, %v1224
    %vm1251 = vcmp.eq.f32.partialorder %v1250, 8.507059e+37
    %v1252 = vand.u32 %v1224, 2147483648
    %v1253 = vor.u32 1.1754944e-38, %v1252
    %v1254 = vsel %vm1251, %v1253, %v1249
    %v1255 = vmul.f32 1.0, %v1254
    %v1256 = vrcp.pop %v1225
    %v1257 = vmul.f32 %v1225, %v1256
    %v1258 = vsub.f32 1.0, %v1257
    %v1259 = vmul.f32 %v1256, %v1258
    %v1260 = vadd.f32 %v1256, %v1259
    %vm1261 = vweird.f32 %v1225
    %vm1262 = vweird.f32 %v1256
    %vm1263 = vmor %vm1261, %vm1262
    %v1264 = vsel %vm1263, %v1256, %v1260
    %v1265 = vand.u32 2147483647, %v1225
    %vm1266 = vcmp.eq.f32.partialorder %v1265, 8.507059e+37
    %v1267 = vand.u32 %v1225, 2147483648
    %v1268 = vor.u32 1.1754944e-38, %v1267
    %v1269 = vsel %vm1266, %v1268, %v1264
    %v1270 = vmul.f32 1.0, %v1269
    %v1271 = vtanh.pop %v1211
    %v1272 = vtanh.pop %v1212
    %v1273 = vtanh.pop %v1213
    %v1274 = vmul.f32 %v1240, %v1271
    %v1275 = vmul.f32 %v1255, %v1272
    %v1276 = vmul.f32 %v1270, %v1273
    %v1278 = vsel %vm956, %v1274, 0
    %v1281 = vsel %vm956, %v1275, 0
    %v1284 = vsel %vm956, %v1276, 0
    %1286 = vmatpush.msra.mxu0 0.0
    %1287 = vmatpush.msra.mxu0 0.0
    %1288 = vmatpush.msra.mxu0 0.0
    %1289 = vmatpush.msra.mxu0 0.0
    %1290 = vmatpush.msra.mxu0 0.0
    %1291 = vmatpush.msra.mxu0 0.0
    %1292 = vmatpush.msra.mxu0 0.0
    %1293 = vmatpush.msra.mxu0 0.0
    %1294 = vmatpush.msra.mxu0 0.0
    %1295 = vmatpush.msra.mxu0 0.0
    %1296 = vmatpush.msra.mxu0 0.0
    %1297 = vmatpush.msra.mxu0 0.0
    %1298 = vmatpush.msra.mxu0 0.0
    %1299 = vmatpush.msra.mxu0 %v955
    %1300 = vmatpush.msra.mxu0 %v954
    %1301 = vmatpush.msra.mxu0 %v953
    %1302 = vmatmul.f32.gmra.mxu0 %v1278
    %v1303 = vpop.f32.mrf.mxu0
    %v1304 = vadd.f32 0.0, %v1303
    %1305 = vmatmul.f32.gmra.mxu0 %v1281
    %v1306 = vpop.f32.mrf.mxu0
    %v1307 = vadd.f32 0.0, %v1306
    %1308 = vmatmul.f32.gmra.mxu0 %v1284
    %v1309 = vpop.f32.mrf.mxu0
    %v1310 = vadd.f32 0.0, %v1309
    %1311 = vdwg.mxu0
    %v1312 = vadd.f32 %v744, %v1304
    %v1313 = vadd.f32 %v747, %v1307
    %v1314 = vadd.f32 %v750, %v1310
    %1315 = vmatpush.msra.mxu0 0.0
    %1316 = vmatpush.msra.mxu0 0.0
    %1317 = vmatpush.msra.mxu0 0.0
    %1318 = vmatpush.msra.mxu0 0.0
    %1319 = vmatpush.msra.mxu0 0.0
    %1320 = vmatpush.msra.mxu0 0.0
    %1321 = vmatpush.msra.mxu0 0.0
    %1322 = vmatpush.msra.mxu0 0.0
    %1323 = vmatpush.msra.mxu0 0.0
    %1324 = vmatpush.msra.mxu0 0.0
    %1325 = vmatpush.msra.mxu0 0.0
    %1326 = vmatpush.msra.mxu0 0.0
    %1327 = vmatpush.msra.mxu0 0.0
    %1328 = vmatpush.msra.mxu0 %v992
    %1329 = vmatpush.msra.mxu0 %v991
    %1330 = vmatpush.msra.mxu0 %v990
    %1331 = vmatmul.f32.gmra.mxu0 %v1278
    %v1332 = vpop.f32.mrf.mxu0
    %v1333 = vadd.f32 0.0, %v1332
    %1334 = vmatmul.f32.gmra.mxu0 %v1281
    %v1335 = vpop.f32.mrf.mxu0
    %v1336 = vadd.f32 0.0, %v1335
    %1337 = vmatmul.f32.gmra.mxu0 %v1284
    %v1338 = vpop.f32.mrf.mxu0
    %v1339 = vadd.f32 0.0, %v1338
    %1340 = vdwg.mxu0
    %v1341 = vadd.f32 %v805, %v1333
    %v1342 = vadd.f32 %v808, %v1336
    %v1343 = vadd.f32 %v811, %v1339
    %1344 = vmatpush.msra.mxu0 0.0
    %1345 = vmatpush.msra.mxu0 0.0
    %1346 = vmatpush.msra.mxu0 0.0
    %1347 = vmatpush.msra.mxu0 0.0
    %1348 = vmatpush.msra.mxu0 0.0
    %1349 = vmatpush.msra.mxu0 0.0
    %1350 = vmatpush.msra.mxu0 0.0
    %1351 = vmatpush.msra.mxu0 0.0
    %1352 = vmatpush.msra.mxu0 0.0
    %1353 = vmatpush.msra.mxu0 0.0
    %1354 = vmatpush.msra.mxu0 0.0
    %1355 = vmatpush.msra.mxu0 0.0
    %1356 = vmatpush.msra.mxu0 0.0
    %1357 = vmatpush.msra.mxu0 %v1025
    %1358 = vmatpush.msra.mxu0 %v1024
    %1359 = vmatpush.msra.mxu0 %v1023
    %1360 = vmatmul.f32.gmra.mxu0 %v1278
    %v1361 = vpop.f32.mrf.mxu0
    %v1362 = vadd.f32 0.0, %v1361
    %1363 = vmatmul.f32.gmra.mxu0 %v1281
    %v1364 = vpop.f32.mrf.mxu0
    %v1365 = vadd.f32 0.0, %v1364
    %1366 = vmatmul.f32.gmra.mxu0 %v1284
    %v1367 = vpop.f32.mrf.mxu0
    %v1368 = vadd.f32 0.0, %v1367
    %1369 = vdwg.mxu0
    %v1370 = vadd.f32 %v866, %v1362
    %v1371 = vadd.f32 %v869, %v1365
    %v1372 = vadd.f32 %v872, %v1368
    %1373 = vmatpush.msra.mxu0 0.0
    %1374 = vmatpush.msra.mxu0 0.0
    %1375 = vmatpush.msra.mxu0 0.0
    %1376 = vmatpush.msra.mxu0 0.0
    %1377 = vmatpush.msra.mxu0 0.0
    %1378 = vmatpush.msra.mxu0 0.0
    %1379 = vmatpush.msra.mxu0 0.0
    %1380 = vmatpush.msra.mxu0 0.0
    %1381 = vmatpush.msra.mxu0 0.0
    %1382 = vmatpush.msra.mxu0 0.0
    %1383 = vmatpush.msra.mxu0 0.0
    %1384 = vmatpush.msra.mxu0 0.0
    %1385 = vmatpush.msra.mxu0 0.0
    %1386 = vmatpush.msra.mxu0 %v1058
    %1387 = vmatpush.msra.mxu0 %v1057
    %1388 = vmatpush.msra.mxu0 %v1056
    %1389 = vmatmul.f32.gmra.mxu0 %v1278
    %v1390 = vpop.f32.mrf.mxu0
    %v1391 = vadd.f32 0.0, %v1390
    %1392 = vmatmul.f32.gmra.mxu0 %v1281
    %v1393 = vpop.f32.mrf.mxu0
    %v1394 = vadd.f32 0.0, %v1393
    %1395 = vmatmul.f32.gmra.mxu0 %v1284
    %v1396 = vpop.f32.mrf.mxu0
    %v1397 = vadd.f32 0.0, %v1396
    %1398 = vdwg.mxu0
    %v1399 = vadd.f32 %v927, %v1391
    %v1400 = vadd.f32 %v930, %v1394
    %v1401 = vadd.f32 %v933, %v1397
    %v1402 = vxor.u32 %v1341, 2147483648
    %v1403 = vxor.u32 %v1342, 2147483648
    %v1404 = vxor.u32 %v1343, 2147483648
    %v1405 = vmul.f32 %v1402, 1.442695
    %v1406 = vpow.pop %v1405
    %v1407 = vmul.f32 %v1403, 1.442695
    %v1408 = vpow.pop %v1407
    %v1409 = vmul.f32 %v1404, 1.442695
    %v1410 = vpow.pop %v1409
    %v1411 = vadd.f32 %v1406, 1.0
    %v1412 = vadd.f32 %v1408, 1.0
    %v1413 = vadd.f32 %v1410, 1.0
    %v1414 = vrcp.pop %v1411
    %v1415 = vmul.f32 %v1411, %v1414
    %v1416 = vsub.f32 1.0, %v1415
    %v1417 = vmul.f32 %v1414, %v1416
    %v1418 = vadd.f32 %v1414, %v1417
    %vm1419 = vweird.f32 %v1411
    %vm1420 = vweird.f32 %v1414
    %vm1421 = vmor %vm1419, %vm1420
    %v1422 = vsel %vm1421, %v1414, %v1418
    %v1423 = vand.u32 2147483647, %v1411
    %vm1424 = vcmp.eq.f32.partialorder %v1423, 8.507059e+37
    %v1425 = vand.u32 %v1411, 2147483648
    %v1426 = vor.u32 1.1754944e-38, %v1425
    %v1427 = vsel %vm1424, %v1426, %v1422
    %v1428 = vmul.f32 1.0, %v1427
    %v1429 = vrcp.pop %v1412
    %v1430 = vmul.f32 %v1412, %v1429
    %v1431 = vsub.f32 1.0, %v1430
    %v1432 = vmul.f32 %v1429, %v1431
    %v1433 = vadd.f32 %v1429, %v1432
    %vm1434 = vweird.f32 %v1412
    %vm1435 = vweird.f32 %v1429
    %vm1436 = vmor %vm1434, %vm1435
    %v1437 = vsel %vm1436, %v1429, %v1433
    %v1438 = vand.u32 2147483647, %v1412
    %vm1439 = vcmp.eq.f32.partialorder %v1438, 8.507059e+37
    %v1440 = vand.u32 %v1412, 2147483648
    %v1441 = vor.u32 1.1754944e-38, %v1440
    %v1442 = vsel %vm1439, %v1441, %v1437
    %v1443 = vmul.f32 1.0, %v1442
    %v1444 = vrcp.pop %v1413
    %v1445 = vmul.f32 %v1413, %v1444
    %v1446 = vsub.f32 1.0, %v1445
    %v1447 = vmul.f32 %v1444, %v1446
    %v1448 = vadd.f32 %v1444, %v1447
    %vm1449 = vweird.f32 %v1413
    %vm1450 = vweird.f32 %v1444
    %vm1451 = vmor %vm1449, %vm1450
    %v1452 = vsel %vm1451, %v1444, %v1448
    %v1453 = vand.u32 2147483647, %v1413
    %vm1454 = vcmp.eq.f32.partialorder %v1453, 8.507059e+37
    %v1455 = vand.u32 %v1413, 2147483648
    %v1456 = vor.u32 1.1754944e-38, %v1455
    %v1457 = vsel %vm1454, %v1456, %v1452
    %v1458 = vmul.f32 1.0, %v1457
    %v1459 = vmul.f32 %v1428, %v1211
    %v1460 = vmul.f32 %v1443, %v1212
    %v1461 = vmul.f32 %v1458, %v1213
    %v1462 = vxor.u32 %v1312, 2147483648
    %v1463 = vxor.u32 %v1313, 2147483648
    %v1464 = vxor.u32 %v1314, 2147483648
    %v1465 = vmul.f32 %v1462, 1.442695
    %v1466 = vpow.pop %v1465
    %v1467 = vmul.f32 %v1463, 1.442695
    %v1468 = vpow.pop %v1467
    %v1469 = vmul.f32 %v1464, 1.442695
    %v1470 = vpow.pop %v1469
    %v1471 = vadd.f32 %v1466, 1.0
    %v1472 = vadd.f32 %v1468, 1.0
    %v1473 = vadd.f32 %v1470, 1.0
    %v1474 = vrcp.pop %v1471
    %v1475 = vmul.f32 %v1471, %v1474
    %v1476 = vsub.f32 1.0, %v1475
    %v1477 = vmul.f32 %v1474, %v1476
    %v1478 = vadd.f32 %v1474, %v1477
    %vm1479 = vweird.f32 %v1471
    %vm1480 = vweird.f32 %v1474
    %vm1481 = vmor %vm1479, %vm1480
    %v1482 = vsel %vm1481, %v1474, %v1478
    %v1483 = vand.u32 2147483647, %v1471
    %vm1484 = vcmp.eq.f32.partialorder %v1483, 8.507059e+37
    %v1485 = vand.u32 %v1471, 2147483648
    %v1486 = vor.u32 1.1754944e-38, %v1485
    %v1487 = vsel %vm1484, %v1486, %v1482
    %v1488 = vmul.f32 1.0, %v1487
    %v1489 = vrcp.pop %v1472
    %v1490 = vmul.f32 %v1472, %v1489
    %v1491 = vsub.f32 1.0, %v1490
    %v1492 = vmul.f32 %v1489, %v1491
    %v1493 = vadd.f32 %v1489, %v1492
    %vm1494 = vweird.f32 %v1472
    %vm1495 = vweird.f32 %v1489
    %vm1496 = vmor %vm1494, %vm1495
    %v1497 = vsel %vm1496, %v1489, %v1493
    %v1498 = vand.u32 2147483647, %v1472
    %vm1499 = vcmp.eq.f32.partialorder %v1498, 8.507059e+37
    %v1500 = vand.u32 %v1472, 2147483648
    %v1501 = vor.u32 1.1754944e-38, %v1500
    %v1502 = vsel %vm1499, %v1501, %v1497
    %v1503 = vmul.f32 1.0, %v1502
    %v1504 = vrcp.pop %v1473
    %v1505 = vmul.f32 %v1473, %v1504
    %v1506 = vsub.f32 1.0, %v1505
    %v1507 = vmul.f32 %v1504, %v1506
    %v1508 = vadd.f32 %v1504, %v1507
    %vm1509 = vweird.f32 %v1473
    %vm1510 = vweird.f32 %v1504
    %vm1511 = vmor %vm1509, %vm1510
    %v1512 = vsel %vm1511, %v1504, %v1508
    %v1513 = vand.u32 2147483647, %v1473
    %vm1514 = vcmp.eq.f32.partialorder %v1513, 8.507059e+37
    %v1515 = vand.u32 %v1473, 2147483648
    %v1516 = vor.u32 1.1754944e-38, %v1515
    %v1517 = vsel %vm1514, %v1516, %v1512
    %v1518 = vmul.f32 1.0, %v1517
    %v1519 = vtanh.pop %v1370
    %v1520 = vtanh.pop %v1371
    %v1521 = vtanh.pop %v1372
    %v1522 = vmul.f32 %v1488, %v1519
    %v1523 = vmul.f32 %v1503, %v1520
    %v1524 = vmul.f32 %v1518, %v1521
    %v1525 = vadd.f32 %v1459, %v1522
    %v1526 = vadd.f32 %v1460, %v1523
    %v1527 = vadd.f32 %v1461, %v1524
    %v1528 = vxor.u32 %v1399, 2147483648
    %v1529 = vxor.u32 %v1400, 2147483648
    %v1530 = vxor.u32 %v1401, 2147483648
    %v1531 = vmul.f32 %v1528, 1.442695
    %v1532 = vpow.pop %v1531
    %v1533 = vmul.f32 %v1529, 1.442695
    %v1534 = vpow.pop %v1533
    %v1535 = vmul.f32 %v1530, 1.442695
    %v1536 = vpow.pop %v1535
    %v1537 = vadd.f32 %v1532, 1.0
    %v1538 = vadd.f32 %v1534, 1.0
    %v1539 = vadd.f32 %v1536, 1.0
    %v1540 = vrcp.pop %v1537
    %v1541 = vmul.f32 %v1537, %v1540
    %v1542 = vsub.f32 1.0, %v1541
    %v1543 = vmul.f32 %v1540, %v1542
    %v1544 = vadd.f32 %v1540, %v1543
    %vm1545 = vweird.f32 %v1537
    %vm1546 = vweird.f32 %v1540
    %vm1547 = vmor %vm1545, %vm1546
    %v1548 = vsel %vm1547, %v1540, %v1544
    %v1549 = vand.u32 2147483647, %v1537
    %vm1550 = vcmp.eq.f32.partialorder %v1549, 8.507059e+37
    %v1551 = vand.u32 %v1537, 2147483648
    %v1552 = vor.u32 1.1754944e-38, %v1551
    %v1553 = vsel %vm1550, %v1552, %v1548
    %v1554 = vmul.f32 1.0, %v1553
    %v1555 = vrcp.pop %v1538
    %v1556 = vmul.f32 %v1538, %v1555
    %v1557 = vsub.f32 1.0, %v1556
    %v1558 = vmul.f32 %v1555, %v1557
    %v1559 = vadd.f32 %v1555, %v1558
    %vm1560 = vweird.f32 %v1538
    %vm1561 = vweird.f32 %v1555
    %vm1562 = vmor %vm1560, %vm1561
    %v1563 = vsel %vm1562, %v1555, %v1559
    %v1564 = vand.u32 2147483647, %v1538
    %vm1565 = vcmp.eq.f32.partialorder %v1564, 8.507059e+37
    %v1566 = vand.u32 %v1538, 2147483648
    %v1567 = vor.u32 1.1754944e-38, %v1566
    %v1568 = vsel %vm1565, %v1567, %v1563
    %v1569 = vmul.f32 1.0, %v1568
    %v1570 = vrcp.pop %v1539
    %v1571 = vmul.f32 %v1539, %v1570
    %v1572 = vsub.f32 1.0, %v1571
    %v1573 = vmul.f32 %v1570, %v1572
    %v1574 = vadd.f32 %v1570, %v1573
    %vm1575 = vweird.f32 %v1539
    %vm1576 = vweird.f32 %v1570
    %vm1577 = vmor %vm1575, %vm1576
    %v1578 = vsel %vm1577, %v1570, %v1574
    %v1579 = vand.u32 2147483647, %v1539
    %vm1580 = vcmp.eq.f32.partialorder %v1579, 8.507059e+37
    %v1581 = vand.u32 %v1539, 2147483648
    %v1582 = vor.u32 1.1754944e-38, %v1581
    %v1583 = vsel %vm1580, %v1582, %v1578
    %v1584 = vmul.f32 1.0, %v1583
    %v1585 = vtanh.pop %v1525
    %v1586 = vtanh.pop %v1526
    %v1587 = vtanh.pop %v1527
    %v1588 = vmul.f32 %v1554, %v1585
    %v1589 = vmul.f32 %v1569, %v1586
    %v1590 = vmul.f32 %v1584, %v1587
    %v1592 = vsel %vm956, %v1588, 0
    %v1595 = vsel %vm956, %v1589, 0
    %v1598 = vsel %vm956, %v1590, 0
    %1600 = vmatpush.msra.mxu0 0.0
    %1601 = vmatpush.msra.mxu0 0.0
    %1602 = vmatpush.msra.mxu0 0.0
    %1603 = vmatpush.msra.mxu0 0.0
    %1604 = vmatpush.msra.mxu0 0.0
    %1605 = vmatpush.msra.mxu0 0.0
    %1606 = vmatpush.msra.mxu0 0.0
    %1607 = vmatpush.msra.mxu0 0.0
    %1608 = vmatpush.msra.mxu0 0.0
    %1609 = vmatpush.msra.mxu0 0.0
    %1610 = vmatpush.msra.mxu0 0.0
    %1611 = vmatpush.msra.mxu0 0.0
    %1612 = vmatpush.msra.mxu0 0.0
    %1613 = vmatpush.msra.mxu0 %v955
    %1614 = vmatpush.msra.mxu0 %v954
    %1615 = vmatpush.msra.mxu0 %v953
    %1616 = vmatmul.f32.gmra.mxu0 %v1592
    %v1617 = vpop.f32.mrf.mxu0
    %v1618 = vadd.f32 0.0, %v1617
    %1619 = vmatmul.f32.gmra.mxu0 %v1595
    %v1620 = vpop.f32.mrf.mxu0
    %v1621 = vadd.f32 0.0, %v1620
    %1622 = vmatmul.f32.gmra.mxu0 %v1598
    %v1623 = vpop.f32.mrf.mxu0
    %v1624 = vadd.f32 0.0, %v1623
    %1625 = vdwg.mxu0
    %v1626 = vadd.f32 %v753, %v1618
    %v1627 = vadd.f32 %v756, %v1621
    %v1628 = vadd.f32 %v759, %v1624
    %1629 = vmatpush.msra.mxu0 0.0
    %1630 = vmatpush.msra.mxu0 0.0
    %1631 = vmatpush.msra.mxu0 0.0
    %1632 = vmatpush.msra.mxu0 0.0
    %1633 = vmatpush.msra.mxu0 0.0
    %1634 = vmatpush.msra.mxu0 0.0
    %1635 = vmatpush.msra.mxu0 0.0
    %1636 = vmatpush.msra.mxu0 0.0
    %1637 = vmatpush.msra.mxu0 0.0
    %1638 = vmatpush.msra.mxu0 0.0
    %1639 = vmatpush.msra.mxu0 0.0
    %1640 = vmatpush.msra.mxu0 0.0
    %1641 = vmatpush.msra.mxu0 0.0
    %1642 = vmatpush.msra.mxu0 %v992
    %1643 = vmatpush.msra.mxu0 %v991
    %1644 = vmatpush.msra.mxu0 %v990
    %1645 = vmatmul.f32.gmra.mxu0 %v1592
    %v1646 = vpop.f32.mrf.mxu0
    %v1647 = vadd.f32 0.0, %v1646
    %1648 = vmatmul.f32.gmra.mxu0 %v1595
    %v1649 = vpop.f32.mrf.mxu0
    %v1650 = vadd.f32 0.0, %v1649
    %1651 = vmatmul.f32.gmra.mxu0 %v1598
    %v1652 = vpop.f32.mrf.mxu0
    %v1653 = vadd.f32 0.0, %v1652
    %1654 = vdwg.mxu0
    %v1655 = vadd.f32 %v814, %v1647
    %v1656 = vadd.f32 %v817, %v1650
    %v1657 = vadd.f32 %v820, %v1653
    %1658 = vmatpush.msra.mxu0 0.0
    %1659 = vmatpush.msra.mxu0 0.0
    %1660 = vmatpush.msra.mxu0 0.0
    %1661 = vmatpush.msra.mxu0 0.0
    %1662 = vmatpush.msra.mxu0 0.0
    %1663 = vmatpush.msra.mxu0 0.0
    %1664 = vmatpush.msra.mxu0 0.0
    %1665 = vmatpush.msra.mxu0 0.0
    %1666 = vmatpush.msra.mxu0 0.0
    %1667 = vmatpush.msra.mxu0 0.0
    %1668 = vmatpush.msra.mxu0 0.0
    %1669 = vmatpush.msra.mxu0 0.0
    %1670 = vmatpush.msra.mxu0 0.0
    %1671 = vmatpush.msra.mxu0 %v1025
    %1672 = vmatpush.msra.mxu0 %v1024
    %1673 = vmatpush.msra.mxu0 %v1023
    %1674 = vmatmul.f32.gmra.mxu0 %v1592
    %v1675 = vpop.f32.mrf.mxu0
    %v1676 = vadd.f32 0.0, %v1675
    %1677 = vmatmul.f32.gmra.mxu0 %v1595
    %v1678 = vpop.f32.mrf.mxu0
    %v1679 = vadd.f32 0.0, %v1678
    %1680 = vmatmul.f32.gmra.mxu0 %v1598
    %v1681 = vpop.f32.mrf.mxu0
    %v1682 = vadd.f32 0.0, %v1681
    %1683 = vdwg.mxu0
    %v1684 = vadd.f32 %v875, %v1676
    %v1685 = vadd.f32 %v878, %v1679
    %v1686 = vadd.f32 %v881, %v1682
    %1687 = vmatpush.msra.mxu0 0.0
    %1688 = vmatpush.msra.mxu0 0.0
    %1689 = vmatpush.msra.mxu0 0.0
    %1690 = vmatpush.msra.mxu0 0.0
    %1691 = vmatpush.msra.mxu0 0.0
    %1692 = vmatpush.msra.mxu0 0.0
    %1693 = vmatpush.msra.mxu0 0.0
    %1694 = vmatpush.msra.mxu0 0.0
    %1695 = vmatpush.msra.mxu0 0.0
    %1696 = vmatpush.msra.mxu0 0.0
    %1697 = vmatpush.msra.mxu0 0.0
    %1698 = vmatpush.msra.mxu0 0.0
    %1699 = vmatpush.msra.mxu0 0.0
    %1700 = vmatpush.msra.mxu0 %v1058
    %1701 = vmatpush.msra.mxu0 %v1057
    %1702 = vmatpush.msra.mxu0 %v1056
    %1703 = vmatmul.f32.gmra.mxu0 %v1592
    %v1704 = vpop.f32.mrf.mxu0
    %v1705 = vadd.f32 0.0, %v1704
    %1706 = vmatmul.f32.gmra.mxu0 %v1595
    %v1707 = vpop.f32.mrf.mxu0
    %v1708 = vadd.f32 0.0, %v1707
    %1709 = vmatmul.f32.gmra.mxu0 %v1598
    %v1710 = vpop.f32.mrf.mxu0
    %v1711 = vadd.f32 0.0, %v1710
    %1712 = vdwg.mxu0
    %v1713 = vadd.f32 %v936, %v1705
    %v1714 = vadd.f32 %v939, %v1708
    %v1715 = vadd.f32 %v942, %v1711
    %v1716 = vxor.u32 %v1655, 2147483648
    %v1717 = vxor.u32 %v1656, 2147483648
    %v1718 = vxor.u32 %v1657, 2147483648
    %v1719 = vmul.f32 %v1716, 1.442695
    %v1720 = vpow.pop %v1719
    %v1721 = vmul.f32 %v1717, 1.442695
    %v1722 = vpow.pop %v1721
    %v1723 = vmul.f32 %v1718, 1.442695
    %v1724 = vpow.pop %v1723
    %v1725 = vadd.f32 %v1720, 1.0
    %v1726 = vadd.f32 %v1722, 1.0
    %v1727 = vadd.f32 %v1724, 1.0
    %v1728 = vrcp.pop %v1725
    %v1729 = vmul.f32 %v1725, %v1728
    %v1730 = vsub.f32 1.0, %v1729
    %v1731 = vmul.f32 %v1728, %v1730
    %v1732 = vadd.f32 %v1728, %v1731
    %vm1733 = vweird.f32 %v1725
    %vm1734 = vweird.f32 %v1728
    %vm1735 = vmor %vm1733, %vm1734
    %v1736 = vsel %vm1735, %v1728, %v1732
    %v1737 = vand.u32 2147483647, %v1725
    %vm1738 = vcmp.eq.f32.partialorder %v1737, 8.507059e+37
    %v1739 = vand.u32 %v1725, 2147483648
    %v1740 = vor.u32 1.1754944e-38, %v1739
    %v1741 = vsel %vm1738, %v1740, %v1736
    %v1742 = vmul.f32 1.0, %v1741
    %v1743 = vrcp.pop %v1726
    %v1744 = vmul.f32 %v1726, %v1743
    %v1745 = vsub.f32 1.0, %v1744
    %v1746 = vmul.f32 %v1743, %v1745
    %v1747 = vadd.f32 %v1743, %v1746
    %vm1748 = vweird.f32 %v1726
    %vm1749 = vweird.f32 %v1743
    %vm1750 = vmor %vm1748, %vm1749
    %v1751 = vsel %vm1750, %v1743, %v1747
    %v1752 = vand.u32 2147483647, %v1726
    %vm1753 = vcmp.eq.f32.partialorder %v1752, 8.507059e+37
    %v1754 = vand.u32 %v1726, 2147483648
    %v1755 = vor.u32 1.1754944e-38, %v1754
    %v1756 = vsel %vm1753, %v1755, %v1751
    %v1757 = vmul.f32 1.0, %v1756
    %v1758 = vrcp.pop %v1727
    %v1759 = vmul.f32 %v1727, %v1758
    %v1760 = vsub.f32 1.0, %v1759
    %v1761 = vmul.f32 %v1758, %v1760
    %v1762 = vadd.f32 %v1758, %v1761
    %vm1763 = vweird.f32 %v1727
    %vm1764 = vweird.f32 %v1758
    %vm1765 = vmor %vm1763, %vm1764
    %v1766 = vsel %vm1765, %v1758, %v1762
    %v1767 = vand.u32 2147483647, %v1727
    %vm1768 = vcmp.eq.f32.partialorder %v1767, 8.507059e+37
    %v1769 = vand.u32 %v1727, 2147483648
    %v1770 = vor.u32 1.1754944e-38, %v1769
    %v1771 = vsel %vm1768, %v1770, %v1766
    %v1772 = vmul.f32 1.0, %v1771
    %v1773 = vmul.f32 %v1742, %v1525
    %v1774 = vmul.f32 %v1757, %v1526
    %v1775 = vmul.f32 %v1772, %v1527
    %v1776 = vxor.u32 %v1626, 2147483648
    %v1777 = vxor.u32 %v1627, 2147483648
    %v1778 = vxor.u32 %v1628, 2147483648
    %v1779 = vmul.f32 %v1776, 1.442695
    %v1780 = vpow.pop %v1779
    %v1781 = vmul.f32 %v1777, 1.442695
    %v1782 = vpow.pop %v1781
    %v1783 = vmul.f32 %v1778, 1.442695
    %v1784 = vpow.pop %v1783
    %v1785 = vadd.f32 %v1780, 1.0
    %v1786 = vadd.f32 %v1782, 1.0
    %v1787 = vadd.f32 %v1784, 1.0
    %v1788 = vrcp.pop %v1785
    %v1789 = vmul.f32 %v1785, %v1788
    %v1790 = vsub.f32 1.0, %v1789
    %v1791 = vmul.f32 %v1788, %v1790
    %v1792 = vadd.f32 %v1788, %v1791
    %vm1793 = vweird.f32 %v1785
    %vm1794 = vweird.f32 %v1788
    %vm1795 = vmor %vm1793, %vm1794
    %v1796 = vsel %vm1795, %v1788, %v1792
    %v1797 = vand.u32 2147483647, %v1785
    %vm1798 = vcmp.eq.f32.partialorder %v1797, 8.507059e+37
    %v1799 = vand.u32 %v1785, 2147483648
    %v1800 = vor.u32 1.1754944e-38, %v1799
    %v1801 = vsel %vm1798, %v1800, %v1796
    %v1802 = vmul.f32 1.0, %v1801
    %v1803 = vrcp.pop %v1786
    %v1804 = vmul.f32 %v1786, %v1803
    %v1805 = vsub.f32 1.0, %v1804
    %v1806 = vmul.f32 %v1803, %v1805
    %v1807 = vadd.f32 %v1803, %v1806
    %vm1808 = vweird.f32 %v1786
    %vm1809 = vweird.f32 %v1803
    %vm1810 = vmor %vm1808, %vm1809
    %v1811 = vsel %vm1810, %v1803, %v1807
    %v1812 = vand.u32 2147483647, %v1786
    %vm1813 = vcmp.eq.f32.partialorder %v1812, 8.507059e+37
    %v1814 = vand.u32 %v1786, 2147483648
    %v1815 = vor.u32 1.1754944e-38, %v1814
    %v1816 = vsel %vm1813, %v1815, %v1811
    %v1817 = vmul.f32 1.0, %v1816
    %v1818 = vrcp.pop %v1787
    %v1819 = vmul.f32 %v1787, %v1818
    %v1820 = vsub.f32 1.0, %v1819
    %v1821 = vmul.f32 %v1818, %v1820
    %v1822 = vadd.f32 %v1818, %v1821
    %vm1823 = vweird.f32 %v1787
    %vm1824 = vweird.f32 %v1818
    %vm1825 = vmor %vm1823, %vm1824
    %v1826 = vsel %vm1825, %v1818, %v1822
    %v1827 = vand.u32 2147483647, %v1787
    %vm1828 = vcmp.eq.f32.partialorder %v1827, 8.507059e+37
    %v1829 = vand.u32 %v1787, 2147483648
    %v1830 = vor.u32 1.1754944e-38, %v1829
    %v1831 = vsel %vm1828, %v1830, %v1826
    %v1832 = vmul.f32 1.0, %v1831
    %v1833 = vtanh.pop %v1684
    %v1834 = vtanh.pop %v1685
    %v1835 = vtanh.pop %v1686
    %v1836 = vmul.f32 %v1802, %v1833
    %v1837 = vmul.f32 %v1817, %v1834
    %v1838 = vmul.f32 %v1832, %v1835
    %v1839 = vadd.f32 %v1773, %v1836
    %v1840 = vadd.f32 %v1774, %v1837
    %v1841 = vadd.f32 %v1775, %v1838
    %v1842 = vxor.u32 %v1713, 2147483648
    %v1843 = vxor.u32 %v1714, 2147483648
    %v1844 = vxor.u32 %v1715, 2147483648
    %v1845 = vmul.f32 %v1842, 1.442695
    %v1846 = vpow.pop %v1845
    %v1847 = vmul.f32 %v1843, 1.442695
    %v1848 = vpow.pop %v1847
    %v1849 = vmul.f32 %v1844, 1.442695
    %v1850 = vpow.pop %v1849
    %v1851 = vadd.f32 %v1846, 1.0
    %v1852 = vadd.f32 %v1848, 1.0
    %v1853 = vadd.f32 %v1850, 1.0
    %v1854 = vrcp.pop %v1851
    %v1855 = vmul.f32 %v1851, %v1854
    %v1856 = vsub.f32 1.0, %v1855
    %v1857 = vmul.f32 %v1854, %v1856
    %v1858 = vadd.f32 %v1854, %v1857
    %vm1859 = vweird.f32 %v1851
    %vm1860 = vweird.f32 %v1854
    %vm1861 = vmor %vm1859, %vm1860
    %v1862 = vsel %vm1861, %v1854, %v1858
    %v1863 = vand.u32 2147483647, %v1851
    %vm1864 = vcmp.eq.f32.partialorder %v1863, 8.507059e+37
    %v1865 = vand.u32 %v1851, 2147483648
    %v1866 = vor.u32 1.1754944e-38, %v1865
    %v1867 = vsel %vm1864, %v1866, %v1862
    %v1868 = vmul.f32 1.0, %v1867
    %v1869 = vrcp.pop %v1852
    %v1870 = vmul.f32 %v1852, %v1869
    %v1871 = vsub.f32 1.0, %v1870
    %v1872 = vmul.f32 %v1869, %v1871
    %v1873 = vadd.f32 %v1869, %v1872
    %vm1874 = vweird.f32 %v1852
    %vm1875 = vweird.f32 %v1869
    %vm1876 = vmor %vm1874, %vm1875
    %v1877 = vsel %vm1876, %v1869, %v1873
    %v1878 = vand.u32 2147483647, %v1852
    %vm1879 = vcmp.eq.f32.partialorder %v1878, 8.507059e+37
    %v1880 = vand.u32 %v1852, 2147483648
    %v1881 = vor.u32 1.1754944e-38, %v1880
    %v1882 = vsel %vm1879, %v1881, %v1877
    %v1883 = vmul.f32 1.0, %v1882
    %v1884 = vrcp.pop %v1853
    %v1885 = vmul.f32 %v1853, %v1884
    %v1886 = vsub.f32 1.0, %v1885
    %v1887 = vmul.f32 %v1884, %v1886
    %v1888 = vadd.f32 %v1884, %v1887
    %vm1889 = vweird.f32 %v1853
    %vm1890 = vweird.f32 %v1884
    %vm1891 = vmor %vm1889, %vm1890
    %v1892 = vsel %vm1891, %v1884, %v1888
    %v1893 = vand.u32 2147483647, %v1853
    %vm1894 = vcmp.eq.f32.partialorder %v1893, 8.507059e+37
    %v1895 = vand.u32 %v1853, 2147483648
    %v1896 = vor.u32 1.1754944e-38, %v1895
    %v1897 = vsel %vm1894, %v1896, %v1892
    %v1898 = vmul.f32 1.0, %v1897
    %v1899 = vtanh.pop %v1839
    %v1900 = vtanh.pop %v1840
    %v1901 = vtanh.pop %v1841
    %v1902 = vmul.f32 %v1868, %v1899
    %v1903 = vmul.f32 %v1883, %v1900
    %v1904 = vmul.f32 %v1898, %v1901
    %v1906 = vsel %vm956, %v1902, 0
    %v1909 = vsel %vm956, %v1903, 0
    %v1912 = vsel %vm956, %v1904, 0
    %1914 = vmatpush.msra.mxu0 0.0
    %1915 = vmatpush.msra.mxu0 0.0
    %1916 = vmatpush.msra.mxu0 0.0
    %1917 = vmatpush.msra.mxu0 0.0
    %1918 = vmatpush.msra.mxu0 0.0
    %1919 = vmatpush.msra.mxu0 0.0
    %1920 = vmatpush.msra.mxu0 0.0
    %1921 = vmatpush.msra.mxu0 0.0
    %1922 = vmatpush.msra.mxu0 0.0
    %1923 = vmatpush.msra.mxu0 0.0
    %1924 = vmatpush.msra.mxu0 0.0
    %1925 = vmatpush.msra.mxu0 0.0
    %1926 = vmatpush.msra.mxu0 0.0
    %1927 = vmatpush.msra.mxu0 %v955
    %1928 = vmatpush.msra.mxu0 %v954
    %1929 = vmatpush.msra.mxu0 %v953
    %1930 = vmatmul.f32.gmra.mxu0 %v1906
    %v1931 = vpop.f32.mrf.mxu0
    %v1932 = vadd.f32 0.0, %v1931
    %1933 = vmatmul.f32.gmra.mxu0 %v1909
    %v1934 = vpop.f32.mrf.mxu0
    %v1935 = vadd.f32 0.0, %v1934
    %1936 = vmatmul.f32.gmra.mxu0 %v1912
    %v1937 = vpop.f32.mrf.mxu0
    %v1938 = vadd.f32 0.0, %v1937
    %1939 = vdwg.mxu0
    %v1940 = vadd.f32 %v762, %v1932
    %v1941 = vadd.f32 %v765, %v1935
    %v1942 = vadd.f32 %v768, %v1938
    %1943 = vmatpush.msra.mxu0 0.0
    %1944 = vmatpush.msra.mxu0 0.0
    %1945 = vmatpush.msra.mxu0 0.0
    %1946 = vmatpush.msra.mxu0 0.0
    %1947 = vmatpush.msra.mxu0 0.0
    %1948 = vmatpush.msra.mxu0 0.0
    %1949 = vmatpush.msra.mxu0 0.0
    %1950 = vmatpush.msra.mxu0 0.0
    %1951 = vmatpush.msra.mxu0 0.0
    %1952 = vmatpush.msra.mxu0 0.0
    %1953 = vmatpush.msra.mxu0 0.0
    %1954 = vmatpush.msra.mxu0 0.0
    %1955 = vmatpush.msra.mxu0 0.0
    %1956 = vmatpush.msra.mxu0 %v992
    %1957 = vmatpush.msra.mxu0 %v991
    %1958 = vmatpush.msra.mxu0 %v990
    %1959 = vmatmul.f32.gmra.mxu0 %v1906
    %v1960 = vpop.f32.mrf.mxu0
    %v1961 = vadd.f32 0.0, %v1960
    %1962 = vmatmul.f32.gmra.mxu0 %v1909
    %v1963 = vpop.f32.mrf.mxu0
    %v1964 = vadd.f32 0.0, %v1963
    %1965 = vmatmul.f32.gmra.mxu0 %v1912
    %v1966 = vpop.f32.mrf.mxu0
    %v1967 = vadd.f32 0.0, %v1966
    %1968 = vdwg.mxu0
    %v1969 = vadd.f32 %v823, %v1961
    %v1970 = vadd.f32 %v826, %v1964
    %v1971 = vadd.f32 %v829, %v1967
    %1972 = vmatpush.msra.mxu0 0.0
    %1973 = vmatpush.msra.mxu0 0.0
    %1974 = vmatpush.msra.mxu0 0.0
    %1975 = vmatpush.msra.mxu0 0.0
    %1976 = vmatpush.msra.mxu0 0.0
    %1977 = vmatpush.msra.mxu0 0.0
    %1978 = vmatpush.msra.mxu0 0.0
    %1979 = vmatpush.msra.mxu0 0.0
    %1980 = vmatpush.msra.mxu0 0.0
    %1981 = vmatpush.msra.mxu0 0.0
    %1982 = vmatpush.msra.mxu0 0.0
    %1983 = vmatpush.msra.mxu0 0.0
    %1984 = vmatpush.msra.mxu0 0.0
    %1985 = vmatpush.msra.mxu0 %v1025
    %1986 = vmatpush.msra.mxu0 %v1024
    %1987 = vmatpush.msra.mxu0 %v1023
    %1988 = vmatmul.f32.gmra.mxu0 %v1906
    %v1989 = vpop.f32.mrf.mxu0
    %v1990 = vadd.f32 0.0, %v1989
    %1991 = vmatmul.f32.gmra.mxu0 %v1909
    %v1992 = vpop.f32.mrf.mxu0
    %v1993 = vadd.f32 0.0, %v1992
    %1994 = vmatmul.f32.gmra.mxu0 %v1912
    %v1995 = vpop.f32.mrf.mxu0
    %v1996 = vadd.f32 0.0, %v1995
    %1997 = vdwg.mxu0
    %v1998 = vadd.f32 %v884, %v1990
    %v1999 = vadd.f32 %v887, %v1993
    %v2000 = vadd.f32 %v890, %v1996
    %2001 = vmatpush.msra.mxu0 0.0
    %2002 = vmatpush.msra.mxu0 0.0
    %2003 = vmatpush.msra.mxu0 0.0
    %2004 = vmatpush.msra.mxu0 0.0
    %2005 = vmatpush.msra.mxu0 0.0
    %2006 = vmatpush.msra.mxu0 0.0
    %2007 = vmatpush.msra.mxu0 0.0
    %2008 = vmatpush.msra.mxu0 0.0
    %2009 = vmatpush.msra.mxu0 0.0
    %2010 = vmatpush.msra.mxu0 0.0
    %2011 = vmatpush.msra.mxu0 0.0
    %2012 = vmatpush.msra.mxu0 0.0
    %2013 = vmatpush.msra.mxu0 0.0
    %2014 = vmatpush.msra.mxu0 %v1058
    %2015 = vmatpush.msra.mxu0 %v1057
    %2016 = vmatpush.msra.mxu0 %v1056
    %2017 = vmatmul.f32.gmra.mxu0 %v1906
    %v2018 = vpop.f32.mrf.mxu0
    %v2019 = vadd.f32 0.0, %v2018
    %2020 = vmatmul.f32.gmra.mxu0 %v1909
    %v2021 = vpop.f32.mrf.mxu0
    %v2022 = vadd.f32 0.0, %v2021
    %2023 = vmatmul.f32.gmra.mxu0 %v1912
    %v2024 = vpop.f32.mrf.mxu0
    %v2025 = vadd.f32 0.0, %v2024
    %2026 = vdwg.mxu0
    %v2027 = vadd.f32 %v945, %v2019
    %v2028 = vadd.f32 %v948, %v2022
    %v2029 = vadd.f32 %v951, %v2025
    %v2030 = vxor.u32 %v1969, 2147483648
    %v2031 = vxor.u32 %v1970, 2147483648
    %v2032 = vxor.u32 %v1971, 2147483648
    %v2033 = vmul.f32 %v2030, 1.442695
    %v2034 = vpow.pop %v2033
    %v2035 = vmul.f32 %v2031, 1.442695
    %v2036 = vpow.pop %v2035
    %v2037 = vmul.f32 %v2032, 1.442695
    %v2038 = vpow.pop %v2037
    %v2039 = vadd.f32 %v2034, 1.0
    %v2040 = vadd.f32 %v2036, 1.0
    %v2041 = vadd.f32 %v2038, 1.0
    %v2042 = vrcp.pop %v2039
    %v2043 = vmul.f32 %v2039, %v2042
    %v2044 = vsub.f32 1.0, %v2043
    %v2045 = vmul.f32 %v2042, %v2044
    %v2046 = vadd.f32 %v2042, %v2045
    %vm2047 = vweird.f32 %v2039
    %vm2048 = vweird.f32 %v2042
    %vm2049 = vmor %vm2047, %vm2048
    %v2050 = vsel %vm2049, %v2042, %v2046
    %v2051 = vand.u32 2147483647, %v2039
    %vm2052 = vcmp.eq.f32.partialorder %v2051, 8.507059e+37
    %v2053 = vand.u32 %v2039, 2147483648
    %v2054 = vor.u32 1.1754944e-38, %v2053
    %v2055 = vsel %vm2052, %v2054, %v2050
    %v2056 = vmul.f32 1.0, %v2055
    %v2057 = vrcp.pop %v2040
    %v2058 = vmul.f32 %v2040, %v2057
    %v2059 = vsub.f32 1.0, %v2058
    %v2060 = vmul.f32 %v2057, %v2059
    %v2061 = vadd.f32 %v2057, %v2060
    %vm2062 = vweird.f32 %v2040
    %vm2063 = vweird.f32 %v2057
    %vm2064 = vmor %vm2062, %vm2063
    %v2065 = vsel %vm2064, %v2057, %v2061
    %v2066 = vand.u32 2147483647, %v2040
    %vm2067 = vcmp.eq.f32.partialorder %v2066, 8.507059e+37
    %v2068 = vand.u32 %v2040, 2147483648
    %v2069 = vor.u32 1.1754944e-38, %v2068
    %v2070 = vsel %vm2067, %v2069, %v2065
    %v2071 = vmul.f32 1.0, %v2070
    %v2072 = vrcp.pop %v2041
    %v2073 = vmul.f32 %v2041, %v2072
    %v2074 = vsub.f32 1.0, %v2073
    %v2075 = vmul.f32 %v2072, %v2074
    %v2076 = vadd.f32 %v2072, %v2075
    %vm2077 = vweird.f32 %v2041
    %vm2078 = vweird.f32 %v2072
    %vm2079 = vmor %vm2077, %vm2078
    %v2080 = vsel %vm2079, %v2072, %v2076
    %v2081 = vand.u32 2147483647, %v2041
    %vm2082 = vcmp.eq.f32.partialorder %v2081, 8.507059e+37
    %v2083 = vand.u32 %v2041, 2147483648
    %v2084 = vor.u32 1.1754944e-38, %v2083
    %v2085 = vsel %vm2082, %v2084, %v2080
    %v2086 = vmul.f32 1.0, %v2085
    %v2087 = vmul.f32 %v2056, %v1839
    %v2088 = vmul.f32 %v2071, %v1840
    %v2089 = vmul.f32 %v2086, %v1841
    %v2090 = vxor.u32 %v1940, 2147483648
    %v2091 = vxor.u32 %v1941, 2147483648
    %v2092 = vxor.u32 %v1942, 2147483648
    %v2093 = vmul.f32 %v2090, 1.442695
    %v2094 = vpow.pop %v2093
    %v2095 = vmul.f32 %v2091, 1.442695
    %v2096 = vpow.pop %v2095
    %v2097 = vmul.f32 %v2092, 1.442695
    %v2098 = vpow.pop %v2097
    %v2099 = vadd.f32 %v2094, 1.0
    %v2100 = vadd.f32 %v2096, 1.0
    %v2101 = vadd.f32 %v2098, 1.0
    %v2102 = vrcp.pop %v2099
    %v2103 = vmul.f32 %v2099, %v2102
    %v2104 = vsub.f32 1.0, %v2103
    %v2105 = vmul.f32 %v2102, %v2104
    %v2106 = vadd.f32 %v2102, %v2105
    %vm2107 = vweird.f32 %v2099
    %vm2108 = vweird.f32 %v2102
    %vm2109 = vmor %vm2107, %vm2108
    %v2110 = vsel %vm2109, %v2102, %v2106
    %v2111 = vand.u32 2147483647, %v2099
    %vm2112 = vcmp.eq.f32.partialorder %v2111, 8.507059e+37
    %v2113 = vand.u32 %v2099, 2147483648
    %v2114 = vor.u32 1.1754944e-38, %v2113
    %v2115 = vsel %vm2112, %v2114, %v2110
    %v2116 = vmul.f32 1.0, %v2115
    %v2117 = vrcp.pop %v2100
    %v2118 = vmul.f32 %v2100, %v2117
    %v2119 = vsub.f32 1.0, %v2118
    %v2120 = vmul.f32 %v2117, %v2119
    %v2121 = vadd.f32 %v2117, %v2120
    %vm2122 = vweird.f32 %v2100
    %vm2123 = vweird.f32 %v2117
    %vm2124 = vmor %vm2122, %vm2123
    %v2125 = vsel %vm2124, %v2117, %v2121
    %v2126 = vand.u32 2147483647, %v2100
    %vm2127 = vcmp.eq.f32.partialorder %v2126, 8.507059e+37
    %v2128 = vand.u32 %v2100, 2147483648
    %v2129 = vor.u32 1.1754944e-38, %v2128
    %v2130 = vsel %vm2127, %v2129, %v2125
    %v2131 = vmul.f32 1.0, %v2130
    %v2132 = vrcp.pop %v2101
    %v2133 = vmul.f32 %v2101, %v2132
    %v2134 = vsub.f32 1.0, %v2133
    %v2135 = vmul.f32 %v2132, %v2134
    %v2136 = vadd.f32 %v2132, %v2135
    %vm2137 = vweird.f32 %v2101
    %vm2138 = vweird.f32 %v2132
    %vm2139 = vmor %vm2137, %vm2138
    %v2140 = vsel %vm2139, %v2132, %v2136
    %v2141 = vand.u32 2147483647, %v2101
    %vm2142 = vcmp.eq.f32.partialorder %v2141, 8.507059e+37
    %v2143 = vand.u32 %v2101, 2147483648
    %v2144 = vor.u32 1.1754944e-38, %v2143
    %v2145 = vsel %vm2142, %v2144, %v2140
    %v2146 = vmul.f32 1.0, %v2145
    %v2147 = vtanh.pop %v1998
    %v2148 = vtanh.pop %v1999
    %v2149 = vtanh.pop %v2000
    %v2150 = vmul.f32 %v2116, %v2147
    %v2151 = vmul.f32 %v2131, %v2148
    %v2152 = vmul.f32 %v2146, %v2149
    %v2153 = vadd.f32 %v2087, %v2150
    %v2154 = vadd.f32 %v2088, %v2151
    %v2155 = vadd.f32 %v2089, %v2152
    %v2156 = vxor.u32 %v2027, 2147483648
    %v2157 = vxor.u32 %v2028, 2147483648
    %v2158 = vxor.u32 %v2029, 2147483648
    %v2159 = vmul.f32 %v2156, 1.442695
    %v2160 = vpow.pop %v2159
    %v2161 = vmul.f32 %v2157, 1.442695
    %v2162 = vpow.pop %v2161
    %v2163 = vmul.f32 %v2158, 1.442695
    %v2164 = vpow.pop %v2163
    %v2165 = vadd.f32 %v2160, 1.0
    %v2166 = vadd.f32 %v2162, 1.0
    %v2167 = vadd.f32 %v2164, 1.0
    %v2168 = vrcp.pop %v2165
    %v2169 = vmul.f32 %v2165, %v2168
    %v2170 = vsub.f32 1.0, %v2169
    %v2171 = vmul.f32 %v2168, %v2170
    %v2172 = vadd.f32 %v2168, %v2171
    %vm2173 = vweird.f32 %v2165
    %vm2174 = vweird.f32 %v2168
    %vm2175 = vmor %vm2173, %vm2174
    %v2176 = vsel %vm2175, %v2168, %v2172
    %v2177 = vand.u32 2147483647, %v2165
    %vm2178 = vcmp.eq.f32.partialorder %v2177, 8.507059e+37
    %v2179 = vand.u32 %v2165, 2147483648
    %v2180 = vor.u32 1.1754944e-38, %v2179
    %v2181 = vsel %vm2178, %v2180, %v2176
    %v2182 = vmul.f32 1.0, %v2181
    %v2183 = vrcp.pop %v2166
    %v2184 = vmul.f32 %v2166, %v2183
    %v2185 = vsub.f32 1.0, %v2184
    %v2186 = vmul.f32 %v2183, %v2185
    %v2187 = vadd.f32 %v2183, %v2186
    %vm2188 = vweird.f32 %v2166
    %vm2189 = vweird.f32 %v2183
    %vm2190 = vmor %vm2188, %vm2189
    %v2191 = vsel %vm2190, %v2183, %v2187
    %v2192 = vand.u32 2147483647, %v2166
    %vm2193 = vcmp.eq.f32.partialorder %v2192, 8.507059e+37
    %v2194 = vand.u32 %v2166, 2147483648
    %v2195 = vor.u32 1.1754944e-38, %v2194
    %v2196 = vsel %vm2193, %v2195, %v2191
    %v2197 = vmul.f32 1.0, %v2196
    %v2198 = vrcp.pop %v2167
    %v2199 = vmul.f32 %v2167, %v2198
    %v2200 = vsub.f32 1.0, %v2199
    %v2201 = vmul.f32 %v2198, %v2200
    %v2202 = vadd.f32 %v2198, %v2201
    %vm2203 = vweird.f32 %v2167
    %vm2204 = vweird.f32 %v2198
    %vm2205 = vmor %vm2203, %vm2204
    %v2206 = vsel %vm2205, %v2198, %v2202
    %v2207 = vand.u32 2147483647, %v2167
    %vm2208 = vcmp.eq.f32.partialorder %v2207, 8.507059e+37
    %v2209 = vand.u32 %v2167, 2147483648
    %v2210 = vor.u32 1.1754944e-38, %v2209
    %v2211 = vsel %vm2208, %v2210, %v2206
    %v2212 = vmul.f32 1.0, %v2211
    %v2213 = vtanh.pop %v2153
    %v2214 = vtanh.pop %v2154
    %v2215 = vtanh.pop %v2155
    %v2216 = vmul.f32 %v2182, %v2213
    %v2217 = vmul.f32 %v2197, %v2214
    %v2218 = vmul.f32 %v2212, %v2215
    %v2219 = vld [vmem:[%s8] sm:$0xff]
    %v2220 = vld [vmem:[%s8 + $0x8] sm:$0xff]
    %v2221 = vld [vmem:[%s10] sm:$0x1]
    %v2223 = vperm.slane %v2221, 0
    %2225 = vmatpush.msra.mxu0 0.0
    %2226 = vmatpush.msra.mxu0 0.0
    %2227 = vmatpush.msra.mxu0 0.0
    %2228 = vmatpush.msra.mxu0 0.0
    %2229 = vmatpush.msra.mxu0 0.0
    %2230 = vmatpush.msra.mxu0 0.0
    %2231 = vmatpush.msra.mxu0 0.0
    %2232 = vmatpush.msra.mxu0 0.0
    %2233 = vmatpush.msra.mxu0 0.0
    %2234 = vmatpush.msra.mxu0 0.0
    %2235 = vmatpush.msra.mxu0 0.0
    %2236 = vmatpush.msra.mxu0 0.0
    %2237 = vmatpush.msra.mxu0 0.0
    %2238 = vmatpush.msra.mxu0 0.0
    %2239 = vmatpush.msra.mxu0 %v2220
    %2240 = vmatpush.msra.mxu0 %v2219
    %2241 = vmatmul.f32.gmra.mxu0 %v75
    %v2242 = vpop.f32.mrf.mxu0
    %v2243 = vadd.f32 %v2223, %v2242
    %2244 = vmatmul.f32.gmra.mxu0 %v78
    %v2245 = vpop.f32.mrf.mxu0
    %v2246 = vadd.f32 %v2223, %v2245
    %2247 = vmatmul.f32.gmra.mxu0 %v81
    %v2248 = vpop.f32.mrf.mxu0
    %v2249 = vadd.f32 %v2223, %v2248
    %2250 = vmatmul.f32.gmra.mxu0 %v285
    %v2251 = vpop.f32.mrf.mxu0
    %v2252 = vadd.f32 %v2223, %v2251
    %2253 = vmatmul.f32.gmra.mxu0 %v288
    %v2254 = vpop.f32.mrf.mxu0
    %v2255 = vadd.f32 %v2223, %v2254
    %2256 = vmatmul.f32.gmra.mxu0 %v291
    %v2257 = vpop.f32.mrf.mxu0
    %v2258 = vadd.f32 %v2223, %v2257
    %2259 = vmatmul.f32.gmra.mxu0 %v497
    %v2260 = vpop.f32.mrf.mxu0
    %v2261 = vadd.f32 %v2223, %v2260
    %2262 = vmatmul.f32.gmra.mxu0 %v500
    %v2263 = vpop.f32.mrf.mxu0
    %v2264 = vadd.f32 %v2223, %v2263
    %2265 = vmatmul.f32.gmra.mxu0 %v503
    %v2266 = vpop.f32.mrf.mxu0
    %v2267 = vadd.f32 %v2223, %v2266
    %2268 = vmatmul.f32.gmra.mxu0 %v709
    %v2269 = vpop.f32.mrf.mxu0
    %v2270 = vadd.f32 %v2223, %v2269
    %2271 = vmatmul.f32.gmra.mxu0 %v712
    %v2272 = vpop.f32.mrf.mxu0
    %v2273 = vadd.f32 %v2223, %v2272
    %2274 = vmatmul.f32.gmra.mxu0 %v715
    %v2275 = vpop.f32.mrf.mxu0
    %v2276 = vadd.f32 %v2223, %v2275
    %2277 = vdwg.mxu0
    %s2278 = scalar_lea.vmem %s8, 16
    %v2279 = vld [vmem:[%s2278] sm:$0xff]
    %v2280 = vld [vmem:[%s2278 + $0x8] sm:$0xff]
    %s2281 = scalar_lea.vmem %s10, 1
    %v2282 = vld [vmem:[%s2281] sm:$0x1]
    %v2284 = vperm.slane %v2282, 0
    %2286 = vmatpush.msra.mxu0 0.0
    %2287 = vmatpush.msra.mxu0 0.0
    %2288 = vmatpush.msra.mxu0 0.0
    %2289 = vmatpush.msra.mxu0 0.0
    %2290 = vmatpush.msra.mxu0 0.0
    %2291 = vmatpush.msra.mxu0 0.0
    %2292 = vmatpush.msra.mxu0 0.0
    %2293 = vmatpush.msra.mxu0 0.0
    %2294 = vmatpush.msra.mxu0 0.0
    %2295 = vmatpush.msra.mxu0 0.0
    %2296 = vmatpush.msra.mxu0 0.0
    %2297 = vmatpush.msra.mxu0 0.0
    %2298 = vmatpush.msra.mxu0 0.0
    %2299 = vmatpush.msra.mxu0 0.0
    %2300 = vmatpush.msra.mxu0 %v2280
    %2301 = vmatpush.msra.mxu0 %v2279
    %2302 = vmatmul.f32.gmra.mxu0 %v75
    %v2303 = vpop.f32.mrf.mxu0
    %v2304 = vadd.f32 %v2284, %v2303
    %2305 = vmatmul.f32.gmra.mxu0 %v78
    %v2306 = vpop.f32.mrf.mxu0
    %v2307 = vadd.f32 %v2284, %v2306
    %2308 = vmatmul.f32.gmra.mxu0 %v81
    %v2309 = vpop.f32.mrf.mxu0
    %v2310 = vadd.f32 %v2284, %v2309
    %2311 = vmatmul.f32.gmra.mxu0 %v285
    %v2312 = vpop.f32.mrf.mxu0
    %v2313 = vadd.f32 %v2284, %v2312
    %2314 = vmatmul.f32.gmra.mxu0 %v288
    %v2315 = vpop.f32.mrf.mxu0
    %v2316 = vadd.f32 %v2284, %v2315
    %2317 = vmatmul.f32.gmra.mxu0 %v291
    %v2318 = vpop.f32.mrf.mxu0
    %v2319 = vadd.f32 %v2284, %v2318
    %2320 = vmatmul.f32.gmra.mxu0 %v497
    %v2321 = vpop.f32.mrf.mxu0
    %v2322 = vadd.f32 %v2284, %v2321
    %2323 = vmatmul.f32.gmra.mxu0 %v500
    %v2324 = vpop.f32.mrf.mxu0
    %v2325 = vadd.f32 %v2284, %v2324
    %2326 = vmatmul.f32.gmra.mxu0 %v503
    %v2327 = vpop.f32.mrf.mxu0
    %v2328 = vadd.f32 %v2284, %v2327
    %2329 = vmatmul.f32.gmra.mxu0 %v709
    %v2330 = vpop.f32.mrf.mxu0
    %v2331 = vadd.f32 %v2284, %v2330
    %2332 = vmatmul.f32.gmra.mxu0 %v712
    %v2333 = vpop.f32.mrf.mxu0
    %v2334 = vadd.f32 %v2284, %v2333
    %2335 = vmatmul.f32.gmra.mxu0 %v715
    %v2336 = vpop.f32.mrf.mxu0
    %v2337 = vadd.f32 %v2284, %v2336
    %2338 = vdwg.mxu0
    %s2339 = scalar_lea.vmem %s8, 32
    %v2340 = vld [vmem:[%s2339] sm:$0xff]
    %v2341 = vld [vmem:[%s2339 + $0x8] sm:$0xff]
    %s2342 = scalar_lea.vmem %s10, 2
    %v2343 = vld [vmem:[%s2342] sm:$0x1]
    %v2345 = vperm.slane %v2343, 0
    %2347 = vmatpush.msra.mxu0 0.0
    %2348 = vmatpush.msra.mxu0 0.0
    %2349 = vmatpush.msra.mxu0 0.0
    %2350 = vmatpush.msra.mxu0 0.0
    %2351 = vmatpush.msra.mxu0 0.0
    %2352 = vmatpush.msra.mxu0 0.0
    %2353 = vmatpush.msra.mxu0 0.0
    %2354 = vmatpush.msra.mxu0 0.0
    %2355 = vmatpush.msra.mxu0 0.0
    %2356 = vmatpush.msra.mxu0 0.0
    %2357 = vmatpush.msra.mxu0 0.0
    %2358 = vmatpush.msra.mxu0 0.0
    %2359 = vmatpush.msra.mxu0 0.0
    %2360 = vmatpush.msra.mxu0 0.0
    %2361 = vmatpush.msra.mxu0 %v2341
    %2362 = vmatpush.msra.mxu0 %v2340
    %2363 = vmatmul.f32.gmra.mxu0 %v75
    %v2364 = vpop.f32.mrf.mxu0
    %v2365 = vadd.f32 %v2345, %v2364
    %2366 = vmatmul.f32.gmra.mxu0 %v78
    %v2367 = vpop.f32.mrf.mxu0
    %v2368 = vadd.f32 %v2345, %v2367
    %2369 = vmatmul.f32.gmra.mxu0 %v81
    %v2370 = vpop.f32.mrf.mxu0
    %v2371 = vadd.f32 %v2345, %v2370
    %2372 = vmatmul.f32.gmra.mxu0 %v285
    %v2373 = vpop.f32.mrf.mxu0
    %v2374 = vadd.f32 %v2345, %v2373
    %2375 = vmatmul.f32.gmra.mxu0 %v288
    %v2376 = vpop.f32.mrf.mxu0
    %v2377 = vadd.f32 %v2345, %v2376
    %2378 = vmatmul.f32.gmra.mxu0 %v291
    %v2379 = vpop.f32.mrf.mxu0
    %v2380 = vadd.f32 %v2345, %v2379
    %2381 = vmatmul.f32.gmra.mxu0 %v497
    %v2382 = vpop.f32.mrf.mxu0
    %v2383 = vadd.f32 %v2345, %v2382
    %2384 = vmatmul.f32.gmra.mxu0 %v500
    %v2385 = vpop.f32.mrf.mxu0
    %v2386 = vadd.f32 %v2345, %v2385
    %2387 = vmatmul.f32.gmra.mxu0 %v503
    %v2388 = vpop.f32.mrf.mxu0
    %v2389 = vadd.f32 %v2345, %v2388
    %2390 = vmatmul.f32.gmra.mxu0 %v709
    %v2391 = vpop.f32.mrf.mxu0
    %v2392 = vadd.f32 %v2345, %v2391
    %2393 = vmatmul.f32.gmra.mxu0 %v712
    %v2394 = vpop.f32.mrf.mxu0
    %v2395 = vadd.f32 %v2345, %v2394
    %2396 = vmatmul.f32.gmra.mxu0 %v715
    %v2397 = vpop.f32.mrf.mxu0
    %v2398 = vadd.f32 %v2345, %v2397
    %2399 = vdwg.mxu0
    %s2400 = scalar_lea.vmem %s8, 48
    %v2401 = vld [vmem:[%s2400] sm:$0xff]
    %v2402 = vld [vmem:[%s2400 + $0x8] sm:$0xff]
    %s2403 = scalar_lea.vmem %s10, 3
    %v2404 = vld [vmem:[%s2403] sm:$0x1]
    %v2406 = vperm.slane %v2404, 0
    %2408 = vmatpush.msra.mxu0 0.0
    %2409 = vmatpush.msra.mxu0 0.0
    %2410 = vmatpush.msra.mxu0 0.0
    %2411 = vmatpush.msra.mxu0 0.0
    %2412 = vmatpush.msra.mxu0 0.0
    %2413 = vmatpush.msra.mxu0 0.0
    %2414 = vmatpush.msra.mxu0 0.0
    %2415 = vmatpush.msra.mxu0 0.0
    %2416 = vmatpush.msra.mxu0 0.0
    %2417 = vmatpush.msra.mxu0 0.0
    %2418 = vmatpush.msra.mxu0 0.0
    %2419 = vmatpush.msra.mxu0 0.0
    %2420 = vmatpush.msra.mxu0 0.0
    %2421 = vmatpush.msra.mxu0 0.0
    %2422 = vmatpush.msra.mxu0 %v2402
    %2423 = vmatpush.msra.mxu0 %v2401
    %2424 = vmatmul.f32.gmra.mxu0 %v75
    %v2425 = vpop.f32.mrf.mxu0
    %v2426 = vadd.f32 %v2406, %v2425
    %2427 = vmatmul.f32.gmra.mxu0 %v78
    %v2428 = vpop.f32.mrf.mxu0
    %v2429 = vadd.f32 %v2406, %v2428
    %2430 = vmatmul.f32.gmra.mxu0 %v81
    %v2431 = vpop.f32.mrf.mxu0
    %v2432 = vadd.f32 %v2406, %v2431
    %2433 = vmatmul.f32.gmra.mxu0 %v285
    %v2434 = vpop.f32.mrf.mxu0
    %v2435 = vadd.f32 %v2406, %v2434
    %2436 = vmatmul.f32.gmra.mxu0 %v288
    %v2437 = vpop.f32.mrf.mxu0
    %v2438 = vadd.f32 %v2406, %v2437
    %2439 = vmatmul.f32.gmra.mxu0 %v291
    %v2440 = vpop.f32.mrf.mxu0
    %v2441 = vadd.f32 %v2406, %v2440
    %2442 = vmatmul.f32.gmra.mxu0 %v497
    %v2443 = vpop.f32.mrf.mxu0
    %v2444 = vadd.f32 %v2406, %v2443
    %2445 = vmatmul.f32.gmra.mxu0 %v500
    %v2446 = vpop.f32.mrf.mxu0
    %v2447 = vadd.f32 %v2406, %v2446
    %2448 = vmatmul.f32.gmra.mxu0 %v503
    %v2449 = vpop.f32.mrf.mxu0
    %v2450 = vadd.f32 %v2406, %v2449
    %2451 = vmatmul.f32.gmra.mxu0 %v709
    %v2452 = vpop.f32.mrf.mxu0
    %v2453 = vadd.f32 %v2406, %v2452
    %2454 = vmatmul.f32.gmra.mxu0 %v712
    %v2455 = vpop.f32.mrf.mxu0
    %v2456 = vadd.f32 %v2406, %v2455
    %2457 = vmatmul.f32.gmra.mxu0 %v715
    %v2458 = vpop.f32.mrf.mxu0
    %v2459 = vadd.f32 %v2406, %v2458
    %2460 = vdwg.mxu0
    %v2461 = vld [vmem:[%s9] sm:$0xff]
    %v2462 = vld [vmem:[%s9 + $0x8] sm:$0xff]
    %v2463 = vld [vmem:[%s9 + $0x10] sm:$0xff]
    %2464 = vmatpush.msra.mxu0 0.0
    %2465 = vmatpush.msra.mxu0 0.0
    %2466 = vmatpush.msra.mxu0 0.0
    %2467 = vmatpush.msra.mxu0 0.0
    %2468 = vmatpush.msra.mxu0 0.0
    %2469 = vmatpush.msra.mxu0 0.0
    %2470 = vmatpush.msra.mxu0 0.0
    %2471 = vmatpush.msra.mxu0 0.0
    %2472 = vmatpush.msra.mxu0 0.0
    %2473 = vmatpush.msra.mxu0 0.0
    %2474 = vmatpush.msra.mxu0 0.0
    %2475 = vmatpush.msra.mxu0 0.0
    %2476 = vmatpush.msra.mxu0 0.0
    %2477 = vmatpush.msra.mxu0 %v2463
    %2478 = vmatpush.msra.mxu0 %v2462
    %2479 = vmatpush.msra.mxu0 %v2461
    %2480 = vmatmul.f32.gmra.mxu0 %v958
    %v2481 = vpop.f32.mrf.mxu0
    %v2482 = vadd.f32 0.0, %v2481
    %2483 = vmatmul.f32.gmra.mxu0 %v958
    %v2484 = vpop.f32.mrf.mxu0
    %v2485 = vadd.f32 0.0, %v2484
    %2486 = vmatmul.f32.gmra.mxu0 %v958
    %v2487 = vpop.f32.mrf.mxu0
    %v2488 = vadd.f32 0.0, %v2487
    %2489 = vdwg.mxu0
    %v2490 = vadd.f32 %v2270, %v2482
    %v2491 = vadd.f32 %v2273, %v2485
    %v2492 = vadd.f32 %v2276, %v2488
    %s2493 = scalar_lea.vmem %s9, 24
    %v2494 = vld [vmem:[%s2493] sm:$0xff]
    %v2495 = vld [vmem:[%s2493 + $0x8] sm:$0xff]
    %v2496 = vld [vmem:[%s2493 + $0x10] sm:$0xff]
    %2497 = vmatpush.msra.mxu0 0.0
    %2498 = vmatpush.msra.mxu0 0.0
    %2499 = vmatpush.msra.mxu0 0.0
    %2500 = vmatpush.msra.mxu0 0.0
    %2501 = vmatpush.msra.mxu0 0.0
    %2502 = vmatpush.msra.mxu0 0.0
    %2503 = vmatpush.msra.mxu0 0.0
    %2504 = vmatpush.msra.mxu0 0.0
    %2505 = vmatpush.msra.mxu0 0.0
    %2506 = vmatpush.msra.mxu0 0.0
    %2507 = vmatpush.msra.mxu0 0.0
    %2508 = vmatpush.msra.mxu0 0.0
    %2509 = vmatpush.msra.mxu0 0.0
    %2510 = vmatpush.msra.mxu0 %v2496
    %2511 = vmatpush.msra.mxu0 %v2495
    %2512 = vmatpush.msra.mxu0 %v2494
    %2513 = vmatmul.f32.gmra.mxu0 %v958
    %v2514 = vpop.f32.mrf.mxu0
    %v2515 = vadd.f32 0.0, %v2514
    %2516 = vmatmul.f32.gmra.mxu0 %v958
    %v2517 = vpop.f32.mrf.mxu0
    %v2518 = vadd.f32 0.0, %v2517
    %2519 = vmatmul.f32.gmra.mxu0 %v958
    %v2520 = vpop.f32.mrf.mxu0
    %v2521 = vadd.f32 0.0, %v2520
    %2522 = vdwg.mxu0
    %v2523 = vadd.f32 %v2331, %v2515
    %v2524 = vadd.f32 %v2334, %v2518
    %v2525 = vadd.f32 %v2337, %v2521
    %s2526 = scalar_lea.vmem %s9, 48
    %v2527 = vld [vmem:[%s2526] sm:$0xff]
    %v2528 = vld [vmem:[%s2526 + $0x8] sm:$0xff]
    %v2529 = vld [vmem:[%s2526 + $0x10] sm:$0xff]
    %2530 = vmatpush.msra.mxu0 0.0
    %2531 = vmatpush.msra.mxu0 0.0
    %2532 = vmatpush.msra.mxu0 0.0
    %2533 = vmatpush.msra.mxu0 0.0
    %2534 = vmatpush.msra.mxu0 0.0
    %2535 = vmatpush.msra.mxu0 0.0
    %2536 = vmatpush.msra.mxu0 0.0
    %2537 = vmatpush.msra.mxu0 0.0
    %2538 = vmatpush.msra.mxu0 0.0
    %2539 = vmatpush.msra.mxu0 0.0
    %2540 = vmatpush.msra.mxu0 0.0
    %2541 = vmatpush.msra.mxu0 0.0
    %2542 = vmatpush.msra.mxu0 0.0
    %2543 = vmatpush.msra.mxu0 %v2529
    %2544 = vmatpush.msra.mxu0 %v2528
    %2545 = vmatpush.msra.mxu0 %v2527
    %2546 = vmatmul.f32.gmra.mxu0 %v958
    %v2547 = vpop.f32.mrf.mxu0
    %v2548 = vadd.f32 0.0, %v2547
    %2549 = vmatmul.f32.gmra.mxu0 %v958
    %v2550 = vpop.f32.mrf.mxu0
    %v2551 = vadd.f32 0.0, %v2550
    %2552 = vmatmul.f32.gmra.mxu0 %v958
    %v2553 = vpop.f32.mrf.mxu0
    %v2554 = vadd.f32 0.0, %v2553
    %2555 = vdwg.mxu0
    %v2556 = vadd.f32 %v2392, %v2548
    %v2557 = vadd.f32 %v2395, %v2551
    %v2558 = vadd.f32 %v2398, %v2554
    %s2559 = scalar_lea.vmem %s9, 72
    %v2560 = vld [vmem:[%s2559] sm:$0xff]
    %v2561 = vld [vmem:[%s2559 + $0x8] sm:$0xff]
    %v2562 = vld [vmem:[%s2559 + $0x10] sm:$0xff]
    %2563 = vmatpush.msra.mxu0 0.0
    %2564 = vmatpush.msra.mxu0 0.0
    %2565 = vmatpush.msra.mxu0 0.0
    %2566 = vmatpush.msra.mxu0 0.0
    %2567 = vmatpush.msra.mxu0 0.0
    %2568 = vmatpush.msra.mxu0 0.0
    %2569 = vmatpush.msra.mxu0 0.0
    %2570 = vmatpush.msra.mxu0 0.0
    %2571 = vmatpush.msra.mxu0 0.0
    %2572 = vmatpush.msra.mxu0 0.0
    %2573 = vmatpush.msra.mxu0 0.0
    %2574 = vmatpush.msra.mxu0 0.0
    %2575 = vmatpush.msra.mxu0 0.0
    %2576 = vmatpush.msra.mxu0 %v2562
    %2577 = vmatpush.msra.mxu0 %v2561
    %2578 = vmatpush.msra.mxu0 %v2560
    %2579 = vmatmul.f32.gmra.mxu0 %v958
    %v2580 = vpop.f32.mrf.mxu0
    %v2581 = vadd.f32 0.0, %v2580
    %2582 = vmatmul.f32.gmra.mxu0 %v958
    %v2583 = vpop.f32.mrf.mxu0
    %v2584 = vadd.f32 0.0, %v2583
    %2585 = vmatmul.f32.gmra.mxu0 %v958
    %v2586 = vpop.f32.mrf.mxu0
    %v2587 = vadd.f32 0.0, %v2586
    %2588 = vdwg.mxu0
    %v2589 = vadd.f32 %v2453, %v2581
    %v2590 = vadd.f32 %v2456, %v2584
    %v2591 = vadd.f32 %v2459, %v2587
    %v2592 = vxor.u32 %v2523, 2147483648
    %v2593 = vxor.u32 %v2524, 2147483648
    %v2594 = vxor.u32 %v2525, 2147483648
    %v2595 = vmul.f32 %v2592, 1.442695
    %v2596 = vpow.pop %v2595
    %v2597 = vmul.f32 %v2593, 1.442695
    %v2598 = vpow.pop %v2597
    %v2599 = vmul.f32 %v2594, 1.442695
    %v2600 = vpow.pop %v2599
    %v2601 = vadd.f32 %v2596, 1.0
    %v2602 = vadd.f32 %v2598, 1.0
    %v2603 = vadd.f32 %v2600, 1.0
    %v2604 = vrcp.pop %v2601
    %v2605 = vmul.f32 %v2601, %v2604
    %v2606 = vsub.f32 1.0, %v2605
    %v2607 = vmul.f32 %v2604, %v2606
    %v2608 = vadd.f32 %v2604, %v2607
    %vm2609 = vweird.f32 %v2601
    %vm2610 = vweird.f32 %v2604
    %vm2611 = vmor %vm2609, %vm2610
    %v2612 = vsel %vm2611, %v2604, %v2608
    %v2613 = vand.u32 2147483647, %v2601
    %vm2614 = vcmp.eq.f32.partialorder %v2613, 8.507059e+37
    %v2615 = vand.u32 %v2601, 2147483648
    %v2616 = vor.u32 1.1754944e-38, %v2615
    %v2617 = vsel %vm2614, %v2616, %v2612
    %v2618 = vmul.f32 1.0, %v2617
    %v2619 = vrcp.pop %v2602
    %v2620 = vmul.f32 %v2602, %v2619
    %v2621 = vsub.f32 1.0, %v2620
    %v2622 = vmul.f32 %v2619, %v2621
    %v2623 = vadd.f32 %v2619, %v2622
    %vm2624 = vweird.f32 %v2602
    %vm2625 = vweird.f32 %v2619
    %vm2626 = vmor %vm2624, %vm2625
    %v2627 = vsel %vm2626, %v2619, %v2623
    %v2628 = vand.u32 2147483647, %v2602
    %vm2629 = vcmp.eq.f32.partialorder %v2628, 8.507059e+37
    %v2630 = vand.u32 %v2602, 2147483648
    %v2631 = vor.u32 1.1754944e-38, %v2630
    %v2632 = vsel %vm2629, %v2631, %v2627
    %v2633 = vmul.f32 1.0, %v2632
    %v2634 = vrcp.pop %v2603
    %v2635 = vmul.f32 %v2603, %v2634
    %v2636 = vsub.f32 1.0, %v2635
    %v2637 = vmul.f32 %v2634, %v2636
    %v2638 = vadd.f32 %v2634, %v2637
    %vm2639 = vweird.f32 %v2603
    %vm2640 = vweird.f32 %v2634
    %vm2641 = vmor %vm2639, %vm2640
    %v2642 = vsel %vm2641, %v2634, %v2638
    %v2643 = vand.u32 2147483647, %v2603
    %vm2644 = vcmp.eq.f32.partialorder %v2643, 8.507059e+37
    %v2645 = vand.u32 %v2603, 2147483648
    %v2646 = vor.u32 1.1754944e-38, %v2645
    %v2647 = vsel %vm2644, %v2646, %v2642
    %v2648 = vmul.f32 1.0, %v2647
    %v2649 = vmul.f32 %v2618, 0.0
    %v2650 = vmul.f32 %v2633, 0.0
    %v2651 = vmul.f32 %v2648, 0.0
    %v2652 = vxor.u32 %v2490, 2147483648
    %v2653 = vxor.u32 %v2491, 2147483648
    %v2654 = vxor.u32 %v2492, 2147483648
    %v2655 = vmul.f32 %v2652, 1.442695
    %v2656 = vpow.pop %v2655
    %v2657 = vmul.f32 %v2653, 1.442695
    %v2658 = vpow.pop %v2657
    %v2659 = vmul.f32 %v2654, 1.442695
    %v2660 = vpow.pop %v2659
    %v2661 = vadd.f32 %v2656, 1.0
    %v2662 = vadd.f32 %v2658, 1.0
    %v2663 = vadd.f32 %v2660, 1.0
    %v2664 = vrcp.pop %v2661
    %v2665 = vmul.f32 %v2661, %v2664
    %v2666 = vsub.f32 1.0, %v2665
    %v2667 = vmul.f32 %v2664, %v2666
    %v2668 = vadd.f32 %v2664, %v2667
    %vm2669 = vweird.f32 %v2661
    %vm2670 = vweird.f32 %v2664
    %vm2671 = vmor %vm2669, %vm2670
    %v2672 = vsel %vm2671, %v2664, %v2668
    %v2673 = vand.u32 2147483647, %v2661
    %vm2674 = vcmp.eq.f32.partialorder %v2673, 8.507059e+37
    %v2675 = vand.u32 %v2661, 2147483648
    %v2676 = vor.u32 1.1754944e-38, %v2675
    %v2677 = vsel %vm2674, %v2676, %v2672
    %v2678 = vmul.f32 1.0, %v2677
    %v2679 = vrcp.pop %v2662
    %v2680 = vmul.f32 %v2662, %v2679
    %v2681 = vsub.f32 1.0, %v2680
    %v2682 = vmul.f32 %v2679, %v2681
    %v2683 = vadd.f32 %v2679, %v2682
    %vm2684 = vweird.f32 %v2662
    %vm2685 = vweird.f32 %v2679
    %vm2686 = vmor %vm2684, %vm2685
    %v2687 = vsel %vm2686, %v2679, %v2683
    %v2688 = vand.u32 2147483647, %v2662
    %vm2689 = vcmp.eq.f32.partialorder %v2688, 8.507059e+37
    %v2690 = vand.u32 %v2662, 2147483648
    %v2691 = vor.u32 1.1754944e-38, %v2690
    %v2692 = vsel %vm2689, %v2691, %v2687
    %v2693 = vmul.f32 1.0, %v2692
    %v2694 = vrcp.pop %v2663
    %v2695 = vmul.f32 %v2663, %v2694
    %v2696 = vsub.f32 1.0, %v2695
    %v2697 = vmul.f32 %v2694, %v2696
    %v2698 = vadd.f32 %v2694, %v2697
    %vm2699 = vweird.f32 %v2663
    %vm2700 = vweird.f32 %v2694
    %vm2701 = vmor %vm2699, %vm2700
    %v2702 = vsel %vm2701, %v2694, %v2698
    %v2703 = vand.u32 2147483647, %v2663
    %vm2704 = vcmp.eq.f32.partialorder %v2703, 8.507059e+37
    %v2705 = vand.u32 %v2663, 2147483648
    %v2706 = vor.u32 1.1754944e-38, %v2705
    %v2707 = vsel %vm2704, %v2706, %v2702
    %v2708 = vmul.f32 1.0, %v2707
    %v2709 = vtanh.pop %v2556
    %v2710 = vtanh.pop %v2557
    %v2711 = vtanh.pop %v2558
    %v2712 = vmul.f32 %v2678, %v2709
    %v2713 = vmul.f32 %v2693, %v2710
    %v2714 = vmul.f32 %v2708, %v2711
    %v2715 = vadd.f32 %v2649, %v2712
    %v2716 = vadd.f32 %v2650, %v2713
    %v2717 = vadd.f32 %v2651, %v2714
    %v2718 = vxor.u32 %v2589, 2147483648
    %v2719 = vxor.u32 %v2590, 2147483648
    %v2720 = vxor.u32 %v2591, 2147483648
    %v2721 = vmul.f32 %v2718, 1.442695
    %v2722 = vpow.pop %v2721
    %v2723 = vmul.f32 %v2719, 1.442695
    %v2724 = vpow.pop %v2723
    %v2725 = vmul.f32 %v2720, 1.442695
    %v2726 = vpow.pop %v2725
    %v2727 = vadd.f32 %v2722, 1.0
    %v2728 = vadd.f32 %v2724, 1.0
    %v2729 = vadd.f32 %v2726, 1.0
    %v2730 = vrcp.pop %v2727
    %v2731 = vmul.f32 %v2727, %v2730
    %v2732 = vsub.f32 1.0, %v2731
    %v2733 = vmul.f32 %v2730, %v2732
    %v2734 = vadd.f32 %v2730, %v2733
    %vm2735 = vweird.f32 %v2727
    %vm2736 = vweird.f32 %v2730
    %vm2737 = vmor %vm2735, %vm2736
    %v2738 = vsel %vm2737, %v2730, %v2734
    %v2739 = vand.u32 2147483647, %v2727
    %vm2740 = vcmp.eq.f32.partialorder %v2739, 8.507059e+37
    %v2741 = vand.u32 %v2727, 2147483648
    %v2742 = vor.u32 1.1754944e-38, %v2741
    %v2743 = vsel %vm2740, %v2742, %v2738
    %v2744 = vmul.f32 1.0, %v2743
    %v2745 = vrcp.pop %v2728
    %v2746 = vmul.f32 %v2728, %v2745
    %v2747 = vsub.f32 1.0, %v2746
    %v2748 = vmul.f32 %v2745, %v2747
    %v2749 = vadd.f32 %v2745, %v2748
    %vm2750 = vweird.f32 %v2728
    %vm2751 = vweird.f32 %v2745
    %vm2752 = vmor %vm2750, %vm2751
    %v2753 = vsel %vm2752, %v2745, %v2749
    %v2754 = vand.u32 2147483647, %v2728
    %vm2755 = vcmp.eq.f32.partialorder %v2754, 8.507059e+37
    %v2756 = vand.u32 %v2728, 2147483648
    %v2757 = vor.u32 1.1754944e-38, %v2756
    %v2758 = vsel %vm2755, %v2757, %v2753
    %v2759 = vmul.f32 1.0, %v2758
    %v2760 = vrcp.pop %v2729
    %v2761 = vmul.f32 %v2729, %v2760
    %v2762 = vsub.f32 1.0, %v2761
    %v2763 = vmul.f32 %v2760, %v2762
    %v2764 = vadd.f32 %v2760, %v2763
    %vm2765 = vweird.f32 %v2729
    %vm2766 = vweird.f32 %v2760
    %vm2767 = vmor %vm2765, %vm2766
    %v2768 = vsel %vm2767, %v2760, %v2764
    %v2769 = vand.u32 2147483647, %v2729
    %vm2770 = vcmp.eq.f32.partialorder %v2769, 8.507059e+37
    %v2771 = vand.u32 %v2729, 2147483648
    %v2772 = vor.u32 1.1754944e-38, %v2771
    %v2773 = vsel %vm2770, %v2772, %v2768
    %v2774 = vmul.f32 1.0, %v2773
    %v2775 = vtanh.pop %v2715
    %v2776 = vtanh.pop %v2716
    %v2777 = vtanh.pop %v2717
    %v2778 = vmul.f32 %v2744, %v2775
    %v2779 = vmul.f32 %v2759, %v2776
    %v2780 = vmul.f32 %v2774, %v2777
    %v2782 = vsel %vm956, %v2778, 0
    %v2785 = vsel %vm956, %v2779, 0
    %v2788 = vsel %vm956, %v2780, 0
    %2790 = vmatpush.msra.mxu0 0.0
    %2791 = vmatpush.msra.mxu0 0.0
    %2792 = vmatpush.msra.mxu0 0.0
    %2793 = vmatpush.msra.mxu0 0.0
    %2794 = vmatpush.msra.mxu0 0.0
    %2795 = vmatpush.msra.mxu0 0.0
    %2796 = vmatpush.msra.mxu0 0.0
    %2797 = vmatpush.msra.mxu0 0.0
    %2798 = vmatpush.msra.mxu0 0.0
    %2799 = vmatpush.msra.mxu0 0.0
    %2800 = vmatpush.msra.mxu0 0.0
    %2801 = vmatpush.msra.mxu0 0.0
    %2802 = vmatpush.msra.mxu0 0.0
    %2803 = vmatpush.msra.mxu0 %v2463
    %2804 = vmatpush.msra.mxu0 %v2462
    %2805 = vmatpush.msra.mxu0 %v2461
    %2806 = vmatmul.f32.gmra.mxu0 %v2782
    %v2807 = vpop.f32.mrf.mxu0
    %v2808 = vadd.f32 0.0, %v2807
    %2809 = vmatmul.f32.gmra.mxu0 %v2785
    %v2810 = vpop.f32.mrf.mxu0
    %v2811 = vadd.f32 0.0, %v2810
    %2812 = vmatmul.f32.gmra.mxu0 %v2788
    %v2813 = vpop.f32.mrf.mxu0
    %v2814 = vadd.f32 0.0, %v2813
    %2815 = vdwg.mxu0
    %v2816 = vadd.f32 %v2261, %v2808
    %v2817 = vadd.f32 %v2264, %v2811
    %v2818 = vadd.f32 %v2267, %v2814
    %2819 = vmatpush.msra.mxu0 0.0
    %2820 = vmatpush.msra.mxu0 0.0
    %2821 = vmatpush.msra.mxu0 0.0
    %2822 = vmatpush.msra.mxu0 0.0
    %2823 = vmatpush.msra.mxu0 0.0
    %2824 = vmatpush.msra.mxu0 0.0
    %2825 = vmatpush.msra.mxu0 0.0
    %2826 = vmatpush.msra.mxu0 0.0
    %2827 = vmatpush.msra.mxu0 0.0
    %2828 = vmatpush.msra.mxu0 0.0
    %2829 = vmatpush.msra.mxu0 0.0
    %2830 = vmatpush.msra.mxu0 0.0
    %2831 = vmatpush.msra.mxu0 0.0
    %2832 = vmatpush.msra.mxu0 %v2496
    %2833 = vmatpush.msra.mxu0 %v2495
    %2834 = vmatpush.msra.mxu0 %v2494
    %2835 = vmatmul.f32.gmra.mxu0 %v2782
    %v2836 = vpop.f32.mrf.mxu0
    %v2837 = vadd.f32 0.0, %v2836
    %2838 = vmatmul.f32.gmra.mxu0 %v2785
    %v2839 = vpop.f32.mrf.mxu0
    %v2840 = vadd.f32 0.0, %v2839
    %2841 = vmatmul.f32.gmra.mxu0 %v2788
    %v2842 = vpop.f32.mrf.mxu0
    %v2843 = vadd.f32 0.0, %v2842
    %2844 = vdwg.mxu0
    %v2845 = vadd.f32 %v2322, %v2837
    %v2846 = vadd.f32 %v2325, %v2840
    %v2847 = vadd.f32 %v2328, %v2843
    %2848 = vmatpush.msra.mxu0 0.0
    %2849 = vmatpush.msra.mxu0 0.0
    %2850 = vmatpush.msra.mxu0 0.0
    %2851 = vmatpush.msra.mxu0 0.0
    %2852 = vmatpush.msra.mxu0 0.0
    %2853 = vmatpush.msra.mxu0 0.0
    %2854 = vmatpush.msra.mxu0 0.0
    %2855 = vmatpush.msra.mxu0 0.0
    %2856 = vmatpush.msra.mxu0 0.0
    %2857 = vmatpush.msra.mxu0 0.0
    %2858 = vmatpush.msra.mxu0 0.0
    %2859 = vmatpush.msra.mxu0 0.0
    %2860 = vmatpush.msra.mxu0 0.0
    %2861 = vmatpush.msra.mxu0 %v2529
    %2862 = vmatpush.msra.mxu0 %v2528
    %2863 = vmatpush.msra.mxu0 %v2527
    %2864 = vmatmul.f32.gmra.mxu0 %v2782
    %v2865 = vpop.f32.mrf.mxu0
    %v2866 = vadd.f32 0.0, %v2865
    %2867 = vmatmul.f32.gmra.mxu0 %v2785
    %v2868 = vpop.f32.mrf.mxu0
    %v2869 = vadd.f32 0.0, %v2868
    %2870 = vmatmul.f32.gmra.mxu0 %v2788
    %v2871 = vpop.f32.mrf.mxu0
    %v2872 = vadd.f32 0.0, %v2871
    %2873 = vdwg.mxu0
    %v2874 = vadd.f32 %v2383, %v2866
    %v2875 = vadd.f32 %v2386, %v2869
    %v2876 = vadd.f32 %v2389, %v2872
    %2877 = vmatpush.msra.mxu0 0.0
    %2878 = vmatpush.msra.mxu0 0.0
    %2879 = vmatpush.msra.mxu0 0.0
    %2880 = vmatpush.msra.mxu0 0.0
    %2881 = vmatpush.msra.mxu0 0.0
    %2882 = vmatpush.msra.mxu0 0.0
    %2883 = vmatpush.msra.mxu0 0.0
    %2884 = vmatpush.msra.mxu0 0.0
    %2885 = vmatpush.msra.mxu0 0.0
    %2886 = vmatpush.msra.mxu0 0.0
    %2887 = vmatpush.msra.mxu0 0.0
    %2888 = vmatpush.msra.mxu0 0.0
    %2889 = vmatpush.msra.mxu0 0.0
    %2890 = vmatpush.msra.mxu0 %v2562
    %2891 = vmatpush.msra.mxu0 %v2561
    %2892 = vmatpush.msra.mxu0 %v2560
    %2893 = vmatmul.f32.gmra.mxu0 %v2782
    %v2894 = vpop.f32.mrf.mxu0
    %v2895 = vadd.f32 0.0, %v2894
    %2896 = vmatmul.f32.gmra.mxu0 %v2785
    %v2897 = vpop.f32.mrf.mxu0
    %v2898 = vadd.f32 0.0, %v2897
    %2899 = vmatmul.f32.gmra.mxu0 %v2788
    %v2900 = vpop.f32.mrf.mxu0
    %v2901 = vadd.f32 0.0, %v2900
    %2902 = vdwg.mxu0
    %v2903 = vadd.f32 %v2444, %v2895
    %v2904 = vadd.f32 %v2447, %v2898
    %v2905 = vadd.f32 %v2450, %v2901
    %v2906 = vxor.u32 %v2845, 2147483648
    %v2907 = vxor.u32 %v2846, 2147483648
    %v2908 = vxor.u32 %v2847, 2147483648
    %v2909 = vmul.f32 %v2906, 1.442695
    %v2910 = vpow.pop %v2909
    %v2911 = vmul.f32 %v2907, 1.442695
    %v2912 = vpow.pop %v2911
    %v2913 = vmul.f32 %v2908, 1.442695
    %v2914 = vpow.pop %v2913
    %v2915 = vadd.f32 %v2910, 1.0
    %v2916 = vadd.f32 %v2912, 1.0
    %v2917 = vadd.f32 %v2914, 1.0
    %v2918 = vrcp.pop %v2915
    %v2919 = vmul.f32 %v2915, %v2918
    %v2920 = vsub.f32 1.0, %v2919
    %v2921 = vmul.f32 %v2918, %v2920
    %v2922 = vadd.f32 %v2918, %v2921
    %vm2923 = vweird.f32 %v2915
    %vm2924 = vweird.f32 %v2918
    %vm2925 = vmor %vm2923, %vm2924
    %v2926 = vsel %vm2925, %v2918, %v2922
    %v2927 = vand.u32 2147483647, %v2915
    %vm2928 = vcmp.eq.f32.partialorder %v2927, 8.507059e+37
    %v2929 = vand.u32 %v2915, 2147483648
    %v2930 = vor.u32 1.1754944e-38, %v2929
    %v2931 = vsel %vm2928, %v2930, %v2926
    %v2932 = vmul.f32 1.0, %v2931
    %v2933 = vrcp.pop %v2916
    %v2934 = vmul.f32 %v2916, %v2933
    %v2935 = vsub.f32 1.0, %v2934
    %v2936 = vmul.f32 %v2933, %v2935
    %v2937 = vadd.f32 %v2933, %v2936
    %vm2938 = vweird.f32 %v2916
    %vm2939 = vweird.f32 %v2933
    %vm2940 = vmor %vm2938, %vm2939
    %v2941 = vsel %vm2940, %v2933, %v2937
    %v2942 = vand.u32 2147483647, %v2916
    %vm2943 = vcmp.eq.f32.partialorder %v2942, 8.507059e+37
    %v2944 = vand.u32 %v2916, 2147483648
    %v2945 = vor.u32 1.1754944e-38, %v2944
    %v2946 = vsel %vm2943, %v2945, %v2941
    %v2947 = vmul.f32 1.0, %v2946
    %v2948 = vrcp.pop %v2917
    %v2949 = vmul.f32 %v2917, %v2948
    %v2950 = vsub.f32 1.0, %v2949
    %v2951 = vmul.f32 %v2948, %v2950
    %v2952 = vadd.f32 %v2948, %v2951
    %vm2953 = vweird.f32 %v2917
    %vm2954 = vweird.f32 %v2948
    %vm2955 = vmor %vm2953, %vm2954
    %v2956 = vsel %vm2955, %v2948, %v2952
    %v2957 = vand.u32 2147483647, %v2917
    %vm2958 = vcmp.eq.f32.partialorder %v2957, 8.507059e+37
    %v2959 = vand.u32 %v2917, 2147483648
    %v2960 = vor.u32 1.1754944e-38, %v2959
    %v2961 = vsel %vm2958, %v2960, %v2956
    %v2962 = vmul.f32 1.0, %v2961
    %v2963 = vmul.f32 %v2932, %v2715
    %v2964 = vmul.f32 %v2947, %v2716
    %v2965 = vmul.f32 %v2962, %v2717
    %v2966 = vxor.u32 %v2816, 2147483648
    %v2967 = vxor.u32 %v2817, 2147483648
    %v2968 = vxor.u32 %v2818, 2147483648
    %v2969 = vmul.f32 %v2966, 1.442695
    %v2970 = vpow.pop %v2969
    %v2971 = vmul.f32 %v2967, 1.442695
    %v2972 = vpow.pop %v2971
    %v2973 = vmul.f32 %v2968, 1.442695
    %v2974 = vpow.pop %v2973
    %v2975 = vadd.f32 %v2970, 1.0
    %v2976 = vadd.f32 %v2972, 1.0
    %v2977 = vadd.f32 %v2974, 1.0
    %v2978 = vrcp.pop %v2975
    %v2979 = vmul.f32 %v2975, %v2978
    %v2980 = vsub.f32 1.0, %v2979
    %v2981 = vmul.f32 %v2978, %v2980
    %v2982 = vadd.f32 %v2978, %v2981
    %vm2983 = vweird.f32 %v2975
    %vm2984 = vweird.f32 %v2978
    %vm2985 = vmor %vm2983, %vm2984
    %v2986 = vsel %vm2985, %v2978, %v2982
    %v2987 = vand.u32 2147483647, %v2975
    %vm2988 = vcmp.eq.f32.partialorder %v2987, 8.507059e+37
    %v2989 = vand.u32 %v2975, 2147483648
    %v2990 = vor.u32 1.1754944e-38, %v2989
    %v2991 = vsel %vm2988, %v2990, %v2986
    %v2992 = vmul.f32 1.0, %v2991
    %v2993 = vrcp.pop %v2976
    %v2994 = vmul.f32 %v2976, %v2993
    %v2995 = vsub.f32 1.0, %v2994
    %v2996 = vmul.f32 %v2993, %v2995
    %v2997 = vadd.f32 %v2993, %v2996
    %vm2998 = vweird.f32 %v2976
    %vm2999 = vweird.f32 %v2993
    %vm3000 = vmor %vm2998, %vm2999
    %v3001 = vsel %vm3000, %v2993, %v2997
    %v3002 = vand.u32 2147483647, %v2976
    %vm3003 = vcmp.eq.f32.partialorder %v3002, 8.507059e+37
    %v3004 = vand.u32 %v2976, 2147483648
    %v3005 = vor.u32 1.1754944e-38, %v3004
    %v3006 = vsel %vm3003, %v3005, %v3001
    %v3007 = vmul.f32 1.0, %v3006
    %v3008 = vrcp.pop %v2977
    %v3009 = vmul.f32 %v2977, %v3008
    %v3010 = vsub.f32 1.0, %v3009
    %v3011 = vmul.f32 %v3008, %v3010
    %v3012 = vadd.f32 %v3008, %v3011
    %vm3013 = vweird.f32 %v2977
    %vm3014 = vweird.f32 %v3008
    %vm3015 = vmor %vm3013, %vm3014
    %v3016 = vsel %vm3015, %v3008, %v3012
    %v3017 = vand.u32 2147483647, %v2977
    %vm3018 = vcmp.eq.f32.partialorder %v3017, 8.507059e+37
    %v3019 = vand.u32 %v2977, 2147483648
    %v3020 = vor.u32 1.1754944e-38, %v3019
    %v3021 = vsel %vm3018, %v3020, %v3016
    %v3022 = vmul.f32 1.0, %v3021
    %v3023 = vtanh.pop %v2874
    %v3024 = vtanh.pop %v2875
    %v3025 = vtanh.pop %v2876
    %v3026 = vmul.f32 %v2992, %v3023
    %v3027 = vmul.f32 %v3007, %v3024
    %v3028 = vmul.f32 %v3022, %v3025
    %v3029 = vadd.f32 %v2963, %v3026
    %v3030 = vadd.f32 %v2964, %v3027
    %v3031 = vadd.f32 %v2965, %v3028
    %v3032 = vxor.u32 %v2903, 2147483648
    %v3033 = vxor.u32 %v2904, 2147483648
    %v3034 = vxor.u32 %v2905, 2147483648
    %v3035 = vmul.f32 %v3032, 1.442695
    %v3036 = vpow.pop %v3035
    %v3037 = vmul.f32 %v3033, 1.442695
    %v3038 = vpow.pop %v3037
    %v3039 = vmul.f32 %v3034, 1.442695
    %v3040 = vpow.pop %v3039
    %v3041 = vadd.f32 %v3036, 1.0
    %v3042 = vadd.f32 %v3038, 1.0
    %v3043 = vadd.f32 %v3040, 1.0
    %v3044 = vrcp.pop %v3041
    %v3045 = vmul.f32 %v3041, %v3044
    %v3046 = vsub.f32 1.0, %v3045
    %v3047 = vmul.f32 %v3044, %v3046
    %v3048 = vadd.f32 %v3044, %v3047
    %vm3049 = vweird.f32 %v3041
    %vm3050 = vweird.f32 %v3044
    %vm3051 = vmor %vm3049, %vm3050
    %v3052 = vsel %vm3051, %v3044, %v3048
    %v3053 = vand.u32 2147483647, %v3041
    %vm3054 = vcmp.eq.f32.partialorder %v3053, 8.507059e+37
    %v3055 = vand.u32 %v3041, 2147483648
    %v3056 = vor.u32 1.1754944e-38, %v3055
    %v3057 = vsel %vm3054, %v3056, %v3052
    %v3058 = vmul.f32 1.0, %v3057
    %v3059 = vrcp.pop %v3042
    %v3060 = vmul.f32 %v3042, %v3059
    %v3061 = vsub.f32 1.0, %v3060
    %v3062 = vmul.f32 %v3059, %v3061
    %v3063 = vadd.f32 %v3059, %v3062
    %vm3064 = vweird.f32 %v3042
    %vm3065 = vweird.f32 %v3059
    %vm3066 = vmor %vm3064, %vm3065
    %v3067 = vsel %vm3066, %v3059, %v3063
    %v3068 = vand.u32 2147483647, %v3042
    %vm3069 = vcmp.eq.f32.partialorder %v3068, 8.507059e+37
    %v3070 = vand.u32 %v3042, 2147483648
    %v3071 = vor.u32 1.1754944e-38, %v3070
    %v3072 = vsel %vm3069, %v3071, %v3067
    %v3073 = vmul.f32 1.0, %v3072
    %v3074 = vrcp.pop %v3043
    %v3075 = vmul.f32 %v3043, %v3074
    %v3076 = vsub.f32 1.0, %v3075
    %v3077 = vmul.f32 %v3074, %v3076
    %v3078 = vadd.f32 %v3074, %v3077
    %vm3079 = vweird.f32 %v3043
    %vm3080 = vweird.f32 %v3074
    %vm3081 = vmor %vm3079, %vm3080
    %v3082 = vsel %vm3081, %v3074, %v3078
    %v3083 = vand.u32 2147483647, %v3043
    %vm3084 = vcmp.eq.f32.partialorder %v3083, 8.507059e+37
    %v3085 = vand.u32 %v3043, 2147483648
    %v3086 = vor.u32 1.1754944e-38, %v3085
    %v3087 = vsel %vm3084, %v3086, %v3082
    %v3088 = vmul.f32 1.0, %v3087
    %v3089 = vtanh.pop %v3029
    %v3090 = vtanh.pop %v3030
    %v3091 = vtanh.pop %v3031
    %v3092 = vmul.f32 %v3058, %v3089
    %v3093 = vmul.f32 %v3073, %v3090
    %v3094 = vmul.f32 %v3088, %v3091
    %v3096 = vsel %vm956, %v3092, 0
    %v3099 = vsel %vm956, %v3093, 0
    %v3102 = vsel %vm956, %v3094, 0
    %3104 = vmatpush.msra.mxu0 0.0
    %3105 = vmatpush.msra.mxu0 0.0
    %3106 = vmatpush.msra.mxu0 0.0
    %3107 = vmatpush.msra.mxu0 0.0
    %3108 = vmatpush.msra.mxu0 0.0
    %3109 = vmatpush.msra.mxu0 0.0
    %3110 = vmatpush.msra.mxu0 0.0
    %3111 = vmatpush.msra.mxu0 0.0
    %3112 = vmatpush.msra.mxu0 0.0
    %3113 = vmatpush.msra.mxu0 0.0
    %3114 = vmatpush.msra.mxu0 0.0
    %3115 = vmatpush.msra.mxu0 0.0
    %3116 = vmatpush.msra.mxu0 0.0
    %3117 = vmatpush.msra.mxu0 %v2463
    %3118 = vmatpush.msra.mxu0 %v2462
    %3119 = vmatpush.msra.mxu0 %v2461
    %3120 = vmatmul.f32.gmra.mxu0 %v3096
    %v3121 = vpop.f32.mrf.mxu0
    %v3122 = vadd.f32 0.0, %v3121
    %3123 = vmatmul.f32.gmra.mxu0 %v3099
    %v3124 = vpop.f32.mrf.mxu0
    %v3125 = vadd.f32 0.0, %v3124
    %3126 = vmatmul.f32.gmra.mxu0 %v3102
    %v3127 = vpop.f32.mrf.mxu0
    %v3128 = vadd.f32 0.0, %v3127
    %3129 = vdwg.mxu0
    %v3130 = vadd.f32 %v2252, %v3122
    %v3131 = vadd.f32 %v2255, %v3125
    %v3132 = vadd.f32 %v2258, %v3128
    %3133 = vmatpush.msra.mxu0 0.0
    %3134 = vmatpush.msra.mxu0 0.0
    %3135 = vmatpush.msra.mxu0 0.0
    %3136 = vmatpush.msra.mxu0 0.0
    %3137 = vmatpush.msra.mxu0 0.0
    %3138 = vmatpush.msra.mxu0 0.0
    %3139 = vmatpush.msra.mxu0 0.0
    %3140 = vmatpush.msra.mxu0 0.0
    %3141 = vmatpush.msra.mxu0 0.0
    %3142 = vmatpush.msra.mxu0 0.0
    %3143 = vmatpush.msra.mxu0 0.0
    %3144 = vmatpush.msra.mxu0 0.0
    %3145 = vmatpush.msra.mxu0 0.0
    %3146 = vmatpush.msra.mxu0 %v2496
    %3147 = vmatpush.msra.mxu0 %v2495
    %3148 = vmatpush.msra.mxu0 %v2494
    %3149 = vmatmul.f32.gmra.mxu0 %v3096
    %v3150 = vpop.f32.mrf.mxu0
    %v3151 = vadd.f32 0.0, %v3150
    %3152 = vmatmul.f32.gmra.mxu0 %v3099
    %v3153 = vpop.f32.mrf.mxu0
    %v3154 = vadd.f32 0.0, %v3153
    %3155 = vmatmul.f32.gmra.mxu0 %v3102
    %v3156 = vpop.f32.mrf.mxu0
    %v3157 = vadd.f32 0.0, %v3156
    %3158 = vdwg.mxu0
    %v3159 = vadd.f32 %v2313, %v3151
    %v3160 = vadd.f32 %v2316, %v3154
    %v3161 = vadd.f32 %v2319, %v3157
    %3162 = vmatpush.msra.mxu0 0.0
    %3163 = vmatpush.msra.mxu0 0.0
    %3164 = vmatpush.msra.mxu0 0.0
    %3165 = vmatpush.msra.mxu0 0.0
    %3166 = vmatpush.msra.mxu0 0.0
    %3167 = vmatpush.msra.mxu0 0.0
    %3168 = vmatpush.msra.mxu0 0.0
    %3169 = vmatpush.msra.mxu0 0.0
    %3170 = vmatpush.msra.mxu0 0.0
    %3171 = vmatpush.msra.mxu0 0.0
    %3172 = vmatpush.msra.mxu0 0.0
    %3173 = vmatpush.msra.mxu0 0.0
    %3174 = vmatpush.msra.mxu0 0.0
    %3175 = vmatpush.msra.mxu0 %v2529
    %3176 = vmatpush.msra.mxu0 %v2528
    %3177 = vmatpush.msra.mxu0 %v2527
    %3178 = vmatmul.f32.gmra.mxu0 %v3096
    %v3179 = vpop.f32.mrf.mxu0
    %v3180 = vadd.f32 0.0, %v3179
    %3181 = vmatmul.f32.gmra.mxu0 %v3099
    %v3182 = vpop.f32.mrf.mxu0
    %v3183 = vadd.f32 0.0, %v3182
    %3184 = vmatmul.f32.gmra.mxu0 %v3102
    %v3185 = vpop.f32.mrf.mxu0
    %v3186 = vadd.f32 0.0, %v3185
    %3187 = vdwg.mxu0
    %v3188 = vadd.f32 %v2374, %v3180
    %v3189 = vadd.f32 %v2377, %v3183
    %v3190 = vadd.f32 %v2380, %v3186
    %3191 = vmatpush.msra.mxu0 0.0
    %3192 = vmatpush.msra.mxu0 0.0
    %3193 = vmatpush.msra.mxu0 0.0
    %3194 = vmatpush.msra.mxu0 0.0
    %3195 = vmatpush.msra.mxu0 0.0
    %3196 = vmatpush.msra.mxu0 0.0
    %3197 = vmatpush.msra.mxu0 0.0
    %3198 = vmatpush.msra.mxu0 0.0
    %3199 = vmatpush.msra.mxu0 0.0
    %3200 = vmatpush.msra.mxu0 0.0
    %3201 = vmatpush.msra.mxu0 0.0
    %3202 = vmatpush.msra.mxu0 0.0
    %3203 = vmatpush.msra.mxu0 0.0
    %3204 = vmatpush.msra.mxu0 %v2562
    %3205 = vmatpush.msra.mxu0 %v2561
    %3206 = vmatpush.msra.mxu0 %v2560
    %3207 = vmatmul.f32.gmra.mxu0 %v3096
    %v3208 = vpop.f32.mrf.mxu0
    %v3209 = vadd.f32 0.0, %v3208
    %3210 = vmatmul.f32.gmra.mxu0 %v3099
    %v3211 = vpop.f32.mrf.mxu0
    %v3212 = vadd.f32 0.0, %v3211
    %3213 = vmatmul.f32.gmra.mxu0 %v3102
    %v3214 = vpop.f32.mrf.mxu0
    %v3215 = vadd.f32 0.0, %v3214
    %3216 = vdwg.mxu0
    %v3217 = vadd.f32 %v2435, %v3209
    %v3218 = vadd.f32 %v2438, %v3212
    %v3219 = vadd.f32 %v2441, %v3215
    %v3220 = vxor.u32 %v3159, 2147483648
    %v3221 = vxor.u32 %v3160, 2147483648
    %v3222 = vxor.u32 %v3161, 2147483648
    %v3223 = vmul.f32 %v3220, 1.442695
    %v3224 = vpow.pop %v3223
    %v3225 = vmul.f32 %v3221, 1.442695
    %v3226 = vpow.pop %v3225
    %v3227 = vmul.f32 %v3222, 1.442695
    %v3228 = vpow.pop %v3227
    %v3229 = vadd.f32 %v3224, 1.0
    %v3230 = vadd.f32 %v3226, 1.0
    %v3231 = vadd.f32 %v3228, 1.0
    %v3232 = vrcp.pop %v3229
    %v3233 = vmul.f32 %v3229, %v3232
    %v3234 = vsub.f32 1.0, %v3233
    %v3235 = vmul.f32 %v3232, %v3234
    %v3236 = vadd.f32 %v3232, %v3235
    %vm3237 = vweird.f32 %v3229
    %vm3238 = vweird.f32 %v3232
    %vm3239 = vmor %vm3237, %vm3238
    %v3240 = vsel %vm3239, %v3232, %v3236
    %v3241 = vand.u32 2147483647, %v3229
    %vm3242 = vcmp.eq.f32.partialorder %v3241, 8.507059e+37
    %v3243 = vand.u32 %v3229, 2147483648
    %v3244 = vor.u32 1.1754944e-38, %v3243
    %v3245 = vsel %vm3242, %v3244, %v3240
    %v3246 = vmul.f32 1.0, %v3245
    %v3247 = vrcp.pop %v3230
    %v3248 = vmul.f32 %v3230, %v3247
    %v3249 = vsub.f32 1.0, %v3248
    %v3250 = vmul.f32 %v3247, %v3249
    %v3251 = vadd.f32 %v3247, %v3250
    %vm3252 = vweird.f32 %v3230
    %vm3253 = vweird.f32 %v3247
    %vm3254 = vmor %vm3252, %vm3253
    %v3255 = vsel %vm3254, %v3247, %v3251
    %v3256 = vand.u32 2147483647, %v3230
    %vm3257 = vcmp.eq.f32.partialorder %v3256, 8.507059e+37
    %v3258 = vand.u32 %v3230, 2147483648
    %v3259 = vor.u32 1.1754944e-38, %v3258
    %v3260 = vsel %vm3257, %v3259, %v3255
    %v3261 = vmul.f32 1.0, %v3260
    %v3262 = vrcp.pop %v3231
    %v3263 = vmul.f32 %v3231, %v3262
    %v3264 = vsub.f32 1.0, %v3263
    %v3265 = vmul.f32 %v3262, %v3264
    %v3266 = vadd.f32 %v3262, %v3265
    %vm3267 = vweird.f32 %v3231
    %vm3268 = vweird.f32 %v3262
    %vm3269 = vmor %vm3267, %vm3268
    %v3270 = vsel %vm3269, %v3262, %v3266
    %v3271 = vand.u32 2147483647, %v3231
    %vm3272 = vcmp.eq.f32.partialorder %v3271, 8.507059e+37
    %v3273 = vand.u32 %v3231, 2147483648
    %v3274 = vor.u32 1.1754944e-38, %v3273
    %v3275 = vsel %vm3272, %v3274, %v3270
    %v3276 = vmul.f32 1.0, %v3275
    %v3277 = vmul.f32 %v3246, %v3029
    %v3278 = vmul.f32 %v3261, %v3030
    %v3279 = vmul.f32 %v3276, %v3031
    %v3280 = vxor.u32 %v3130, 2147483648
    %v3281 = vxor.u32 %v3131, 2147483648
    %v3282 = vxor.u32 %v3132, 2147483648
    %v3283 = vmul.f32 %v3280, 1.442695
    %v3284 = vpow.pop %v3283
    %v3285 = vmul.f32 %v3281, 1.442695
    %v3286 = vpow.pop %v3285
    %v3287 = vmul.f32 %v3282, 1.442695
    %v3288 = vpow.pop %v3287
    %v3289 = vadd.f32 %v3284, 1.0
    %v3290 = vadd.f32 %v3286, 1.0
    %v3291 = vadd.f32 %v3288, 1.0
    %v3292 = vrcp.pop %v3289
    %v3293 = vmul.f32 %v3289, %v3292
    %v3294 = vsub.f32 1.0, %v3293
    %v3295 = vmul.f32 %v3292, %v3294
    %v3296 = vadd.f32 %v3292, %v3295
    %vm3297 = vweird.f32 %v3289
    %vm3298 = vweird.f32 %v3292
    %vm3299 = vmor %vm3297, %vm3298
    %v3300 = vsel %vm3299, %v3292, %v3296
    %v3301 = vand.u32 2147483647, %v3289
    %vm3302 = vcmp.eq.f32.partialorder %v3301, 8.507059e+37
    %v3303 = vand.u32 %v3289, 2147483648
    %v3304 = vor.u32 1.1754944e-38, %v3303
    %v3305 = vsel %vm3302, %v3304, %v3300
    %v3306 = vmul.f32 1.0, %v3305
    %v3307 = vrcp.pop %v3290
    %v3308 = vmul.f32 %v3290, %v3307
    %v3309 = vsub.f32 1.0, %v3308
    %v3310 = vmul.f32 %v3307, %v3309
    %v3311 = vadd.f32 %v3307, %v3310
    %vm3312 = vweird.f32 %v3290
    %vm3313 = vweird.f32 %v3307
    %vm3314 = vmor %vm3312, %vm3313
    %v3315 = vsel %vm3314, %v3307, %v3311
    %v3316 = vand.u32 2147483647, %v3290
    %vm3317 = vcmp.eq.f32.partialorder %v3316, 8.507059e+37
    %v3318 = vand.u32 %v3290, 2147483648
    %v3319 = vor.u32 1.1754944e-38, %v3318
    %v3320 = vsel %vm3317, %v3319, %v3315
    %v3321 = vmul.f32 1.0, %v3320
    %v3322 = vrcp.pop %v3291
    %v3323 = vmul.f32 %v3291, %v3322
    %v3324 = vsub.f32 1.0, %v3323
    %v3325 = vmul.f32 %v3322, %v3324
    %v3326 = vadd.f32 %v3322, %v3325
    %vm3327 = vweird.f32 %v3291
    %vm3328 = vweird.f32 %v3322
    %vm3329 = vmor %vm3327, %vm3328
    %v3330 = vsel %vm3329, %v3322, %v3326
    %v3331 = vand.u32 2147483647, %v3291
    %vm3332 = vcmp.eq.f32.partialorder %v3331, 8.507059e+37
    %v3333 = vand.u32 %v3291, 2147483648
    %v3334 = vor.u32 1.1754944e-38, %v3333
    %v3335 = vsel %vm3332, %v3334, %v3330
    %v3336 = vmul.f32 1.0, %v3335
    %v3337 = vtanh.pop %v3188
    %v3338 = vtanh.pop %v3189
    %v3339 = vtanh.pop %v3190
    %v3340 = vmul.f32 %v3306, %v3337
    %v3341 = vmul.f32 %v3321, %v3338
    %v3342 = vmul.f32 %v3336, %v3339
    %v3343 = vadd.f32 %v3277, %v3340
    %v3344 = vadd.f32 %v3278, %v3341
    %v3345 = vadd.f32 %v3279, %v3342
    %v3346 = vxor.u32 %v3217, 2147483648
    %v3347 = vxor.u32 %v3218, 2147483648
    %v3348 = vxor.u32 %v3219, 2147483648
    %v3349 = vmul.f32 %v3346, 1.442695
    %v3350 = vpow.pop %v3349
    %v3351 = vmul.f32 %v3347, 1.442695
    %v3352 = vpow.pop %v3351
    %v3353 = vmul.f32 %v3348, 1.442695
    %v3354 = vpow.pop %v3353
    %v3355 = vadd.f32 %v3350, 1.0
    %v3356 = vadd.f32 %v3352, 1.0
    %v3357 = vadd.f32 %v3354, 1.0
    %v3358 = vrcp.pop %v3355
    %v3359 = vmul.f32 %v3355, %v3358
    %v3360 = vsub.f32 1.0, %v3359
    %v3361 = vmul.f32 %v3358, %v3360
    %v3362 = vadd.f32 %v3358, %v3361
    %vm3363 = vweird.f32 %v3355
    %vm3364 = vweird.f32 %v3358
    %vm3365 = vmor %vm3363, %vm3364
    %v3366 = vsel %vm3365, %v3358, %v3362
    %v3367 = vand.u32 2147483647, %v3355
    %vm3368 = vcmp.eq.f32.partialorder %v3367, 8.507059e+37
    %v3369 = vand.u32 %v3355, 2147483648
    %v3370 = vor.u32 1.1754944e-38, %v3369
    %v3371 = vsel %vm3368, %v3370, %v3366
    %v3372 = vmul.f32 1.0, %v3371
    %v3373 = vrcp.pop %v3356
    %v3374 = vmul.f32 %v3356, %v3373
    %v3375 = vsub.f32 1.0, %v3374
    %v3376 = vmul.f32 %v3373, %v3375
    %v3377 = vadd.f32 %v3373, %v3376
    %vm3378 = vweird.f32 %v3356
    %vm3379 = vweird.f32 %v3373
    %vm3380 = vmor %vm3378, %vm3379
    %v3381 = vsel %vm3380, %v3373, %v3377
    %v3382 = vand.u32 2147483647, %v3356
    %vm3383 = vcmp.eq.f32.partialorder %v3382, 8.507059e+37
    %v3384 = vand.u32 %v3356, 2147483648
    %v3385 = vor.u32 1.1754944e-38, %v3384
    %v3386 = vsel %vm3383, %v3385, %v3381
    %v3387 = vmul.f32 1.0, %v3386
    %v3388 = vrcp.pop %v3357
    %v3389 = vmul.f32 %v3357, %v3388
    %v3390 = vsub.f32 1.0, %v3389
    %v3391 = vmul.f32 %v3388, %v3390
    %v3392 = vadd.f32 %v3388, %v3391
    %vm3393 = vweird.f32 %v3357
    %vm3394 = vweird.f32 %v3388
    %vm3395 = vmor %vm3393, %vm3394
    %v3396 = vsel %vm3395, %v3388, %v3392
    %v3397 = vand.u32 2147483647, %v3357
    %vm3398 = vcmp.eq.f32.partialorder %v3397, 8.507059e+37
    %v3399 = vand.u32 %v3357, 2147483648
    %v3400 = vor.u32 1.1754944e-38, %v3399
    %v3401 = vsel %vm3398, %v3400, %v3396
    %v3402 = vmul.f32 1.0, %v3401
    %v3403 = vtanh.pop %v3343
    %v3404 = vtanh.pop %v3344
    %v3405 = vtanh.pop %v3345
    %v3406 = vmul.f32 %v3372, %v3403
    %v3407 = vmul.f32 %v3387, %v3404
    %v3408 = vmul.f32 %v3402, %v3405
    %v3410 = vsel %vm956, %v3406, 0
    %v3413 = vsel %vm956, %v3407, 0
    %v3416 = vsel %vm956, %v3408, 0
    %3418 = vmatpush.msra.mxu0 0.0
    %3419 = vmatpush.msra.mxu0 0.0
    %3420 = vmatpush.msra.mxu0 0.0
    %3421 = vmatpush.msra.mxu0 0.0
    %3422 = vmatpush.msra.mxu0 0.0
    %3423 = vmatpush.msra.mxu0 0.0
    %3424 = vmatpush.msra.mxu0 0.0
    %3425 = vmatpush.msra.mxu0 0.0
    %3426 = vmatpush.msra.mxu0 0.0
    %3427 = vmatpush.msra.mxu0 0.0
    %3428 = vmatpush.msra.mxu0 0.0
    %3429 = vmatpush.msra.mxu0 0.0
    %3430 = vmatpush.msra.mxu0 0.0
    %3431 = vmatpush.msra.mxu0 %v2463
    %3432 = vmatpush.msra.mxu0 %v2462
    %3433 = vmatpush.msra.mxu0 %v2461
    %3434 = vmatmul.f32.gmra.mxu0 %v3410
    %v3435 = vpop.f32.mrf.mxu0
    %v3436 = vadd.f32 0.0, %v3435
    %3437 = vmatmul.f32.gmra.mxu0 %v3413
    %v3438 = vpop.f32.mrf.mxu0
    %v3439 = vadd.f32 0.0, %v3438
    %3440 = vmatmul.f32.gmra.mxu0 %v3416
    %v3441 = vpop.f32.mrf.mxu0
    %v3442 = vadd.f32 0.0, %v3441
    %3443 = vdwg.mxu0
    %v3444 = vadd.f32 %v2243, %v3436
    %v3445 = vadd.f32 %v2246, %v3439
    %v3446 = vadd.f32 %v2249, %v3442
    %3447 = vmatpush.msra.mxu0 0.0
    %3448 = vmatpush.msra.mxu0 0.0
    %3449 = vmatpush.msra.mxu0 0.0
    %3450 = vmatpush.msra.mxu0 0.0
    %3451 = vmatpush.msra.mxu0 0.0
    %3452 = vmatpush.msra.mxu0 0.0
    %3453 = vmatpush.msra.mxu0 0.0
    %3454 = vmatpush.msra.mxu0 0.0
    %3455 = vmatpush.msra.mxu0 0.0
    %3456 = vmatpush.msra.mxu0 0.0
    %3457 = vmatpush.msra.mxu0 0.0
    %3458 = vmatpush.msra.mxu0 0.0
    %3459 = vmatpush.msra.mxu0 0.0
    %3460 = vmatpush.msra.mxu0 %v2496
    %3461 = vmatpush.msra.mxu0 %v2495
    %3462 = vmatpush.msra.mxu0 %v2494
    %3463 = vmatmul.f32.gmra.mxu0 %v3410
    %v3464 = vpop.f32.mrf.mxu0
    %v3465 = vadd.f32 0.0, %v3464
    %3466 = vmatmul.f32.gmra.mxu0 %v3413
    %v3467 = vpop.f32.mrf.mxu0
    %v3468 = vadd.f32 0.0, %v3467
    %3469 = vmatmul.f32.gmra.mxu0 %v3416
    %v3470 = vpop.f32.mrf.mxu0
    %v3471 = vadd.f32 0.0, %v3470
    %3472 = vdwg.mxu0
    %v3473 = vadd.f32 %v2304, %v3465
    %v3474 = vadd.f32 %v2307, %v3468
    %v3475 = vadd.f32 %v2310, %v3471
    %3476 = vmatpush.msra.mxu0 0.0
    %3477 = vmatpush.msra.mxu0 0.0
    %3478 = vmatpush.msra.mxu0 0.0
    %3479 = vmatpush.msra.mxu0 0.0
    %3480 = vmatpush.msra.mxu0 0.0
    %3481 = vmatpush.msra.mxu0 0.0
    %3482 = vmatpush.msra.mxu0 0.0
    %3483 = vmatpush.msra.mxu0 0.0
    %3484 = vmatpush.msra.mxu0 0.0
    %3485 = vmatpush.msra.mxu0 0.0
    %3486 = vmatpush.msra.mxu0 0.0
    %3487 = vmatpush.msra.mxu0 0.0
    %3488 = vmatpush.msra.mxu0 0.0
    %3489 = vmatpush.msra.mxu0 %v2529
    %3490 = vmatpush.msra.mxu0 %v2528
    %3491 = vmatpush.msra.mxu0 %v2527
    %3492 = vmatmul.f32.gmra.mxu0 %v3410
    %v3493 = vpop.f32.mrf.mxu0
    %v3494 = vadd.f32 0.0, %v3493
    %3495 = vmatmul.f32.gmra.mxu0 %v3413
    %v3496 = vpop.f32.mrf.mxu0
    %v3497 = vadd.f32 0.0, %v3496
    %3498 = vmatmul.f32.gmra.mxu0 %v3416
    %v3499 = vpop.f32.mrf.mxu0
    %v3500 = vadd.f32 0.0, %v3499
    %3501 = vdwg.mxu0
    %v3502 = vadd.f32 %v2365, %v3494
    %v3503 = vadd.f32 %v2368, %v3497
    %v3504 = vadd.f32 %v2371, %v3500
    %3505 = vmatpush.msra.mxu0 0.0
    %3506 = vmatpush.msra.mxu0 0.0
    %3507 = vmatpush.msra.mxu0 0.0
    %3508 = vmatpush.msra.mxu0 0.0
    %3509 = vmatpush.msra.mxu0 0.0
    %3510 = vmatpush.msra.mxu0 0.0
    %3511 = vmatpush.msra.mxu0 0.0
    %3512 = vmatpush.msra.mxu0 0.0
    %3513 = vmatpush.msra.mxu0 0.0
    %3514 = vmatpush.msra.mxu0 0.0
    %3515 = vmatpush.msra.mxu0 0.0
    %3516 = vmatpush.msra.mxu0 0.0
    %3517 = vmatpush.msra.mxu0 0.0
    %3518 = vmatpush.msra.mxu0 %v2562
    %3519 = vmatpush.msra.mxu0 %v2561
    %3520 = vmatpush.msra.mxu0 %v2560
    %3521 = vmatmul.f32.gmra.mxu0 %v3410
    %v3522 = vpop.f32.mrf.mxu0
    %v3523 = vadd.f32 0.0, %v3522
    %3524 = vmatmul.f32.gmra.mxu0 %v3413
    %v3525 = vpop.f32.mrf.mxu0
    %v3526 = vadd.f32 0.0, %v3525
    %3527 = vmatmul.f32.gmra.mxu0 %v3416
    %v3528 = vpop.f32.mrf.mxu0
    %v3529 = vadd.f32 0.0, %v3528
    %3530 = vdwg.mxu0
    %v3531 = vadd.f32 %v2426, %v3523
    %v3532 = vadd.f32 %v2429, %v3526
    %v3533 = vadd.f32 %v2432, %v3529
    %v3534 = vxor.u32 %v3473, 2147483648
    %v3535 = vxor.u32 %v3474, 2147483648
    %v3536 = vxor.u32 %v3475, 2147483648
    %v3537 = vmul.f32 %v3534, 1.442695
    %v3538 = vpow.pop %v3537
    %v3539 = vmul.f32 %v3535, 1.442695
    %v3540 = vpow.pop %v3539
    %v3541 = vmul.f32 %v3536, 1.442695
    %v3542 = vpow.pop %v3541
    %v3543 = vadd.f32 %v3538, 1.0
    %v3544 = vadd.f32 %v3540, 1.0
    %v3545 = vadd.f32 %v3542, 1.0
    %v3546 = vrcp.pop %v3543
    %v3547 = vmul.f32 %v3543, %v3546
    %v3548 = vsub.f32 1.0, %v3547
    %v3549 = vmul.f32 %v3546, %v3548
    %v3550 = vadd.f32 %v3546, %v3549
    %vm3551 = vweird.f32 %v3543
    %vm3552 = vweird.f32 %v3546
    %vm3553 = vmor %vm3551, %vm3552
    %v3554 = vsel %vm3553, %v3546, %v3550
    %v3555 = vand.u32 2147483647, %v3543
    %vm3556 = vcmp.eq.f32.partialorder %v3555, 8.507059e+37
    %v3557 = vand.u32 %v3543, 2147483648
    %v3558 = vor.u32 1.1754944e-38, %v3557
    %v3559 = vsel %vm3556, %v3558, %v3554
    %v3560 = vmul.f32 1.0, %v3559
    %v3561 = vrcp.pop %v3544
    %v3562 = vmul.f32 %v3544, %v3561
    %v3563 = vsub.f32 1.0, %v3562
    %v3564 = vmul.f32 %v3561, %v3563
    %v3565 = vadd.f32 %v3561, %v3564
    %vm3566 = vweird.f32 %v3544
    %vm3567 = vweird.f32 %v3561
    %vm3568 = vmor %vm3566, %vm3567
    %v3569 = vsel %vm3568, %v3561, %v3565
    %v3570 = vand.u32 2147483647, %v3544
    %vm3571 = vcmp.eq.f32.partialorder %v3570, 8.507059e+37
    %v3572 = vand.u32 %v3544, 2147483648
    %v3573 = vor.u32 1.1754944e-38, %v3572
    %v3574 = vsel %vm3571, %v3573, %v3569
    %v3575 = vmul.f32 1.0, %v3574
    %v3576 = vrcp.pop %v3545
    %v3577 = vmul.f32 %v3545, %v3576
    %v3578 = vsub.f32 1.0, %v3577
    %v3579 = vmul.f32 %v3576, %v3578
    %v3580 = vadd.f32 %v3576, %v3579
    %vm3581 = vweird.f32 %v3545
    %vm3582 = vweird.f32 %v3576
    %vm3583 = vmor %vm3581, %vm3582
    %v3584 = vsel %vm3583, %v3576, %v3580
    %v3585 = vand.u32 2147483647, %v3545
    %vm3586 = vcmp.eq.f32.partialorder %v3585, 8.507059e+37
    %v3587 = vand.u32 %v3545, 2147483648
    %v3588 = vor.u32 1.1754944e-38, %v3587
    %v3589 = vsel %vm3586, %v3588, %v3584
    %v3590 = vmul.f32 1.0, %v3589
    %v3591 = vmul.f32 %v3560, %v3343
    %v3592 = vmul.f32 %v3575, %v3344
    %v3593 = vmul.f32 %v3590, %v3345
    %v3594 = vxor.u32 %v3444, 2147483648
    %v3595 = vxor.u32 %v3445, 2147483648
    %v3596 = vxor.u32 %v3446, 2147483648
    %v3597 = vmul.f32 %v3594, 1.442695
    %v3598 = vpow.pop %v3597
    %v3599 = vmul.f32 %v3595, 1.442695
    %v3600 = vpow.pop %v3599
    %v3601 = vmul.f32 %v3596, 1.442695
    %v3602 = vpow.pop %v3601
    %v3603 = vadd.f32 %v3598, 1.0
    %v3604 = vadd.f32 %v3600, 1.0
    %v3605 = vadd.f32 %v3602, 1.0
    %v3606 = vrcp.pop %v3603
    %v3607 = vmul.f32 %v3603, %v3606
    %v3608 = vsub.f32 1.0, %v3607
    %v3609 = vmul.f32 %v3606, %v3608
    %v3610 = vadd.f32 %v3606, %v3609
    %vm3611 = vweird.f32 %v3603
    %vm3612 = vweird.f32 %v3606
    %vm3613 = vmor %vm3611, %vm3612
    %v3614 = vsel %vm3613, %v3606, %v3610
    %v3615 = vand.u32 2147483647, %v3603
    %vm3616 = vcmp.eq.f32.partialorder %v3615, 8.507059e+37
    %v3617 = vand.u32 %v3603, 2147483648
    %v3618 = vor.u32 1.1754944e-38, %v3617
    %v3619 = vsel %vm3616, %v3618, %v3614
    %v3620 = vmul.f32 1.0, %v3619
    %v3621 = vrcp.pop %v3604
    %v3622 = vmul.f32 %v3604, %v3621
    %v3623 = vsub.f32 1.0, %v3622
    %v3624 = vmul.f32 %v3621, %v3623
    %v3625 = vadd.f32 %v3621, %v3624
    %vm3626 = vweird.f32 %v3604
    %vm3627 = vweird.f32 %v3621
    %vm3628 = vmor %vm3626, %vm3627
    %v3629 = vsel %vm3628, %v3621, %v3625
    %v3630 = vand.u32 2147483647, %v3604
    %vm3631 = vcmp.eq.f32.partialorder %v3630, 8.507059e+37
    %v3632 = vand.u32 %v3604, 2147483648
    %v3633 = vor.u32 1.1754944e-38, %v3632
    %v3634 = vsel %vm3631, %v3633, %v3629
    %v3635 = vmul.f32 1.0, %v3634
    %v3636 = vrcp.pop %v3605
    %v3637 = vmul.f32 %v3605, %v3636
    %v3638 = vsub.f32 1.0, %v3637
    %v3639 = vmul.f32 %v3636, %v3638
    %v3640 = vadd.f32 %v3636, %v3639
    %vm3641 = vweird.f32 %v3605
    %vm3642 = vweird.f32 %v3636
    %vm3643 = vmor %vm3641, %vm3642
    %v3644 = vsel %vm3643, %v3636, %v3640
    %v3645 = vand.u32 2147483647, %v3605
    %vm3646 = vcmp.eq.f32.partialorder %v3645, 8.507059e+37
    %v3647 = vand.u32 %v3605, 2147483648
    %v3648 = vor.u32 1.1754944e-38, %v3647
    %v3649 = vsel %vm3646, %v3648, %v3644
    %v3650 = vmul.f32 1.0, %v3649
    %v3651 = vtanh.pop %v3502
    %v3652 = vtanh.pop %v3503
    %v3653 = vtanh.pop %v3504
    %v3654 = vmul.f32 %v3620, %v3651
    %v3655 = vmul.f32 %v3635, %v3652
    %v3656 = vmul.f32 %v3650, %v3653
    %v3657 = vadd.f32 %v3591, %v3654
    %v3658 = vadd.f32 %v3592, %v3655
    %v3659 = vadd.f32 %v3593, %v3656
    %v3660 = vxor.u32 %v3531, 2147483648
    %v3661 = vxor.u32 %v3532, 2147483648
    %v3662 = vxor.u32 %v3533, 2147483648
    %v3663 = vmul.f32 %v3660, 1.442695
    %v3664 = vpow.pop %v3663
    %v3665 = vmul.f32 %v3661, 1.442695
    %v3666 = vpow.pop %v3665
    %v3667 = vmul.f32 %v3662, 1.442695
    %v3668 = vpow.pop %v3667
    %v3669 = vadd.f32 %v3664, 1.0
    %v3670 = vadd.f32 %v3666, 1.0
    %v3671 = vadd.f32 %v3668, 1.0
    %v3672 = vrcp.pop %v3669
    %v3673 = vmul.f32 %v3669, %v3672
    %v3674 = vsub.f32 1.0, %v3673
    %v3675 = vmul.f32 %v3672, %v3674
    %v3676 = vadd.f32 %v3672, %v3675
    %vm3677 = vweird.f32 %v3669
    %vm3678 = vweird.f32 %v3672
    %vm3679 = vmor %vm3677, %vm3678
    %v3680 = vsel %vm3679, %v3672, %v3676
    %v3681 = vand.u32 2147483647, %v3669
    %vm3682 = vcmp.eq.f32.partialorder %v3681, 8.507059e+37
    %v3683 = vand.u32 %v3669, 2147483648
    %v3684 = vor.u32 1.1754944e-38, %v3683
    %v3685 = vsel %vm3682, %v3684, %v3680
    %v3686 = vmul.f32 1.0, %v3685
    %v3687 = vrcp.pop %v3670
    %v3688 = vmul.f32 %v3670, %v3687
    %v3689 = vsub.f32 1.0, %v3688
    %v3690 = vmul.f32 %v3687, %v3689
    %v3691 = vadd.f32 %v3687, %v3690
    %vm3692 = vweird.f32 %v3670
    %vm3693 = vweird.f32 %v3687
    %vm3694 = vmor %vm3692, %vm3693
    %v3695 = vsel %vm3694, %v3687, %v3691
    %v3696 = vand.u32 2147483647, %v3670
    %vm3697 = vcmp.eq.f32.partialorder %v3696, 8.507059e+37
    %v3698 = vand.u32 %v3670, 2147483648
    %v3699 = vor.u32 1.1754944e-38, %v3698
    %v3700 = vsel %vm3697, %v3699, %v3695
    %v3701 = vmul.f32 1.0, %v3700
    %v3702 = vrcp.pop %v3671
    %v3703 = vmul.f32 %v3671, %v3702
    %v3704 = vsub.f32 1.0, %v3703
    %v3705 = vmul.f32 %v3702, %v3704
    %v3706 = vadd.f32 %v3702, %v3705
    %vm3707 = vweird.f32 %v3671
    %vm3708 = vweird.f32 %v3702
    %vm3709 = vmor %vm3707, %vm3708
    %v3710 = vsel %vm3709, %v3702, %v3706
    %v3711 = vand.u32 2147483647, %v3671
    %vm3712 = vcmp.eq.f32.partialorder %v3711, 8.507059e+37
    %v3713 = vand.u32 %v3671, 2147483648
    %v3714 = vor.u32 1.1754944e-38, %v3713
    %v3715 = vsel %vm3712, %v3714, %v3710
    %v3716 = vmul.f32 1.0, %v3715
    %v3717 = vtanh.pop %v3657
    %v3718 = vtanh.pop %v3658
    %v3719 = vtanh.pop %v3659
    %v3720 = vmul.f32 %v3686, %v3717
    %v3721 = vmul.f32 %v3701, %v3718
    %v3722 = vmul.f32 %v3716, %v3719
    %v3723 = vld [vmem:[%s11] sm:$0xff]
    %v3724 = vld [vmem:[%s11 + $0x8] sm:$0xff]
    %v3725 = vld [vmem:[%s11 + $0x10] sm:$0xff]
    %s3726 = scalar_lea.vmem %s11, 24
    %v3727 = vld [vmem:[%s3726] sm:$0xff]
    %v3728 = vld [vmem:[%s3726 + $0x8] sm:$0xff]
    %v3729 = vld [vmem:[%s3726 + $0x10] sm:$0xff]
    %v3731 = vsel %vm956, %v3720, 0
    %v3734 = vsel %vm956, %v3721, 0
    %v3737 = vsel %vm956, %v3722, 0
    %3739 = vmatpush.msra.mxu0 0.0
    %3740 = vmatpush.msra.mxu0 0.0
    %3741 = vmatpush.msra.mxu0 0.0
    %3742 = vmatpush.msra.mxu0 0.0
    %3743 = vmatpush.msra.mxu0 0.0
    %3744 = vmatpush.msra.mxu0 0.0
    %3745 = vmatpush.msra.mxu0 0.0
    %3746 = vmatpush.msra.mxu0 0.0
    %3747 = vmatpush.msra.mxu0 0.0
    %3748 = vmatpush.msra.mxu0 0.0
    %3749 = vmatpush.msra.mxu0 0.0
    %3750 = vmatpush.msra.mxu0 0.0
    %3751 = vmatpush.msra.mxu0 0.0
    %3752 = vmatpush.msra.mxu0 %v3729
    %3753 = vmatpush.msra.mxu0 %v3728
    %3754 = vmatpush.msra.mxu0 %v3727
    %3755 = vmatmul.f32.gmra.mxu0 %v3731
    %v3756 = vpop.f32.mrf.mxu0
    %v3757 = vadd.f32 0.0, %v3756
    %3758 = vmatmul.f32.gmra.mxu0 %v3734
    %v3759 = vpop.f32.mrf.mxu0
    %v3760 = vadd.f32 0.0, %v3759
    %3761 = vmatmul.f32.gmra.mxu0 %v3737
    %v3762 = vpop.f32.mrf.mxu0
    %v3763 = vadd.f32 0.0, %v3762
    %3764 = vdwg.mxu0
    %3765 = vmatpush.msra.mxu0 0.0
    %3766 = vmatpush.msra.mxu0 0.0
    %3767 = vmatpush.msra.mxu0 0.0
    %3768 = vmatpush.msra.mxu0 0.0
    %3769 = vmatpush.msra.mxu0 0.0
    %3770 = vmatpush.msra.mxu0 0.0
    %3771 = vmatpush.msra.mxu0 0.0
    %3772 = vmatpush.msra.mxu0 0.0
    %3773 = vmatpush.msra.mxu0 0.0
    %3774 = vmatpush.msra.mxu0 0.0
    %3775 = vmatpush.msra.mxu0 0.0
    %3776 = vmatpush.msra.mxu0 0.0
    %3777 = vmatpush.msra.mxu0 0.0
    %3778 = vmatpush.msra.mxu0 %v3725
    %3779 = vmatpush.msra.mxu0 %v3724
    %3780 = vmatpush.msra.mxu0 %v3723
    %3781 = vmatmul.f32.gmra.mxu0 %v1278
    %v3782 = vpop.f32.mrf.mxu0
    %v3783 = vadd.f32 %v3757, %v3782
    %3784 = vmatmul.f32.gmra.mxu0 %v1281
    %v3785 = vpop.f32.mrf.mxu0
    %v3786 = vadd.f32 %v3760, %v3785
    %3787 = vmatmul.f32.gmra.mxu0 %v1284
    %v3788 = vpop.f32.mrf.mxu0
    %v3789 = vadd.f32 %v3763, %v3788
    %3790 = vdwg.mxu0
    %v3791 = vld [vmem:[#allocation2] sm:$0x1]
    %v3793 = vperm.slane %v3791, 0
    %v3795 = vadd.f32 %v3783, %v3793
    %v3796 = vadd.f32 %v3786, %v3793
    %v3797 = vadd.f32 %v3789, %v3793
    %3798 = vmatpush.msra.mxu0 0.0
    %3799 = vmatpush.msra.mxu0 0.0
    %3800 = vmatpush.msra.mxu0 0.0
    %3801 = vmatpush.msra.mxu0 0.0
    %3802 = vmatpush.msra.mxu0 0.0
    %3803 = vmatpush.msra.mxu0 0.0
    %3804 = vmatpush.msra.mxu0 0.0
    %3805 = vmatpush.msra.mxu0 0.0
    %3806 = vmatpush.msra.mxu0 0.0
    %3807 = vmatpush.msra.mxu0 0.0
    %3808 = vmatpush.msra.mxu0 0.0
    %3809 = vmatpush.msra.mxu0 0.0
    %3810 = vmatpush.msra.mxu0 0.0
    %3811 = vmatpush.msra.mxu0 %v3729
    %3812 = vmatpush.msra.mxu0 %v3728
    %3813 = vmatpush.msra.mxu0 %v3727
    %3814 = vmatmul.f32.gmra.mxu0 %v3410
    %v3815 = vpop.f32.mrf.mxu0
    %v3816 = vadd.f32 0.0, %v3815
    %3817 = vmatmul.f32.gmra.mxu0 %v3413
    %v3818 = vpop.f32.mrf.mxu0
    %v3819 = vadd.f32 0.0, %v3818
    %3820 = vmatmul.f32.gmra.mxu0 %v3416
    %v3821 = vpop.f32.mrf.mxu0
    %v3822 = vadd.f32 0.0, %v3821
    %3823 = vdwg.mxu0
    %3824 = vmatpush.msra.mxu0 0.0
    %3825 = vmatpush.msra.mxu0 0.0
    %3826 = vmatpush.msra.mxu0 0.0
    %3827 = vmatpush.msra.mxu0 0.0
    %3828 = vmatpush.msra.mxu0 0.0
    %3829 = vmatpush.msra.mxu0 0.0
    %3830 = vmatpush.msra.mxu0 0.0
    %3831 = vmatpush.msra.mxu0 0.0
    %3832 = vmatpush.msra.mxu0 0.0
    %3833 = vmatpush.msra.mxu0 0.0
    %3834 = vmatpush.msra.mxu0 0.0
    %3835 = vmatpush.msra.mxu0 0.0
    %3836 = vmatpush.msra.mxu0 0.0
    %3837 = vmatpush.msra.mxu0 %v3725
    %3838 = vmatpush.msra.mxu0 %v3724
    %3839 = vmatpush.msra.mxu0 %v3723
    %3840 = vmatmul.f32.gmra.mxu0 %v1592
    %v3841 = vpop.f32.mrf.mxu0
    %v3842 = vadd.f32 %v3816, %v3841
    %3843 = vmatmul.f32.gmra.mxu0 %v1595
    %v3844 = vpop.f32.mrf.mxu0
    %v3845 = vadd.f32 %v3819, %v3844
    %3846 = vmatmul.f32.gmra.mxu0 %v1598
    %v3847 = vpop.f32.mrf.mxu0
    %v3848 = vadd.f32 %v3822, %v3847
    %3849 = vdwg.mxu0
    %v3850 = vadd.f32 %v3842, %v3793
    %v3851 = vadd.f32 %v3845, %v3793
    %v3852 = vadd.f32 %v3848, %v3793
    %3853 = vmatpush.msra.mxu0 0.0
    %3854 = vmatpush.msra.mxu0 0.0
    %3855 = vmatpush.msra.mxu0 0.0
    %3856 = vmatpush.msra.mxu0 0.0
    %3857 = vmatpush.msra.mxu0 0.0
    %3858 = vmatpush.msra.mxu0 0.0
    %3859 = vmatpush.msra.mxu0 0.0
    %3860 = vmatpush.msra.mxu0 0.0
    %3861 = vmatpush.msra.mxu0 0.0
    %3862 = vmatpush.msra.mxu0 0.0
    %3863 = vmatpush.msra.mxu0 0.0
    %3864 = vmatpush.msra.mxu0 0.0
    %3865 = vmatpush.msra.mxu0 0.0
    %3866 = vmatpush.msra.mxu0 %v3729
    %3867 = vmatpush.msra.mxu0 %v3728
    %3868 = vmatpush.msra.mxu0 %v3727
    %3869 = vmatmul.f32.gmra.mxu0 %v3096
    %v3870 = vpop.f32.mrf.mxu0
    %v3871 = vadd.f32 0.0, %v3870
    %3872 = vmatmul.f32.gmra.mxu0 %v3099
    %v3873 = vpop.f32.mrf.mxu0
    %v3874 = vadd.f32 0.0, %v3873
    %3875 = vmatmul.f32.gmra.mxu0 %v3102
    %v3876 = vpop.f32.mrf.mxu0
    %v3877 = vadd.f32 0.0, %v3876
    %3878 = vdwg.mxu0
    %3879 = vmatpush.msra.mxu0 0.0
    %3880 = vmatpush.msra.mxu0 0.0
    %3881 = vmatpush.msra.mxu0 0.0
    %3882 = vmatpush.msra.mxu0 0.0
    %3883 = vmatpush.msra.mxu0 0.0
    %3884 = vmatpush.msra.mxu0 0.0
    %3885 = vmatpush.msra.mxu0 0.0
    %3886 = vmatpush.msra.mxu0 0.0
    %3887 = vmatpush.msra.mxu0 0.0
    %3888 = vmatpush.msra.mxu0 0.0
    %3889 = vmatpush.msra.mxu0 0.0
    %3890 = vmatpush.msra.mxu0 0.0
    %3891 = vmatpush.msra.mxu0 0.0
    %3892 = vmatpush.msra.mxu0 %v3725
    %3893 = vmatpush.msra.mxu0 %v3724
    %3894 = vmatpush.msra.mxu0 %v3723
    %3895 = vmatmul.f32.gmra.mxu0 %v1906
    %v3896 = vpop.f32.mrf.mxu0
    %v3897 = vadd.f32 %v3871, %v3896
    %3898 = vmatmul.f32.gmra.mxu0 %v1909
    %v3899 = vpop.f32.mrf.mxu0
    %v3900 = vadd.f32 %v3874, %v3899
    %3901 = vmatmul.f32.gmra.mxu0 %v1912
    %v3902 = vpop.f32.mrf.mxu0
    %v3903 = vadd.f32 %v3877, %v3902
    %3904 = vdwg.mxu0
    %v3905 = vadd.f32 %v3897, %v3793
    %v3906 = vadd.f32 %v3900, %v3793
    %v3907 = vadd.f32 %v3903, %v3793
    %3908 = vmatpush.msra.mxu0 0.0
    %3909 = vmatpush.msra.mxu0 0.0
    %3910 = vmatpush.msra.mxu0 0.0
    %3911 = vmatpush.msra.mxu0 0.0
    %3912 = vmatpush.msra.mxu0 0.0
    %3913 = vmatpush.msra.mxu0 0.0
    %3914 = vmatpush.msra.mxu0 0.0
    %3915 = vmatpush.msra.mxu0 0.0
    %3916 = vmatpush.msra.mxu0 0.0
    %3917 = vmatpush.msra.mxu0 0.0
    %3918 = vmatpush.msra.mxu0 0.0
    %3919 = vmatpush.msra.mxu0 0.0
    %3920 = vmatpush.msra.mxu0 0.0
    %3921 = vmatpush.msra.mxu0 %v3729
    %3922 = vmatpush.msra.mxu0 %v3728
    %3923 = vmatpush.msra.mxu0 %v3727
    %3924 = vmatmul.f32.gmra.mxu0 %v2782
    %v3925 = vpop.f32.mrf.mxu0
    %v3926 = vadd.f32 0.0, %v3925
    %3927 = vmatmul.f32.gmra.mxu0 %v2785
    %v3928 = vpop.f32.mrf.mxu0
    %v3929 = vadd.f32 0.0, %v3928
    %3930 = vmatmul.f32.gmra.mxu0 %v2788
    %v3931 = vpop.f32.mrf.mxu0
    %v3932 = vadd.f32 0.0, %v3931
    %3933 = vdwg.mxu0
    %v3935 = vsel %vm956, %v2216, 0
    %v3938 = vsel %vm956, %v2217, 0
    %v3941 = vsel %vm956, %v2218, 0
    %3943 = vmatpush.msra.mxu0 0.0
    %3944 = vmatpush.msra.mxu0 0.0
    %3945 = vmatpush.msra.mxu0 0.0
    %3946 = vmatpush.msra.mxu0 0.0
    %3947 = vmatpush.msra.mxu0 0.0
    %3948 = vmatpush.msra.mxu0 0.0
    %3949 = vmatpush.msra.mxu0 0.0
    %3950 = vmatpush.msra.mxu0 0.0
    %3951 = vmatpush.msra.mxu0 0.0
    %3952 = vmatpush.msra.mxu0 0.0
    %3953 = vmatpush.msra.mxu0 0.0
    %3954 = vmatpush.msra.mxu0 0.0
    %3955 = vmatpush.msra.mxu0 0.0
    %3956 = vmatpush.msra.mxu0 %v3725
    %3957 = vmatpush.msra.mxu0 %v3724
    %3958 = vmatpush.msra.mxu0 %v3723
    %3959 = vmatmul.f32.gmra.mxu0 %v3935
    %v3960 = vpop.f32.mrf.mxu0
    %v3961 = vadd.f32 %v3926, %v3960
    %3962 = vmatmul.f32.gmra.mxu0 %v3938
    %v3963 = vpop.f32.mrf.mxu0
    %v3964 = vadd.f32 %v3929, %v3963
    %3965 = vmatmul.f32.gmra.mxu0 %v3941
    %v3966 = vpop.f32.mrf.mxu0
    %v3967 = vadd.f32 %v3932, %v3966
    %3968 = vdwg.mxu0
    %v3969 = vadd.f32 %v3961, %v3793
    %v3970 = vadd.f32 %v3964, %v3793
    %v3971 = vadd.f32 %v3967, %v3793
    %v3972 = vmax.f32 %v3795, %v3850
    %v3973 = vmax.f32 %v3796, %v3851
    %v3974 = vmax.f32 %v3797, %v3852
    %v3975 = vmax.f32 %v3972, %v3905
    %v3976 = vmax.f32 %v3973, %v3906
    %v3977 = vmax.f32 %v3974, %v3907
    %v3978 = vmax.f32 %v3975, %v3969
    %v3979 = vmax.f32 %v3976, %v3970
    %v3980 = vmax.f32 %v3977, %v3971
    %v3981 = vsub.f32 %v3795, %v3978
    %v3982 = vsub.f32 %v3796, %v3979
    %v3983 = vsub.f32 %v3797, %v3980
    %v3984 = vmul.f32 %v3981, 1.442695
    %v3985 = vpow.pop %v3984
    %v3986 = vmul.f32 %v3982, 1.442695
    %v3987 = vpow.pop %v3986
    %v3988 = vmul.f32 %v3983, 1.442695
    %v3989 = vpow.pop %v3988
    %v3990 = vsub.f32 %v3850, %v3978
    %v3991 = vsub.f32 %v3851, %v3979
    %v3992 = vsub.f32 %v3852, %v3980
    %v3993 = vmul.f32 %v3990, 1.442695
    %v3994 = vpow.pop %v3993
    %v3995 = vmul.f32 %v3991, 1.442695
    %v3996 = vpow.pop %v3995
    %v3997 = vmul.f32 %v3992, 1.442695
    %v3998 = vpow.pop %v3997
    %v3999 = vsub.f32 %v3905, %v3978
    %v4000 = vsub.f32 %v3906, %v3979
    %v4001 = vsub.f32 %v3907, %v3980
    %v4002 = vmul.f32 %v3999, 1.442695
    %v4003 = vpow.pop %v4002
    %v4004 = vmul.f32 %v4000, 1.442695
    %v4005 = vpow.pop %v4004
    %v4006 = vmul.f32 %v4001, 1.442695
    %v4007 = vpow.pop %v4006
    %v4008 = vsub.f32 %v3969, %v3978
    %v4009 = vsub.f32 %v3970, %v3979
    %v4010 = vsub.f32 %v3971, %v3980
    %v4011 = vmul.f32 %v4008, 1.442695
    %v4012 = vpow.pop %v4011
    %v4013 = vmul.f32 %v4009, 1.442695
    %v4014 = vpow.pop %v4013
    %v4015 = vmul.f32 %v4010, 1.442695
    %v4016 = vpow.pop %v4015
    %v4017 = vadd.f32 %v3985, %v3994
    %v4018 = vadd.f32 %v3987, %v3996
    %v4019 = vadd.f32 %v3989, %v3998
    %v4020 = vadd.f32 %v4017, %v4003
    %v4021 = vadd.f32 %v4018, %v4005
    %v4022 = vadd.f32 %v4019, %v4007
    %v4023 = vadd.f32 %v4020, %v4012
    %v4024 = vadd.f32 %v4021, %v4014
    %v4025 = vadd.f32 %v4022, %v4016
    %v4026 = vrcp.pop %v4023
    %v4027 = vrcp.pop %v4024
    %v4028 = vrcp.pop %v4025
    %v4029 = vmul.f32 %v3985, %v4026
    %v4030 = vmul.f32 %v3987, %v4027
    %v4031 = vmul.f32 %v3989, %v4028
    %4033 = vset.pattern.permute.xlu0 0
    %4034 = vperm.xlu0 %4033, %v4029
    %v4035 = vpop.permute.xlu0 %4034
    %4038 = vset.pattern.permute.xlu0 0
    %4039 = vperm.xlu0 %4038, %v4030
    %v4040 = vpop.permute.xlu0 %4039
    %4043 = vset.pattern.permute.xlu0 0
    %4044 = vperm.xlu0 %4043, %v4031
    %v4045 = vpop.permute.xlu0 %4044
    %v4047 = vmul.f32 %v68, %v4035
    %v4048 = vmul.f32 %v69, %v4040
    %v4049 = vmul.f32 %v70, %v4045
    %v4050 = vmul.f32 %v3994, %v4026
    %v4051 = vmul.f32 %v3996, %v4027
    %v4052 = vmul.f32 %v3998, %v4028
    %4054 = vset.pattern.permute.xlu0 0
    %4055 = vperm.xlu0 %4054, %v4050
    %v4056 = vpop.permute.xlu0 %4055
    %4059 = vset.pattern.permute.xlu0 0
    %4060 = vperm.xlu0 %4059, %v4051
    %v4061 = vpop.permute.xlu0 %4060
    %4064 = vset.pattern.permute.xlu0 0
    %4065 = vperm.xlu0 %4064, %v4052
    %v4066 = vpop.permute.xlu0 %4065
    %v4068 = vmul.f32 %v278, %v4056
    %v4069 = vmul.f32 %v279, %v4061
    %v4070 = vmul.f32 %v280, %v4066
    %v4071 = vadd.f32 %v4047, %v4068
    %v4072 = vadd.f32 %v4048, %v4069
    %v4073 = vadd.f32 %v4049, %v4070
    %v4074 = vmul.f32 %v4003, %v4026
    %v4075 = vmul.f32 %v4005, %v4027
    %v4076 = vmul.f32 %v4007, %v4028
    %4078 = vset.pattern.permute.xlu0 0
    %4079 = vperm.xlu0 %4078, %v4074
    %v4080 = vpop.permute.xlu0 %4079
    %4083 = vset.pattern.permute.xlu0 0
    %4084 = vperm.xlu0 %4083, %v4075
    %v4085 = vpop.permute.xlu0 %4084
    %4088 = vset.pattern.permute.xlu0 0
    %4089 = vperm.xlu0 %4088, %v4076
    %v4090 = vpop.permute.xlu0 %4089
    %v4092 = vmul.f32 %v490, %v4080
    %v4093 = vmul.f32 %v491, %v4085
    %v4094 = vmul.f32 %v492, %v4090
    %v4095 = vadd.f32 %v4071, %v4092
    %v4096 = vadd.f32 %v4072, %v4093
    %v4097 = vadd.f32 %v4073, %v4094
    %v4098 = vmul.f32 %v4012, %v4026
    %v4099 = vmul.f32 %v4014, %v4027
    %v4100 = vmul.f32 %v4016, %v4028
    %4102 = vset.pattern.permute.xlu0 0
    %4103 = vperm.xlu0 %4102, %v4098
    %v4104 = vpop.permute.xlu0 %4103
    %4107 = vset.pattern.permute.xlu0 0
    %4108 = vperm.xlu0 %4107, %v4099
    %v4109 = vpop.permute.xlu0 %4108
    %4112 = vset.pattern.permute.xlu0 0
    %4113 = vperm.xlu0 %4112, %v4100
    %v4114 = vpop.permute.xlu0 %4113
    %v4116 = vmul.f32 %v699, %v4104
    %v4117 = vmul.f32 %v700, %v4109
    %v4118 = vmul.f32 %v701, %v4114
    %v4119 = vadd.f32 %v4095, %v4116
    %v4120 = vadd.f32 %v4096, %v4117
    %v4121 = vadd.f32 %v4097, %v4118
    %v4122 = vld [vmem:[%s13] sm:$0xff]
    %v4123 = vld [vmem:[%s13 + $0x8] sm:$0xff]
    %v4124 = vld [vmem:[%s13 + $0x10] sm:$0xff]
    %v4125 = vld [vmem:[%s13 + $0x18] sm:$0xff]
    %v4126 = vld [vmem:[%s13 + $0x20] sm:$0xff]
    %v4127 = vld [vmem:[%s13 + $0x28] sm:$0xff]
    %4129 = vset.pattern.permute.xlu0 0
    %4130 = vperm.xlu0 %4129, %v4122
    %v4131 = vpop.permute.xlu0 %4130
    %4134 = vset.pattern.permute.xlu0 0
    %4135 = vperm.xlu0 %4134, %v4123
    %v4136 = vpop.permute.xlu0 %4135
    %4139 = vset.pattern.permute.xlu0 0
    %4140 = vperm.xlu0 %4139, %v4124
    %v4141 = vpop.permute.xlu0 %4140
    %4144 = vset.pattern.permute.xlu0 0
    %4145 = vperm.xlu0 %4144, %v4125
    %v4146 = vpop.permute.xlu0 %4145
    %4149 = vset.pattern.permute.xlu0 0
    %4150 = vperm.xlu0 %4149, %v4126
    %v4151 = vpop.permute.xlu0 %4150
    %4154 = vset.pattern.permute.xlu0 0
    %4155 = vperm.xlu0 %4154, %v4127
    %v4156 = vpop.permute.xlu0 %4155
    %v4158 = vmul.f32 %v4131, %v4119
    %v4159 = vmul.f32 %v4136, %v4120
    %v4160 = vmul.f32 %v4141, %v4121
    %v4161 = vmul.f32 %v4146, %v4119
    %v4162 = vmul.f32 %v4151, %v4120
    %v4163 = vmul.f32 %v4156, %v4121
    %v4164 = vsel %vm73, %v4158, 0.0
    %v4165 = vsel %vm73, %v4159, 0.0
    %v4166 = vadd.f32 %v4164, %v4165
    %v4167 = vsel %vm73, %v4160, 0.0
    %v4168 = vadd.f32 %v4166, %v4167
    %v4169 = vrot.slane %v4168, 4
    %v4170 = vadd.f32 %v4168, %v4169
    %v4171 = vrot.slane %v4170, 2
    %v4172 = vadd.f32 %v4170, %v4171
    %v4173 = vrot.slane %v4172, 1
    %v4174 = vadd.f32 %v4172, %v4173
    %v4175 = vsel %vm73, %v4161, 0.0
    %v4176 = vsel %vm73, %v4162, 0.0
    %v4177 = vadd.f32 %v4175, %v4176
    %v4178 = vsel %vm73, %v4163, 0.0
    %v4179 = vadd.f32 %v4177, %v4178
    %v4180 = vrot.slane %v4179, 4
    %v4181 = vadd.f32 %v4179, %v4180
    %v4182 = vrot.slane %v4181, 2
    %v4183 = vadd.f32 %v4181, %v4182
    %v4184 = vrot.slane %v4183, 1
    %v4185 = vadd.f32 %v4183, %v4184
    %v4186 = vld [vmem:[%s14] sm:$0xff]
    %v4187 = vld [vmem:[%s14 + $0x8] sm:$0xff]
    %v4188 = vld [vmem:[%s15] sm:$0x1]
    %v4190 = vperm.slane %v4188, 0
    %vm4194 = vcmask 1041409
    %v4195 = vsel %vm4194, %v4185, %v4174
    %v4196 = vsel %vm73, %v4195, 0
    %4198 = vmatpush.msra.mxu0 0.0
    %4199 = vmatpush.msra.mxu0 0.0
    %4200 = vmatpush.msra.mxu0 0.0
    %4201 = vmatpush.msra.mxu0 0.0
    %4202 = vmatpush.msra.mxu0 0.0
    %4203 = vmatpush.msra.mxu0 0.0
    %4204 = vmatpush.msra.mxu0 0.0
    %4205 = vmatpush.msra.mxu0 0.0
    %4206 = vmatpush.msra.mxu0 0.0
    %4207 = vmatpush.msra.mxu0 0.0
    %4208 = vmatpush.msra.mxu0 0.0
    %4209 = vmatpush.msra.mxu0 0.0
    %4210 = vmatpush.msra.mxu0 0.0
    %4211 = vmatpush.msra.mxu0 0.0
    %4212 = vmatpush.msra.mxu0 %v4187
    %4213 = vmatpush.msra.mxu0 %v4186
    %4214 = vmatmul.f32.gmra.mxu0 %v4196
    %v4215 = vpop.f32.mrf.mxu0
    %v4216 = vadd.f32 %v4190, %v4215
    %4217 = vdwg.mxu0
    %v4218 = vmax.f32 %v4216, 0.0
    %v4219 = vld [vmem:[%s16] sm:$0xff]
    %v4220 = vld [vmem:[%s16 + $0x8] sm:$0xff]
    %v4221 = vld [vmem:[%s16 + $0x10] sm:$0xff]
    %v4222 = vld [vmem:[%s16 + $0x18] sm:$0xff]
    %v4223 = vld [vmem:[%s17] sm:$0x1]
    %v4225 = vperm.slane %v4223, 0
    %vm4227 = vcmask 261120
    %v4229 = vsel %vm4227, %v4218, 0
    %4231 = vmatpush.msra.mxu0 0.0
    %4232 = vmatpush.msra.mxu0 0.0
    %4233 = vmatpush.msra.mxu0 0.0
    %4234 = vmatpush.msra.mxu0 0.0
    %4235 = vmatpush.msra.mxu0 0.0
    %4236 = vmatpush.msra.mxu0 0.0
    %4237 = vmatpush.msra.mxu0 0.0
    %4238 = vmatpush.msra.mxu0 0.0
    %4239 = vmatpush.msra.mxu0 0.0
    %4240 = vmatpush.msra.mxu0 0.0
    %4241 = vmatpush.msra.mxu0 0.0
    %4242 = vmatpush.msra.mxu0 0.0
    %4243 = vmatpush.msra.mxu0 %v4222
    %4244 = vmatpush.msra.mxu0 %v4221
    %4245 = vmatpush.msra.mxu0 %v4220
    %4246 = vmatpush.msra.mxu0 %v4219
    %4247 = vmatmul.f32.gmra.mxu0 %v4229
    %v4248 = vpop.f32.mrf.mxu0
    %v4249 = vadd.f32 %v4225, %v4248
    %4250 = vdwg.mxu0
    %v4251 = vlaneseq
    %v4252 = vand.u32 %v4251, 127
    %vm4253 = vcmp.lt.s32.totalorder %v4252, 8
    %vm4254 = vcmask 1041408
    %v4255 = vsel %vm4254, %v4249, 0.0
    %4256 = vadd.xlane.f32.xlu0 %v4255
    %v4257 = vpop.xlane.xlu0 %4256
    %v4258 = vmul.f32 %v4257, 0.125
    %v4259 = vsub.f32 %v4249, %v4258
    %v4260 = vsel %vm4253, %v4259, 0.0
    %v4261 = vmul.f32 %v4260, %v4260
    %v4262 = vsel %vm4254, %v4261, 0.0
    %4263 = vadd.xlane.f32.xlu0 %v4262
    %v4264 = vpop.xlane.xlu0 %4263
    %v4265 = vmul.f32 %v4264, 0.125
    %v4266 = vadd.f32 %v4265, 1e-05
    %v4267 = vrsqrt.pop %v4266
    %v4268 = vmul.f32 %v4267, %v4266
    %v4269 = vmul.f32 %v4268, %v4267
    %v4270 = vmul.f32 0.5, %v4269
    %v4271 = vsub.f32 1.5, %v4270
    %v4272 = vmul.f32 %v4267, %v4271
    %vm4273 = vweird.f32 %v4266
    %vm4274 = vweird.f32 %v4267
    %vm4275 = vmor %vm4273, %vm4274
    %v4276 = vsel %vm4275, %v4267, %v4272
    %v4277 = vmul.f32 %v4260, %v4276
    %v4278 = vld [vmem:[%s18] sm:$0x1]
    %v4280 = vperm.slane %v4278, 0
    %v4282 = vmul.f32 %v4277, %v4280
    %v4283 = vld [vmem:[%s19] sm:$0x1]
    %v4285 = vperm.slane %v4283, 0
    %v4287 = vadd.f32 %v4282, %v4285
    %4288 = vst [vmem:[#allocation3] sm:$0x3] %v4287
    // Predicated region
    $region82: #{monet_forward.1} parent=1 // pred_check
      _
    $region83: #{monet_forward.1} parent=1 // pred_check_branch
      %4290 = sbr.rel (0) target = $region85
    $region84: #{monet_forward.1} parent=1 // pred_region
      %4292 = vsyncadd [#allocation4], 0
      %s4294 = sshll.u32 [#allocation3], 4
      %s4295 = int_to_ptr.vmem [resolvable:$true] %s4294
      %s4296 = sshll.u32 %s20, 4
      %s4297 = int_to_ptr.hbm [resolvable:$true] %s4296
      %4299 = dma.vmem_to_hbm [thread:$0]  %s4295, 32, %s4297, [#allocation4]
    $region85: #{monet_forward.1} parent=1 // pred_fallthru
      _
    // Predicated region
    $region86: #{monet_forward.1} parent=1 // pred_check
      _
    $region87: #{monet_forward.1} parent=1 // pred_check_branch
      %4301 = sbr.rel (0) target = $region89
    $region88: #{monet_forward.1} parent=1 // pred_region
      %4303 = dma.done [#allocation4], 32
    $region89: #{monet_forward.1} parent=1 // pred_fallthru
      _
    %4304 = vsyncpa [#allocation4], 1

</llo_original>
